<compile_context>
chip_gen: v5e
topology: v5e:2x2
jax: 0.10.0
libtpu: 0.0.40
codegen_flags: <defaults>
</compile_context>

<pallas_src>
import functools

import jax
import jax.numpy as jnp
from jax.experimental import pallas as pl
from jax.experimental.pallas import tpu as pltpu


# ---------------------------------------------------------------------------
# True layer sizes (from the PyTorch module) and padded versions.
# ---------------------------------------------------------------------------
DIMS = [28 * 28, 128, 64, 12, 3, 12, 64, 128, 28 * 28]   # 8 Linear layers
NUM_LAYERS = 8


def _round_up(x: int, m: int) -> int:
    return ((x + m - 1) // m) * m


CODE_PAD = 16   # latent code (3) padded to one bf16 sublane tile; lanes 3..15 stay 0

# Input feature dim stays 784 and the decoder output stays 784 (full-array-dim blocks
# are legal and avoid dead lanes).  Hidden dims pad to 128; the 3-d code pads to 16.
PDIMS = [DIMS[0], 128, 128, 128, CODE_PAD, 128, 128, 128, DIMS[8]]
# PDIMS == [784, 128, 128, 128, 16, 128, 128, 128, 784]


# ---------------------------------------------------------------------------
# Pallas kernel: whole encoder + decoder forward for one batch tile.
# ---------------------------------------------------------------------------
def autoencoder_kernel(x_ref,
                       w1, b1, w2, b2, w3, b3, w4, b4,
                       w5, b5, w6, b6, w7, b7, w8, b8,
                       enc_ref, dec_ref, *, bf16_act):
    f32 = jnp.float32
    bf16 = jnp.bfloat16
    act_dtype = bf16 if bf16_act else f32

    def dense(h, w_ref, b_ref):
        # bf16 MXU inputs (no-op cast if h is already bf16), f32 accumulate + bias.
        return jnp.dot(h.astype(bf16), w_ref[...],
                       preferred_element_type=f32) + b_ref[...]

    def act(v):
        # bf16 tanh on v6e/v7x (bf16 EUP path; next matmul wants bf16 anyway),
        # f32 tanh on v5e.
        return jnp.tanh(v.astype(act_dtype))

    h = x_ref[...]                                   # (TB, 784) bf16
    # ---- encoder: Linear+Tanh x3, then plain Linear ----
    h = act(dense(h, w1, b1))
    h = act(dense(h, w2, b2))
    h = act(dense(h, w3, b3))
    enc = dense(h, w4, b4)                           # (TB, 16) f32, lanes 3..15 == 0
    enc_ref[...] = enc

    # ---- decoder: Linear+Tanh x3, then Linear+Sigmoid ----
    h = act(dense(enc, w5, b5))
    h = act(dense(h, w6, b6))
    h = act(dense(h, w7, b7))
    dec_ref[...] = jax.nn.sigmoid(dense(h, w8, b8))  # (TB, 784) f32, exact width


# ---------------------------------------------------------------------------
# One-time parameter preparation (pad + cast) — OFF the per-call hot path.
# ---------------------------------------------------------------------------
def prepare_params(weights, biases):
    """weights[i]: (in_i, out_i) f32 (PyTorch weight transposed); biases[i]: (out_i,)."""
    padded = []
    for i in range(NUM_LAYERS):
        in_d, out_d = DIMS[i], DIMS[i + 1]
        in_p, out_p = PDIMS[i], PDIMS[i + 1]
        w = jnp.zeros((in_p, out_p), jnp.float32).at[:in_d, :out_d].set(weights[i])
        b = jnp.zeros((1, out_p), jnp.float32).at[0, :out_d].set(biases[i])
        padded.append(w.astype(jnp.bfloat16))        # bf16 weights for the MXU
        padded.append(b)                             # biases kept f32
    return tuple(jax.device_put(p) for p in padded)


def _default_bf16_act() -> bool:
    # v5e has no bf16 VPU/EUP path -> keep activations in f32 there.
    try:
        kind = jax.devices()[0].device_kind.lower()
    except Exception:
        return True
    return "v5" not in kind


def _choose_tb(batch: int, tile_b: int):
    """Largest multiple-of-8 divisor of `batch` that is <= tile_b (None if impossible)."""
    tile_b = max(8, (tile_b // 8) * 8)
    if batch % 8 != 0:
        return None
    d = min(tile_b, batch)
    d -= d % 8
    while d >= 8:
        if batch % d == 0:
            return d
        d -= 8
    return None


# ---------------------------------------------------------------------------
# Batch-tiled forward.
# ---------------------------------------------------------------------------
@functools.partial(jax.jit, static_argnames=("tile_b", "bf16_act"))
def autoencoder_forward(x, padded_params, tile_b=128, bf16_act=None):
    """x: (B, 784), ideally already bf16.  padded_params: output of prepare_params()."""
    if bf16_act is None:
        bf16_act = _default_bf16_act()
    if x.dtype != jnp.bfloat16:
        # Ideally the data pipeline stores x in bf16; this cast is a fallback.
        x = x.astype(jnp.bfloat16)

    B = x.shape[0]
    tb = _choose_tb(B, tile_b)
    if tb is None:
        # Ragged batch: fall back to a one-time pad (costs an extra copy of x).
        tb = min(max(8, (tile_b // 8) * 8), _round_up(B, 8))
        Bp = _round_up(B, tb)
        x = jnp.zeros((Bp, DIMS[0]), x.dtype).at[:B].set(x)
    else:
        Bp = B
    grid = (Bp // tb,)

    # Resident (non-retiled) weights & biases: constant index_maps -> DMA'd once.
    param_specs = []
    for i in range(NUM_LAYERS):
        in_p, out_p = PDIMS[i], PDIMS[i + 1]
        param_specs.append(pl.BlockSpec((in_p, out_p), lambda j: (0, 0)))   # weight
        param_specs.append(pl.BlockSpec((1, out_p), lambda j: (0, 0)))      # bias

    # Advisory cost estimate (padded shapes, bf16 input, exact-width outputs).
    flops = 2 * Bp * sum(PDIMS[i] * PDIMS[i + 1] for i in range(NUM_LAYERS))
    transcendentals = Bp * (6 * 128 + PDIMS[8])                 # 6x tanh + sigmoid
    w_bytes = sum(PDIMS[i] * PDIMS[i + 1] * 2 + PDIMS[i + 1] * 4
                  for i in range(NUM_LAYERS))
    bytes_accessed = (w_bytes + Bp * PDIMS[0] * 2
                      + Bp * (PDIMS[4] + PDIMS[8]) * 4)

    enc_pad, dec_out = pl.pallas_call(
        functools.partial(autoencoder_kernel, bf16_act=bf16_act),
        grid=grid,
        in_specs=[pl.BlockSpec((tb, PDIMS[0]), lambda j: (j, 0))] + param_specs,
        out_specs=(
            pl.BlockSpec((tb, PDIMS[4]), lambda j: (j, 0)),      # narrow code (3 -> 16)
            pl.BlockSpec((tb, PDIMS[8]), lambda j: (j, 0)),      # exact 784-wide pixels
        ),
        out_shape=(
            jax.ShapeDtypeStruct((Bp, PDIMS[4]), jnp.float32),
            jax.ShapeDtypeStruct((Bp, PDIMS[8]), jnp.float32),
        ),
        compiler_params=pltpu.CompilerParams(
            dimension_semantics=("parallel",),
            vmem_limit_bytes=32 * 1024 * 1024,
        ),
        cost_estimate=pl.CostEstimate(
            flops=flops,
            transcendentals=transcendentals,
            bytes_accessed=bytes_accessed,
        ),
    )(x, *padded_params)

    encoded = enc_pad[:, :DIMS[4]]       # (B, 3): tiny slice of a 16-wide array
    decoded = dec_out                    # (B, 784): already exact
    if Bp != B:
        encoded = encoded[:B]
        decoded = decoded[:B]
    return encoded, decoded


# ---------------------------------------------------------------------------
# Deterministic parameter init (PyTorch-Linear-like uniform) + reference check.
# ---------------------------------------------------------------------------
def init_params(key):
    weights, biases = [], []
    for i in range(NUM_LAYERS):
        in_d, out_d = DIMS[i], DIMS[i + 1]
        key, kw, kb = jax.random.split(key, 3)
        bound = 1.0 / (in_d ** 0.5)
        # stored as (in, out) == PyTorch weight (out, in) transposed
        weights.append(jax.random.uniform(kw, (in_d, out_d), jnp.float32, -bound, bound))
        biases.append(jax.random.uniform(kb, (out_d,), jnp.float32, -bound, bound))
    return weights, biases


def reference_forward(x, weights, biases):
    h = x
    for i in range(3):
        h = jnp.tanh(h @ weights[i] + biases[i])
    enc = h @ weights[3] + biases[3]
    h = enc
    for i in range(4, 7):
        h = jnp.tanh(h @ weights[i] + biases[i])
    dec = jax.nn.sigmoid(h @ weights[7] + biases[7])
    return enc, dec


if __name__ == "__main__":
    key = jax.random.PRNGKey(0)
    key, kx = jax.random.split(key)

    B = 512                                                # 4 grid steps at TB=128
    x = jax.random.uniform(kx, (B, 28 * 28), jnp.float32)  # flattened "MNIST" batch

    weights, biases = init_params(key)
    padded_params = prepare_params(weights, biases)        # pad + bf16-cast once

    x_bf16 = x.astype(jnp.bfloat16)                        # "dataset stored bf16": one-time cast
    encoded, decoded = autoencoder_forward(x_bf16, padded_params, tile_b=128)
    jax.block_until_ready((encoded, decoded))

    # correctness check vs. plain-JAX f32 reference (bf16 matmuls/input -> loose tol)
    enc_ref, dec_ref = reference_forward(x, weights, biases)
    assert encoded.shape == (B, 3) and decoded.shape == (B, 28 * 28)
    assert jnp.allclose(encoded, enc_ref, atol=3e-2, rtol=3e-2)
    assert jnp.allclose(decoded, dec_ref, atol=3e-2, rtol=3e-2)

    print("KERNEL_OK")
</pallas_src>

<mosaic_0001>
module attributes {stable_mosaic.version = 11 : i64} {
  func.func @autoencoder_kernel(%arg0: i32, %arg1: memref<128x784xbf16, #tpu.memory_space<vmem>>, %arg2: memref<784x128xbf16, #tpu.memory_space<vmem>>, %arg3: memref<1x128xf32, #tpu.memory_space<vmem>>, %arg4: memref<128x128xbf16, #tpu.memory_space<vmem>>, %arg5: memref<1x128xf32, #tpu.memory_space<vmem>>, %arg6: memref<128x128xbf16, #tpu.memory_space<vmem>>, %arg7: memref<1x128xf32, #tpu.memory_space<vmem>>, %arg8: memref<128x16xbf16, #tpu.memory_space<vmem>>, %arg9: memref<1x16xf32, #tpu.memory_space<vmem>>, %arg10: memref<16x128xbf16, #tpu.memory_space<vmem>>, %arg11: memref<1x128xf32, #tpu.memory_space<vmem>>, %arg12: memref<128x128xbf16, #tpu.memory_space<vmem>>, %arg13: memref<1x128xf32, #tpu.memory_space<vmem>>, %arg14: memref<128x128xbf16, #tpu.memory_space<vmem>>, %arg15: memref<1x128xf32, #tpu.memory_space<vmem>>, %arg16: memref<128x784xbf16, #tpu.memory_space<vmem>>, %arg17: memref<1x784xf32, #tpu.memory_space<vmem>>, %arg18: memref<128x16xf32, #tpu.memory_space<vmem>>, %arg19: memref<128x784xf32, #tpu.memory_space<vmem>>) attributes {dimension_semantics = [#tpu.dimension_semantics<parallel>], iteration_bounds = array<i64: 4>, scalar_prefetch = 0 : i64, scratch_operands = 0 : i64, tpu.core_type = #tpu.core_type<tc>, window_params = [{transform_indices = @transform_0, window_bounds = array<i64: 128, 784>}, {pipeline_mode = #tpu.pipeline_mode<synchronous>, transform_indices = @transform_1, window_bounds = array<i64: 784, 128>}, {pipeline_mode = #tpu.pipeline_mode<synchronous>, transform_indices = @transform_2, window_bounds = array<i64: 1, 128>}, {pipeline_mode = #tpu.pipeline_mode<synchronous>, transform_indices = @transform_3, window_bounds = array<i64: 128, 128>}, {pipeline_mode = #tpu.pipeline_mode<synchronous>, transform_indices = @transform_4, window_bounds = array<i64: 1, 128>}, {pipeline_mode = #tpu.pipeline_mode<synchronous>, transform_indices = @transform_5, window_bounds = array<i64: 128, 128>}, {pipeline_mode = #tpu.pipeline_mode<synchronous>, transform_indices = @transform_6, window_bounds = array<i64: 1, 128>}, {pipeline_mode = #tpu.pipeline_mode<synchronous>, transform_indices = @transform_7, window_bounds = array<i64: 128, 16>}, {pipeline_mode = #tpu.pipeline_mode<synchronous>, transform_indices = @transform_8, window_bounds = array<i64: 1, 16>}, {pipeline_mode = #tpu.pipeline_mode<synchronous>, transform_indices = @transform_9, window_bounds = array<i64: 16, 128>}, {pipeline_mode = #tpu.pipeline_mode<synchronous>, transform_indices = @transform_10, window_bounds = array<i64: 1, 128>}, {pipeline_mode = #tpu.pipeline_mode<synchronous>, transform_indices = @transform_11, window_bounds = array<i64: 128, 128>}, {pipeline_mode = #tpu.pipeline_mode<synchronous>, transform_indices = @transform_12, window_bounds = array<i64: 1, 128>}, {pipeline_mode = #tpu.pipeline_mode<synchronous>, transform_indices = @transform_13, window_bounds = array<i64: 128, 128>}, {pipeline_mode = #tpu.pipeline_mode<synchronous>, transform_indices = @transform_14, window_bounds = array<i64: 1, 128>}, {pipeline_mode = #tpu.pipeline_mode<synchronous>, transform_indices = @transform_15, window_bounds = array<i64: 128, 784>}, {pipeline_mode = #tpu.pipeline_mode<synchronous>, transform_indices = @transform_16, window_bounds = array<i64: 1, 784>}, {transform_indices = @transform_17, window_bounds = array<i64: 128, 16>}, {transform_indices = @transform_18, window_bounds = array<i64: 128, 784>}]} {
    %c0 = arith.constant 0 : index
    %c0_0 = arith.constant 0 : index
    %0 = vector.load %arg1[%c0, %c0_0] : memref<128x784xbf16, #tpu.memory_space<vmem>>, vector<128x784xbf16>
    %c0_1 = arith.constant 0 : index
    %c0_2 = arith.constant 0 : index
    %1 = vector.load %arg2[%c0_1, %c0_2] : memref<784x128xbf16, #tpu.memory_space<vmem>>, vector<784x128xbf16>
    %cst = arith.constant dense<0.000000e+00> : vector<128x128xf32>
    %2 = tpu.matmul %0, %1, %cst {dimension_numbers = #tpu.dot_dimension_numbers<[1], [0], [0], [1], [0, 0, 1, 1], [], []>} : vector<128x784xbf16>, vector<784x128xbf16>, vector<128x128xf32> -> vector<128x128xf32>
    %c0_3 = arith.constant 0 : index
    %c0_4 = arith.constant 0 : index
    %3 = vector.load %arg3[%c0_3, %c0_4] : memref<1x128xf32, #tpu.memory_space<vmem>>, vector<1x128xf32>
    %4 = vector.broadcast %3 : vector<1x128xf32> to vector<128x128xf32>
    %5 = arith.addf %2, %4 : vector<128x128xf32>
    %6 = arith.truncf %5 : vector<128x128xf32> to vector<128x128xbf16>
    %7 = math.tanh %6 : vector<128x128xbf16>
    %c0_5 = arith.constant 0 : index
    %c0_6 = arith.constant 0 : index
    %8 = vector.load %arg4[%c0_5, %c0_6] : memref<128x128xbf16, #tpu.memory_space<vmem>>, vector<128x128xbf16>
    %cst_7 = arith.constant dense<0.000000e+00> : vector<128x128xf32>
    %9 = tpu.matmul %7, %8, %cst_7 {dimension_numbers = #tpu.dot_dimension_numbers<[1], [0], [0], [1], [0, 0, 1, 1], [], []>} : vector<128x128xbf16>, vector<128x128xbf16>, vector<128x128xf32> -> vector<128x128xf32>
    %c0_8 = arith.constant 0 : index
    %c0_9 = arith.constant 0 : index
    %10 = vector.load %arg5[%c0_8, %c0_9] : memref<1x128xf32, #tpu.memory_space<vmem>>, vector<1x128xf32>
    %11 = vector.broadcast %10 : vector<1x128xf32> to vector<128x128xf32>
    %12 = arith.addf %9, %11 : vector<128x128xf32>
    %13 = arith.truncf %12 : vector<128x128xf32> to vector<128x128xbf16>
    %14 = math.tanh %13 : vector<128x128xbf16>
    %c0_10 = arith.constant 0 : index
    %c0_11 = arith.constant 0 : index
    %15 = vector.load %arg6[%c0_10, %c0_11] : memref<128x128xbf16, #tpu.memory_space<vmem>>, vector<128x128xbf16>
    %cst_12 = arith.constant dense<0.000000e+00> : vector<128x128xf32>
    %16 = tpu.matmul %14, %15, %cst_12 {dimension_numbers = #tpu.dot_dimension_numbers<[1], [0], [0], [1], [0, 0, 1, 1], [], []>} : vector<128x128xbf16>, vector<128x128xbf16>, vector<128x128xf32> -> vector<128x128xf32>
    %c0_13 = arith.constant 0 : index
    %c0_14 = arith.constant 0 : index
    %17 = vector.load %arg7[%c0_13, %c0_14] : memref<1x128xf32, #tpu.memory_space<vmem>>, vector<1x128xf32>
    %18 = vector.broadcast %17 : vector<1x128xf32> to vector<128x128xf32>
    %19 = arith.addf %16, %18 : vector<128x128xf32>
    %20 = arith.truncf %19 : vector<128x128xf32> to vector<128x128xbf16>
    %21 = math.tanh %20 : vector<128x128xbf16>
    %c0_15 = arith.constant 0 : index
    %c0_16 = arith.constant 0 : index
    %22 = vector.load %arg8[%c0_15, %c0_16] : memref<128x16xbf16, #tpu.memory_space<vmem>>, vector<128x16xbf16>
    %cst_17 = arith.constant dense<0.000000e+00> : vector<128x16xf32>
    %23 = tpu.matmul %21, %22, %cst_17 {dimension_numbers = #tpu.dot_dimension_numbers<[1], [0], [0], [1], [0, 0, 1, 1], [], []>} : vector<128x128xbf16>, vector<128x16xbf16>, vector<128x16xf32> -> vector<128x16xf32>
    %c0_18 = arith.constant 0 : index
    %c0_19 = arith.constant 0 : index
    %24 = vector.load %arg9[%c0_18, %c0_19] : memref<1x16xf32, #tpu.memory_space<vmem>>, vector<1x16xf32>
    %25 = vector.broadcast %24 : vector<1x16xf32> to vector<128x16xf32>
    %26 = arith.addf %23, %25 : vector<128x16xf32>
    %c0_20 = arith.constant 0 : index
    %c0_21 = arith.constant 0 : index
    %27 = vector.load %arg18[%c0_20, %c0_21] : memref<128x16xf32, #tpu.memory_space<vmem>>, vector<128x16xf32>
    tpu.vector_store %arg18[%c0_20, %c0_21], %26 {strides = array<i32>} : memref<128x16xf32, #tpu.memory_space<vmem>>, vector<128x16xf32>,
    %28 = arith.truncf %26 : vector<128x16xf32> to vector<128x16xbf16>
    %c0_22 = arith.constant 0 : index
    %c0_23 = arith.constant 0 : index
    %29 = vector.load %arg10[%c0_22, %c0_23] : memref<16x128xbf16, #tpu.memory_space<vmem>>, vector<16x128xbf16>
    %cst_24 = arith.constant dense<0.000000e+00> : vector<128x128xf32>
    %30 = tpu.matmul %28, %29, %cst_24 {dimension_numbers = #tpu.dot_dimension_numbers<[1], [0], [0], [1], [0, 0, 1, 1], [], []>} : vector<128x16xbf16>, vector<16x128xbf16>, vector<128x128xf32> -> vector<128x128xf32>
    %c0_25 = arith.constant 0 : index
    %c0_26 = arith.constant 0 : index
    %31 = vector.load %arg11[%c0_25, %c0_26] : memref<1x128xf32, #tpu.memory_space<vmem>>, vector<1x128xf32>
    %32 = vector.broadcast %31 : vector<1x128xf32> to vector<128x128xf32>
    %33 = arith.addf %30, %32 : vector<128x128xf32>
    %34 = arith.truncf %33 : vector<128x128xf32> to vector<128x128xbf16>
    %35 = math.tanh %34 : vector<128x128xbf16>
    %c0_27 = arith.constant 0 : index
    %c0_28 = arith.constant 0 : index
    %36 = vector.load %arg12[%c0_27, %c0_28] : memref<128x128xbf16, #tpu.memory_space<vmem>>, vector<128x128xbf16>
    %cst_29 = arith.constant dense<0.000000e+00> : vector<128x128xf32>
    %37 = tpu.matmul %35, %36, %cst_29 {dimension_numbers = #tpu.dot_dimension_numbers<[1], [0], [0], [1], [0, 0, 1, 1], [], []>} : vector<128x128xbf16>, vector<128x128xbf16>, vector<128x128xf32> -> vector<128x128xf32>
    %c0_30 = arith.constant 0 : index
    %c0_31 = arith.constant 0 : index
    %38 = vector.load %arg13[%c0_30, %c0_31] : memref<1x128xf32, #tpu.memory_space<vmem>>, vector<1x128xf32>
    %39 = vector.broadcast %38 : vector<1x128xf32> to vector<128x128xf32>
    %40 = arith.addf %37, %39 : vector<128x128xf32>
    %41 = arith.truncf %40 : vector<128x128xf32> to vector<128x128xbf16>
    %42 = math.tanh %41 : vector<128x128xbf16>
    %c0_32 = arith.constant 0 : index
    %c0_33 = arith.constant 0 : index
    %43 = vector.load %arg14[%c0_32, %c0_33] : memref<128x128xbf16, #tpu.memory_space<vmem>>, vector<128x128xbf16>
    %cst_34 = arith.constant dense<0.000000e+00> : vector<128x128xf32>
    %44 = tpu.matmul %42, %43, %cst_34 {dimension_numbers = #tpu.dot_dimension_numbers<[1], [0], [0], [1], [0, 0, 1, 1], [], []>} : vector<128x128xbf16>, vector<128x128xbf16>, vector<128x128xf32> -> vector<128x128xf32>
    %c0_35 = arith.constant 0 : index
    %c0_36 = arith.constant 0 : index
    %45 = vector.load %arg15[%c0_35, %c0_36] : memref<1x128xf32, #tpu.memory_space<vmem>>, vector<1x128xf32>
    %46 = vector.broadcast %45 : vector<1x128xf32> to vector<128x128xf32>
    %47 = arith.addf %44, %46 : vector<128x128xf32>
    %48 = arith.truncf %47 : vector<128x128xf32> to vector<128x128xbf16>
    %49 = math.tanh %48 : vector<128x128xbf16>
    %c0_37 = arith.constant 0 : index
    %c0_38 = arith.constant 0 : index
    %50 = vector.load %arg16[%c0_37, %c0_38] : memref<128x784xbf16, #tpu.memory_space<vmem>>, vector<128x784xbf16>
    %cst_39 = arith.constant dense<0.000000e+00> : vector<128x784xf32>
    %51 = tpu.matmul %49, %50, %cst_39 {dimension_numbers = #tpu.dot_dimension_numbers<[1], [0], [0], [1], [0, 0, 1, 1], [], []>} : vector<128x128xbf16>, vector<128x784xbf16>, vector<128x784xf32> -> vector<128x784xf32>
    %c0_40 = arith.constant 0 : index
    %c0_41 = arith.constant 0 : index
    %52 = vector.load %arg17[%c0_40, %c0_41] : memref<1x784xf32, #tpu.memory_space<vmem>>, vector<1x784xf32>
    %53 = vector.broadcast %52 : vector<1x784xf32> to vector<128x784xf32>
    %54 = arith.addf %51, %53 : vector<128x784xf32>
    %55 = arith.negf %54 : vector<128x784xf32>
    %56 = math.exp %55 : vector<128x784xf32>
    %cst_42 = arith.constant 1.000000e+00 : f32
    %57 = vector.broadcast %cst_42 : f32 to vector<128x784xf32>
    %58 = arith.addf %57, %56 : vector<128x784xf32>
    %59 = arith.divf %57, %58 : vector<128x784xf32>
    %c0_43 = arith.constant 0 : index
    %c0_44 = arith.constant 0 : index
    %60 = vector.load %arg19[%c0_43, %c0_44] : memref<128x784xf32, #tpu.memory_space<vmem>>, vector<128x784xf32>
    tpu.vector_store %arg19[%c0_43, %c0_44], %59 {strides = array<i32>} : memref<128x784xf32, #tpu.memory_space<vmem>>, vector<128x784xf32>,
    return
  }
  func.func @transform_0(%arg0: i32) -> (i32, i32) {
    %c0_i32 = arith.constant 0 : i32
    %c0_i32_0 = arith.constant 0 : i32
    return %arg0, %c0_i32 : i32, i32
  }
  func.func @transform_1(%arg0: i32) -> (i32, i32) {
    %c0_i32 = arith.constant 0 : i32
    %c0_i32_0 = arith.constant 0 : i32
    %c0_i32_1 = arith.constant 0 : i32
    return %c0_i32, %c0_i32_0 : i32, i32
  }
  func.func @transform_2(%arg0: i32) -> (i32, i32) {
    %c0_i32 = arith.constant 0 : i32
    %c0_i32_0 = arith.constant 0 : i32
    %c0_i32_1 = arith.constant 0 : i32
    return %c0_i32, %c0_i32_0 : i32, i32
  }
  func.func @transform_3(%arg0: i32) -> (i32, i32) {
    %c0_i32 = arith.constant 0 : i32
    %c0_i32_0 = arith.constant 0 : i32
    %c0_i32_1 = arith.constant 0 : i32
    return %c0_i32, %c0_i32_0 : i32, i32
  }
  func.func @transform_4(%arg0: i32) -> (i32, i32) {
    %c0_i32 = arith.constant 0 : i32
    %c0_i32_0 = arith.constant 0 : i32
    %c0_i32_1 = arith.constant 0 : i32
    return %c0_i32, %c0_i32_0 : i32, i32
  }
  func.func @transform_5(%arg0: i32) -> (i32, i32) {
    %c0_i32 = arith.constant 0 : i32
    %c0_i32_0 = arith.constant 0 : i32
    %c0_i32_1 = arith.constant 0 : i32
    return %c0_i32, %c0_i32_0 : i32, i32
  }
  func.func @transform_6(%arg0: i32) -> (i32, i32) {
    %c0_i32 = arith.constant 0 : i32
    %c0_i32_0 = arith.constant 0 : i32
    %c0_i32_1 = arith.constant 0 : i32
    return %c0_i32, %c0_i32_0 : i32, i32
  }
  func.func @transform_7(%arg0: i32) -> (i32, i32) {
    %c0_i32 = arith.constant 0 : i32
    %c0_i32_0 = arith.constant 0 : i32
    %c0_i32_1 = arith.constant 0 : i32
    return %c0_i32, %c0_i32_0 : i32, i32
  }
  func.func @transform_8(%arg0: i32) -> (i32, i32) {
    %c0_i32 = arith.constant 0 : i32
    %c0_i32_0 = arith.constant 0 : i32
    %c0_i32_1 = arith.constant 0 : i32
    return %c0_i32, %c0_i32_0 : i32, i32
  }
  func.func @transform_9(%arg0: i32) -> (i32, i32) {
    %c0_i32 = arith.constant 0 : i32
    %c0_i32_0 = arith.constant 0 : i32
    %c0_i32_1 = arith.constant 0 : i32
    return %c0_i32, %c0_i32_0 : i32, i32
  }
  func.func @transform_10(%arg0: i32) -> (i32, i32) {
    %c0_i32 = arith.constant 0 : i32
    %c0_i32_0 = arith.constant 0 : i32
    %c0_i32_1 = arith.constant 0 : i32
    return %c0_i32, %c0_i32_0 : i32, i32
  }
  func.func @transform_11(%arg0: i32) -> (i32, i32) {
    %c0_i32 = arith.constant 0 : i32
    %c0_i32_0 = arith.constant 0 : i32
    %c0_i32_1 = arith.constant 0 : i32
    return %c0_i32, %c0_i32_0 : i32, i32
  }
  func.func @transform_12(%arg0: i32) -> (i32, i32) {
    %c0_i32 = arith.constant 0 : i32
    %c0_i32_0 = arith.constant 0 : i32
    %c0_i32_1 = arith.constant 0 : i32
    return %c0_i32, %c0_i32_0 : i32, i32
  }
  func.func @transform_13(%arg0: i32) -> (i32, i32) {
    %c0_i32 = arith.constant 0 : i32
    %c0_i32_0 = arith.constant 0 : i32
    %c0_i32_1 = arith.constant 0 : i32
    return %c0_i32, %c0_i32_0 : i32, i32
  }
  func.func @transform_14(%arg0: i32) -> (i32, i32) {
    %c0_i32 = arith.constant 0 : i32
    %c0_i32_0 = arith.constant 0 : i32
    %c0_i32_1 = arith.constant 0 : i32
    return %c0_i32, %c0_i32_0 : i32, i32
  }
  func.func @transform_15(%arg0: i32) -> (i32, i32) {
    %c0_i32 = arith.constant 0 : i32
    %c0_i32_0 = arith.constant 0 : i32
    %c0_i32_1 = arith.constant 0 : i32
    return %c0_i32, %c0_i32_0 : i32, i32
  }
  func.func @transform_16(%arg0: i32) -> (i32, i32) {
    %c0_i32 = arith.constant 0 : i32
    %c0_i32_0 = arith.constant 0 : i32
    %c0_i32_1 = arith.constant 0 : i32
    return %c0_i32, %c0_i32_0 : i32, i32
  }
  func.func @transform_17(%arg0: i32) -> (i32, i32) {
    %c0_i32 = arith.constant 0 : i32
    %c0_i32_0 = arith.constant 0 : i32
    return %arg0, %c0_i32 : i32, i32
  }
  func.func @transform_18(%arg0: i32) -> (i32, i32) {
    %c0_i32 = arith.constant 0 : i32
    %c0_i32_0 = arith.constant 0 : i32
    return %arg0, %c0_i32 : i32, i32
  }
}

</mosaic_0001>

<llo_original>
// kernel: autoencoder_forward.1
$region0: #{autoencoder_forward.1}
  #allocation0 [shape = 'u32[]', space=smem, size = 0x4, offset = 0x4, fixed_abs, tag = 'smem constant byte address 0x4 - core index']
  #allocation1 [shape = 'u32[72,128]{1,0:T(1,128)}', space=vmem, size = 0x9000, scoped, tag = 'internal scratch']
  %s0 = inlined_call_operand.vmem [shape: bf16[512,784], index: 0, kind: input, shape index: {}]
  %s1 = inlined_call_operand.vmem [shape: bf16[784,128], index: 1, kind: input, shape index: {}]
  %s2 = inlined_call_operand.vmem [shape: f32[1,128], index: 2, kind: input, shape index: {}]
  %s3 = inlined_call_operand.vmem [shape: bf16[128,128], index: 3, kind: input, shape index: {}]
  %s4 = inlined_call_operand.vmem [shape: f32[1,128], index: 4, kind: input, shape index: {}]
  %s5 = inlined_call_operand.vmem [shape: bf16[128,128], index: 5, kind: input, shape index: {}]
  %s6 = inlined_call_operand.vmem [shape: f32[1,128], index: 6, kind: input, shape index: {}]
  %s7 = inlined_call_operand.vmem [shape: bf16[128,16], index: 7, kind: input, shape index: {}]
  %s8 = inlined_call_operand.vmem [shape: f32[1,16], index: 8, kind: input, shape index: {}]
  %s9 = inlined_call_operand.vmem [shape: bf16[16,128], index: 9, kind: input, shape index: {}]
  %s10 = inlined_call_operand.vmem [shape: f32[1,128], index: 10, kind: input, shape index: {}]
  %s11 = inlined_call_operand.vmem [shape: bf16[128,128], index: 11, kind: input, shape index: {}]
  %s12 = inlined_call_operand.vmem [shape: f32[1,128], index: 12, kind: input, shape index: {}]
  %s13 = inlined_call_operand.vmem [shape: bf16[128,128], index: 13, kind: input, shape index: {}]
  %s14 = inlined_call_operand.vmem [shape: f32[1,128], index: 14, kind: input, shape index: {}]
  %s15 = inlined_call_operand.vmem [shape: bf16[128,784], index: 15, kind: input, shape index: {}]
  %s16 = inlined_call_operand.vmem [shape: f32[1,784], index: 16, kind: input, shape index: {}]
  %s17 = inlined_call_operand.vmem [shape: f32[512,16], index: 17, kind: output, shape index: {0}]
  %s18 = inlined_call_operand.vmem [shape: f32[512,784], index: 18, kind: output, shape index: {1}]
  %19 = xla_tuple %s17, %s18
  %s20 = sld [smem:[#allocation0]]
  $region109: #{autoencoder_forward.1} parent=0
    _
  %s22 = ssub.s32 1, %s20
  %s23 = scalar_select 0, %s22, %s20
  loop: start=0, step=1, limit=6
  $region2: #{autoencoder_forward.1} parent=0 // loop_pre_header
    _
  $region3: #{autoencoder_forward.1} parent=0 // loop_header
    %s25 = sphi 0, %s29
    %p26 = scmp.ge.s32.totalorder %s25, 6
    %s35 = sphi 0, %s37
    %s38 = sphi 0, %s35
    %s39 = sphi 0, %s38
    %s55 = sphi 0, %s39
    %s59 = sphi 0, %s59
    %s61 = sphi 0, %s59
    %s62 = sphi 0, %s61
    %s76 = sphi 0, %s62
    %s80 = sphi 0, %s80
    %s82 = sphi 0, %s80
    %s83 = sphi 0, %s82
    %s97 = sphi 0, %s83
    %s101 = sphi 0, %s101
    %s103 = sphi 0, %s101
    %s104 = sphi 0, %s103
    %s118 = sphi 0, %s104
    %s122 = sphi 0, %s122
    %s124 = sphi 0, %s122
    %s125 = sphi 0, %s124
    %s139 = sphi 0, %s125
    %s143 = sphi 0, %s143
    %s145 = sphi 0, %s143
    %s146 = sphi 0, %s145
    %s160 = sphi 0, %s146
    %s164 = sphi 0, %s164
    %s166 = sphi 0, %s164
    %s167 = sphi 0, %s166
    %s181 = sphi 0, %s167
    %s185 = sphi 0, %s185
    %s187 = sphi 0, %s185
    %s188 = sphi 0, %s187
    %s202 = sphi 0, %s188
    %s206 = sphi 0, %s206
    %s208 = sphi 0, %s206
    %s209 = sphi 0, %s208
    %s223 = sphi 0, %s209
    %s227 = sphi 0, %s227
    %s229 = sphi 0, %s227
    %s230 = sphi 0, %s229
    %s244 = sphi 0, %s230
    %s248 = sphi 0, %s248
    %s250 = sphi 0, %s248
    %s251 = sphi 0, %s250
    %s265 = sphi 0, %s251
    %s269 = sphi 0, %s269
    %s271 = sphi 0, %s269
    %s272 = sphi 0, %s271
    %s286 = sphi 0, %s272
    %s290 = sphi 0, %s290
    %s292 = sphi 0, %s290
    %s293 = sphi 0, %s292
    %s307 = sphi 0, %s293
    %s311 = sphi 0, %s311
    %s313 = sphi 0, %s311
    %s314 = sphi 0, %s313
    %s328 = sphi 0, %s314
    %s332 = sphi 0, %s332
    %s334 = sphi 0, %s332
    %s335 = sphi 0, %s334
    %s349 = sphi 0, %s335
    %s353 = sphi 0, %s353
    %s355 = sphi 0, %s353
    %s356 = sphi 0, %s355
    %s370 = sphi 0, %s356
    %s374 = sphi 0, %s374
    %s376 = sphi 0, %s374
    %s377 = sphi 0, %s376
    %s391 = sphi 0, %s377
    %s397 = sphi 0, %s399
    %s400 = sphi 0, %s397
    %s401 = sphi 0, %s400
    %s417 = sphi 0, %s401
    %s423 = sphi 0, %s425
    %s426 = sphi 0, %s423
    %s427 = sphi 0, %s426
    %s443 = sphi 0, %s427
  $region4: #{autoencoder_forward.1} parent=0 // loop_header_branch
    %28 = sbr.rel (%p26) target = $region8
  $region5: #{autoencoder_forward.1} parent=0 // loop_body
    %s30 = ssub.s32 %s25, 1
    %s31 = ssub.s32 %s25, 2
    %s32 = sadd.s32 %s25, 1
    %s33 = ssub.s32 %s25, %s32
    %p34 = scmp.eq.s32.totalorder %s33, 0
    %s36 = sadd.s32 %s35, 1
    %s37 = scalar_select %p34, %s35, %s36
    %p40 = pneg %p34
    %p41 = scmp.eq.s32.totalorder %s25, 3
    %p42 = por %p40, %p41
    %p43 = scmp.ne.s32.totalorder %s35, %s38
    %p44 = scmp.eq.s32.totalorder %s25, 0
    %p45 = por %p43, %p44
    %p46 = scmp.ne.s32.totalorder %s35, %s38
    %p47 = scmp.eq.s32.totalorder %s30, 3
    %p48 = por %p46, %p47
    %p49 = scmp.ne.s32.totalorder %s38, %s39
    %p50 = scmp.eq.s32.totalorder %s30, 0
    %p51 = por %p49, %p50
    %p52 = scmp.ne.s32.totalorder %s38, %s39
    %p53 = scmp.eq.s32.totalorder %s31, 3
    %p54 = por %p52, %p53
    %p56 = scmp.ne.s32.totalorder %s39, %s55
    %p57 = scmp.eq.s32.totalorder %s31, 0
    %p58 = por %p56, %p57
    %s60 = sadd.s32 %s59, 1
    %p63 = scmp.eq.s32.totalorder %s25, 3
    %p64 = scmp.ne.s32.totalorder %s59, %s61
    %p65 = scmp.eq.s32.totalorder %s25, 0
    %p66 = por %p64, %p65
    %p67 = scmp.ne.s32.totalorder %s59, %s61
    %p68 = scmp.eq.s32.totalorder %s30, 3
    %p69 = por %p67, %p68
    %p70 = scmp.ne.s32.totalorder %s61, %s62
    %p71 = scmp.eq.s32.totalorder %s30, 0
    %p72 = por %p70, %p71
    %p73 = scmp.ne.s32.totalorder %s61, %s62
    %p74 = scmp.eq.s32.totalorder %s31, 3
    %p75 = por %p73, %p74
    %p77 = scmp.ne.s32.totalorder %s62, %s76
    %p78 = scmp.eq.s32.totalorder %s31, 0
    %p79 = por %p77, %p78
    %s81 = sadd.s32 %s80, 1
    %p84 = scmp.eq.s32.totalorder %s25, 3
    %p85 = scmp.ne.s32.totalorder %s80, %s82
    %p86 = scmp.eq.s32.totalorder %s25, 0
    %p87 = por %p85, %p86
    %p88 = scmp.ne.s32.totalorder %s80, %s82
    %p89 = scmp.eq.s32.totalorder %s30, 3
    %p90 = por %p88, %p89
    %p91 = scmp.ne.s32.totalorder %s82, %s83
    %p92 = scmp.eq.s32.totalorder %s30, 0
    %p93 = por %p91, %p92
    %p94 = scmp.ne.s32.totalorder %s82, %s83
    %p95 = scmp.eq.s32.totalorder %s31, 3
    %p96 = por %p94, %p95
    %p98 = scmp.ne.s32.totalorder %s83, %s97
    %p99 = scmp.eq.s32.totalorder %s31, 0
    %p100 = por %p98, %p99
    %s102 = sadd.s32 %s101, 1
    %p105 = scmp.eq.s32.totalorder %s25, 3
    %p106 = scmp.ne.s32.totalorder %s101, %s103
    %p107 = scmp.eq.s32.totalorder %s25, 0
    %p108 = por %p106, %p107
    %p109 = scmp.ne.s32.totalorder %s101, %s103
    %p110 = scmp.eq.s32.totalorder %s30, 3
    %p111 = por %p109, %p110
    %p112 = scmp.ne.s32.totalorder %s103, %s104
    %p113 = scmp.eq.s32.totalorder %s30, 0
    %p114 = por %p112, %p113
    %p115 = scmp.ne.s32.totalorder %s103, %s104
    %p116 = scmp.eq.s32.totalorder %s31, 3
    %p117 = por %p115, %p116
    %p119 = scmp.ne.s32.totalorder %s104, %s118
    %p120 = scmp.eq.s32.totalorder %s31, 0
    %p121 = por %p119, %p120
    %s123 = sadd.s32 %s122, 1
    %p126 = scmp.eq.s32.totalorder %s25, 3
    %p127 = scmp.ne.s32.totalorder %s122, %s124
    %p128 = scmp.eq.s32.totalorder %s25, 0
    %p129 = por %p127, %p128
    %p130 = scmp.ne.s32.totalorder %s122, %s124
    %p131 = scmp.eq.s32.totalorder %s30, 3
    %p132 = por %p130, %p131
    %p133 = scmp.ne.s32.totalorder %s124, %s125
    %p134 = scmp.eq.s32.totalorder %s30, 0
    %p135 = por %p133, %p134
    %p136 = scmp.ne.s32.totalorder %s124, %s125
    %p137 = scmp.eq.s32.totalorder %s31, 3
    %p138 = por %p136, %p137
    %p140 = scmp.ne.s32.totalorder %s125, %s139
    %p141 = scmp.eq.s32.totalorder %s31, 0
    %p142 = por %p140, %p141
    %s144 = sadd.s32 %s143, 1
    %p147 = scmp.eq.s32.totalorder %s25, 3
    %p148 = scmp.ne.s32.totalorder %s143, %s145
    %p149 = scmp.eq.s32.totalorder %s25, 0
    %p150 = por %p148, %p149
    %p151 = scmp.ne.s32.totalorder %s143, %s145
    %p152 = scmp.eq.s32.totalorder %s30, 3
    %p153 = por %p151, %p152
    %p154 = scmp.ne.s32.totalorder %s145, %s146
    %p155 = scmp.eq.s32.totalorder %s30, 0
    %p156 = por %p154, %p155
    %p157 = scmp.ne.s32.totalorder %s145, %s146
    %p158 = scmp.eq.s32.totalorder %s31, 3
    %p159 = por %p157, %p158
    %p161 = scmp.ne.s32.totalorder %s146, %s160
    %p162 = scmp.eq.s32.totalorder %s31, 0
    %p163 = por %p161, %p162
    %s165 = sadd.s32 %s164, 1
    %p168 = scmp.eq.s32.totalorder %s25, 3
    %p169 = scmp.ne.s32.totalorder %s164, %s166
    %p170 = scmp.eq.s32.totalorder %s25, 0
    %p171 = por %p169, %p170
    %p172 = scmp.ne.s32.totalorder %s164, %s166
    %p173 = scmp.eq.s32.totalorder %s30, 3
    %p174 = por %p172, %p173
    %p175 = scmp.ne.s32.totalorder %s166, %s167
    %p176 = scmp.eq.s32.totalorder %s30, 0
    %p177 = por %p175, %p176
    %p178 = scmp.ne.s32.totalorder %s166, %s167
    %p179 = scmp.eq.s32.totalorder %s31, 3
    %p180 = por %p178, %p179
    %p182 = scmp.ne.s32.totalorder %s167, %s181
    %p183 = scmp.eq.s32.totalorder %s31, 0
    %p184 = por %p182, %p183
    %s186 = sadd.s32 %s185, 1
    %p189 = scmp.eq.s32.totalorder %s25, 3
    %p190 = scmp.ne.s32.totalorder %s185, %s187
    %p191 = scmp.eq.s32.totalorder %s25, 0
    %p192 = por %p190, %p191
    %p193 = scmp.ne.s32.totalorder %s185, %s187
    %p194 = scmp.eq.s32.totalorder %s30, 3
    %p195 = por %p193, %p194
    %p196 = scmp.ne.s32.totalorder %s187, %s188
    %p197 = scmp.eq.s32.totalorder %s30, 0
    %p198 = por %p196, %p197
    %p199 = scmp.ne.s32.totalorder %s187, %s188
    %p200 = scmp.eq.s32.totalorder %s31, 3
    %p201 = por %p199, %p200
    %p203 = scmp.ne.s32.totalorder %s188, %s202
    %p204 = scmp.eq.s32.totalorder %s31, 0
    %p205 = por %p203, %p204
    %s207 = sadd.s32 %s206, 1
    %p210 = scmp.eq.s32.totalorder %s25, 3
    %p211 = scmp.ne.s32.totalorder %s206, %s208
    %p212 = scmp.eq.s32.totalorder %s25, 0
    %p213 = por %p211, %p212
    %p214 = scmp.ne.s32.totalorder %s206, %s208
    %p215 = scmp.eq.s32.totalorder %s30, 3
    %p216 = por %p214, %p215
    %p217 = scmp.ne.s32.totalorder %s208, %s209
    %p218 = scmp.eq.s32.totalorder %s30, 0
    %p219 = por %p217, %p218
    %p220 = scmp.ne.s32.totalorder %s208, %s209
    %p221 = scmp.eq.s32.totalorder %s31, 3
    %p222 = por %p220, %p221
    %p224 = scmp.ne.s32.totalorder %s209, %s223
    %p225 = scmp.eq.s32.totalorder %s31, 0
    %p226 = por %p224, %p225
    %s228 = sadd.s32 %s227, 1
    %p231 = scmp.eq.s32.totalorder %s25, 3
    %p232 = scmp.ne.s32.totalorder %s227, %s229
    %p233 = scmp.eq.s32.totalorder %s25, 0
    %p234 = por %p232, %p233
    %p235 = scmp.ne.s32.totalorder %s227, %s229
    %p236 = scmp.eq.s32.totalorder %s30, 3
    %p237 = por %p235, %p236
    %p238 = scmp.ne.s32.totalorder %s229, %s230
    %p239 = scmp.eq.s32.totalorder %s30, 0
    %p240 = por %p238, %p239
    %p241 = scmp.ne.s32.totalorder %s229, %s230
    %p242 = scmp.eq.s32.totalorder %s31, 3
    %p243 = por %p241, %p242
    %p245 = scmp.ne.s32.totalorder %s230, %s244
    %p246 = scmp.eq.s32.totalorder %s31, 0
    %p247 = por %p245, %p246
    %s249 = sadd.s32 %s248, 1
    %p252 = scmp.eq.s32.totalorder %s25, 3
    %p253 = scmp.ne.s32.totalorder %s248, %s250
    %p254 = scmp.eq.s32.totalorder %s25, 0
    %p255 = por %p253, %p254
    %p256 = scmp.ne.s32.totalorder %s248, %s250
    %p257 = scmp.eq.s32.totalorder %s30, 3
    %p258 = por %p256, %p257
    %p259 = scmp.ne.s32.totalorder %s250, %s251
    %p260 = scmp.eq.s32.totalorder %s30, 0
    %p261 = por %p259, %p260
    %p262 = scmp.ne.s32.totalorder %s250, %s251
    %p263 = scmp.eq.s32.totalorder %s31, 3
    %p264 = por %p262, %p263
    %p266 = scmp.ne.s32.totalorder %s251, %s265
    %p267 = scmp.eq.s32.totalorder %s31, 0
    %p268 = por %p266, %p267
    %s270 = sadd.s32 %s269, 1
    %p273 = scmp.eq.s32.totalorder %s25, 3
    %p274 = scmp.ne.s32.totalorder %s269, %s271
    %p275 = scmp.eq.s32.totalorder %s25, 0
    %p276 = por %p274, %p275
    %p277 = scmp.ne.s32.totalorder %s269, %s271
    %p278 = scmp.eq.s32.totalorder %s30, 3
    %p279 = por %p277, %p278
    %p280 = scmp.ne.s32.totalorder %s271, %s272
    %p281 = scmp.eq.s32.totalorder %s30, 0
    %p282 = por %p280, %p281
    %p283 = scmp.ne.s32.totalorder %s271, %s272
    %p284 = scmp.eq.s32.totalorder %s31, 3
    %p285 = por %p283, %p284
    %p287 = scmp.ne.s32.totalorder %s272, %s286
    %p288 = scmp.eq.s32.totalorder %s31, 0
    %p289 = por %p287, %p288
    %s291 = sadd.s32 %s290, 1
    %p294 = scmp.eq.s32.totalorder %s25, 3
    %p295 = scmp.ne.s32.totalorder %s290, %s292
    %p296 = scmp.eq.s32.totalorder %s25, 0
    %p297 = por %p295, %p296
    %p298 = scmp.ne.s32.totalorder %s290, %s292
    %p299 = scmp.eq.s32.totalorder %s30, 3
    %p300 = por %p298, %p299
    %p301 = scmp.ne.s32.totalorder %s292, %s293
    %p302 = scmp.eq.s32.totalorder %s30, 0
    %p303 = por %p301, %p302
    %p304 = scmp.ne.s32.totalorder %s292, %s293
    %p305 = scmp.eq.s32.totalorder %s31, 3
    %p306 = por %p304, %p305
    %p308 = scmp.ne.s32.totalorder %s293, %s307
    %p309 = scmp.eq.s32.totalorder %s31, 0
    %p310 = por %p308, %p309
    %s312 = sadd.s32 %s311, 1
    %p315 = scmp.eq.s32.totalorder %s25, 3
    %p316 = scmp.ne.s32.totalorder %s311, %s313
    %p317 = scmp.eq.s32.totalorder %s25, 0
    %p318 = por %p316, %p317
    %p319 = scmp.ne.s32.totalorder %s311, %s313
    %p320 = scmp.eq.s32.totalorder %s30, 3
    %p321 = por %p319, %p320
    %p322 = scmp.ne.s32.totalorder %s313, %s314
    %p323 = scmp.eq.s32.totalorder %s30, 0
    %p324 = por %p322, %p323
    %p325 = scmp.ne.s32.totalorder %s313, %s314
    %p326 = scmp.eq.s32.totalorder %s31, 3
    %p327 = por %p325, %p326
    %p329 = scmp.ne.s32.totalorder %s314, %s328
    %p330 = scmp.eq.s32.totalorder %s31, 0
    %p331 = por %p329, %p330
    %s333 = sadd.s32 %s332, 1
    %p336 = scmp.eq.s32.totalorder %s25, 3
    %p337 = scmp.ne.s32.totalorder %s332, %s334
    %p338 = scmp.eq.s32.totalorder %s25, 0
    %p339 = por %p337, %p338
    %p340 = scmp.ne.s32.totalorder %s332, %s334
    %p341 = scmp.eq.s32.totalorder %s30, 3
    %p342 = por %p340, %p341
    %p343 = scmp.ne.s32.totalorder %s334, %s335
    %p344 = scmp.eq.s32.totalorder %s30, 0
    %p345 = por %p343, %p344
    %p346 = scmp.ne.s32.totalorder %s334, %s335
    %p347 = scmp.eq.s32.totalorder %s31, 3
    %p348 = por %p346, %p347
    %p350 = scmp.ne.s32.totalorder %s335, %s349
    %p351 = scmp.eq.s32.totalorder %s31, 0
    %p352 = por %p350, %p351
    %s354 = sadd.s32 %s353, 1
    %p357 = scmp.eq.s32.totalorder %s25, 3
    %p358 = scmp.ne.s32.totalorder %s353, %s355
    %p359 = scmp.eq.s32.totalorder %s25, 0
    %p360 = por %p358, %p359
    %p361 = scmp.ne.s32.totalorder %s353, %s355
    %p362 = scmp.eq.s32.totalorder %s30, 3
    %p363 = por %p361, %p362
    %p364 = scmp.ne.s32.totalorder %s355, %s356
    %p365 = scmp.eq.s32.totalorder %s30, 0
    %p366 = por %p364, %p365
    %p367 = scmp.ne.s32.totalorder %s355, %s356
    %p368 = scmp.eq.s32.totalorder %s31, 3
    %p369 = por %p367, %p368
    %p371 = scmp.ne.s32.totalorder %s356, %s370
    %p372 = scmp.eq.s32.totalorder %s31, 0
    %p373 = por %p371, %p372
    %s375 = sadd.s32 %s374, 1
    %p378 = scmp.eq.s32.totalorder %s25, 3
    %p379 = scmp.ne.s32.totalorder %s374, %s376
    %p380 = scmp.eq.s32.totalorder %s25, 0
    %p381 = por %p379, %p380
    %p382 = scmp.ne.s32.totalorder %s374, %s376
    %p383 = scmp.eq.s32.totalorder %s30, 3
    %p384 = por %p382, %p383
    %p385 = scmp.ne.s32.totalorder %s376, %s377
    %p386 = scmp.eq.s32.totalorder %s30, 0
    %p387 = por %p385, %p386
    %p388 = scmp.ne.s32.totalorder %s376, %s377
    %p389 = scmp.eq.s32.totalorder %s31, 3
    %p390 = por %p388, %p389
    %p392 = scmp.ne.s32.totalorder %s377, %s391
    %p393 = scmp.eq.s32.totalorder %s31, 0
    %p394 = por %p392, %p393
    %s395 = ssub.s32 %s25, %s32
    %p396 = scmp.eq.s32.totalorder %s395, 0
    %s398 = sadd.s32 %s397, 1
    %s399 = scalar_select %p396, %s397, %s398
    %p402 = pneg %p396
    %p403 = scmp.eq.s32.totalorder %s25, 3
    %p404 = por %p402, %p403
    %p405 = scmp.ne.s32.totalorder %s397, %s400
    %p406 = scmp.eq.s32.totalorder %s25, 0
    %p407 = por %p405, %p406
    %p408 = scmp.ne.s32.totalorder %s397, %s400
    %p409 = scmp.eq.s32.totalorder %s30, 3
    %p410 = por %p408, %p409
    %p411 = scmp.ne.s32.totalorder %s400, %s401
    %p412 = scmp.eq.s32.totalorder %s30, 0
    %p413 = por %p411, %p412
    %p414 = scmp.ne.s32.totalorder %s400, %s401
    %p415 = scmp.eq.s32.totalorder %s31, 3
    %p416 = por %p414, %p415
    %p418 = scmp.ne.s32.totalorder %s401, %s417
    %p419 = scmp.eq.s32.totalorder %s31, 0
    %p420 = por %p418, %p419
    %s421 = ssub.s32 %s25, %s32
    %p422 = scmp.eq.s32.totalorder %s421, 0
    %s424 = sadd.s32 %s423, 1
    %s425 = scalar_select %p422, %s423, %s424
    %p428 = pneg %p422
    %p429 = scmp.eq.s32.totalorder %s25, 3
    %p430 = por %p428, %p429
    %p431 = scmp.ne.s32.totalorder %s423, %s426
    %p432 = scmp.eq.s32.totalorder %s25, 0
    %p433 = por %p431, %p432
    %p434 = scmp.ne.s32.totalorder %s423, %s426
    %p435 = scmp.eq.s32.totalorder %s30, 3
    %p436 = por %p434, %p435
    %p437 = scmp.ne.s32.totalorder %s426, %s427
    %p438 = scmp.eq.s32.totalorder %s30, 0
    %p439 = por %p437, %p438
    %p440 = scmp.ne.s32.totalorder %s426, %s427
    %p441 = scmp.eq.s32.totalorder %s31, 3
    %p442 = por %p440, %p441
    %p444 = scmp.ne.s32.totalorder %s427, %s443
    %p445 = scmp.eq.s32.totalorder %s31, 0
    %p446 = por %p444, %p445
    %p447 = scmp.le.s32.totalorder 1, %s25
    %p448 = scmp.lt.s32.totalorder %s25, 5
    %p449 = pnand %p447, %p448
    %p450 = pneg %p449
    // Predicated region
    $region9: #{autoencoder_forward.1} parent=5 // pred_check
      _
    $region10: #{autoencoder_forward.1} parent=5 // pred_check_branch
      %452 = sbr.rel (%p449) target = $region12
    $region11: #{autoencoder_forward.1} parent=5 // pred_region
      %s453 = ssub.s32 %s25, 1
      // Predicated region
      $region13: #{autoencoder_forward.1} parent=11 // pred_check
        %p454 = pneg %p72
      $region14: #{autoencoder_forward.1} parent=11 // pred_check_branch
        %456 = sbr.rel (%p454) target = $region16
      $region15: #{autoencoder_forward.1} parent=11 // pred_region
        _
      $region16: #{autoencoder_forward.1} parent=11 // pred_fallthru
        _
      // Predicated region
      $region17: #{autoencoder_forward.1} parent=11 // pred_check
        %p457 = pneg %p93
      $region18: #{autoencoder_forward.1} parent=11 // pred_check_branch
        %459 = sbr.rel (%p457) target = $region20
      $region19: #{autoencoder_forward.1} parent=11 // pred_region
        _
      $region20: #{autoencoder_forward.1} parent=11 // pred_fallthru
        _
      // Predicated region
      $region21: #{autoencoder_forward.1} parent=11 // pred_check
        %p460 = pneg %p114
      $region22: #{autoencoder_forward.1} parent=11 // pred_check_branch
        %462 = sbr.rel (%p460) target = $region24
      $region23: #{autoencoder_forward.1} parent=11 // pred_region
        _
      $region24: #{autoencoder_forward.1} parent=11 // pred_fallthru
        _
      // Predicated region
      $region25: #{autoencoder_forward.1} parent=11 // pred_check
        %p463 = pneg %p135
      $region26: #{autoencoder_forward.1} parent=11 // pred_check_branch
        %465 = sbr.rel (%p463) target = $region28
      $region27: #{autoencoder_forward.1} parent=11 // pred_region
        _
      $region28: #{autoencoder_forward.1} parent=11 // pred_fallthru
        _
      // Predicated region
      $region29: #{autoencoder_forward.1} parent=11 // pred_check
        %p466 = pneg %p156
      $region30: #{autoencoder_forward.1} parent=11 // pred_check_branch
        %468 = sbr.rel (%p466) target = $region32
      $region31: #{autoencoder_forward.1} parent=11 // pred_region
        _
      $region32: #{autoencoder_forward.1} parent=11 // pred_fallthru
        _
      // Predicated region
      $region33: #{autoencoder_forward.1} parent=11 // pred_check
        %p469 = pneg %p177
      $region34: #{autoencoder_forward.1} parent=11 // pred_check_branch
        %471 = sbr.rel (%p469) target = $region36
      $region35: #{autoencoder_forward.1} parent=11 // pred_region
        _
      $region36: #{autoencoder_forward.1} parent=11 // pred_fallthru
        _
      // Predicated region
      $region37: #{autoencoder_forward.1} parent=11 // pred_check
        %p472 = pneg %p198
      $region38: #{autoencoder_forward.1} parent=11 // pred_check_branch
        %474 = sbr.rel (%p472) target = $region40
      $region39: #{autoencoder_forward.1} parent=11 // pred_region
        _
      $region40: #{autoencoder_forward.1} parent=11 // pred_fallthru
        _
      // Predicated region
      $region41: #{autoencoder_forward.1} parent=11 // pred_check
        %p475 = pneg %p219
      $region42: #{autoencoder_forward.1} parent=11 // pred_check_branch
        %477 = sbr.rel (%p475) target = $region44
      $region43: #{autoencoder_forward.1} parent=11 // pred_region
        _
      $region44: #{autoencoder_forward.1} parent=11 // pred_fallthru
        _
      // Predicated region
      $region45: #{autoencoder_forward.1} parent=11 // pred_check
        %p478 = pneg %p240
      $region46: #{autoencoder_forward.1} parent=11 // pred_check_branch
        %480 = sbr.rel (%p478) target = $region48
      $region47: #{autoencoder_forward.1} parent=11 // pred_region
        _
      $region48: #{autoencoder_forward.1} parent=11 // pred_fallthru
        _
      // Predicated region
      $region49: #{autoencoder_forward.1} parent=11 // pred_check
        %p481 = pneg %p261
      $region50: #{autoencoder_forward.1} parent=11 // pred_check_branch
        %483 = sbr.rel (%p481) target = $region52
      $region51: #{autoencoder_forward.1} parent=11 // pred_region
        _
      $region52: #{autoencoder_forward.1} parent=11 // pred_fallthru
        _
      // Predicated region
      $region53: #{autoencoder_forward.1} parent=11 // pred_check
        %p484 = pneg %p282
      $region54: #{autoencoder_forward.1} parent=11 // pred_check_branch
        %486 = sbr.rel (%p484) target = $region56
      $region55: #{autoencoder_forward.1} parent=11 // pred_region
        _
      $region56: #{autoencoder_forward.1} parent=11 // pred_fallthru
        _
      // Predicated region
      $region57: #{autoencoder_forward.1} parent=11 // pred_check
        %p487 = pneg %p303
      $region58: #{autoencoder_forward.1} parent=11 // pred_check_branch
        %489 = sbr.rel (%p487) target = $region60
      $region59: #{autoencoder_forward.1} parent=11 // pred_region
        _
      $region60: #{autoencoder_forward.1} parent=11 // pred_fallthru
        _
      // Predicated region
      $region61: #{autoencoder_forward.1} parent=11 // pred_check
        %p490 = pneg %p324
      $region62: #{autoencoder_forward.1} parent=11 // pred_check_branch
        %492 = sbr.rel (%p490) target = $region64
      $region63: #{autoencoder_forward.1} parent=11 // pred_region
        _
      $region64: #{autoencoder_forward.1} parent=11 // pred_fallthru
        _
      // Predicated region
      $region65: #{autoencoder_forward.1} parent=11 // pred_check
        %p493 = pneg %p345
      $region66: #{autoencoder_forward.1} parent=11 // pred_check_branch
        %495 = sbr.rel (%p493) target = $region68
      $region67: #{autoencoder_forward.1} parent=11 // pred_region
        _
      $region68: #{autoencoder_forward.1} parent=11 // pred_fallthru
        _
      // Predicated region
      $region69: #{autoencoder_forward.1} parent=11 // pred_check
        %p496 = pneg %p366
      $region70: #{autoencoder_forward.1} parent=11 // pred_check_branch
        %498 = sbr.rel (%p496) target = $region72
      $region71: #{autoencoder_forward.1} parent=11 // pred_region
        _
      $region72: #{autoencoder_forward.1} parent=11 // pred_fallthru
        _
      // Predicated region
      $region73: #{autoencoder_forward.1} parent=11 // pred_check
        %p499 = pneg %p387
      $region74: #{autoencoder_forward.1} parent=11 // pred_check_branch
        %501 = sbr.rel (%p499) target = $region76
      $region75: #{autoencoder_forward.1} parent=11 // pred_region
        _
      $region76: #{autoencoder_forward.1} parent=11 // pred_fallthru
        _
    $region12: #{autoencoder_forward.1} parent=5 // pred_fallthru
      _
    %p502 = scmp.lt.s32.totalorder %s25, 4
    // Predicated region
    $region77: #{autoencoder_forward.1} parent=5 // pred_check
      %p503 = pneg %p502
    $region78: #{autoencoder_forward.1} parent=5 // pred_check_branch
      %505 = sbr.rel (%p503) target = $region80
    $region79: #{autoencoder_forward.1} parent=5 // pred_region
      // Predicated region
      $region81: #{autoencoder_forward.1} parent=79 // pred_check
        %p506 = pneg %p45
      $region82: #{autoencoder_forward.1} parent=79 // pred_check_branch
        %508 = sbr.rel (%p506) target = $region84
      $region83: #{autoencoder_forward.1} parent=79 // pred_region
        %s509 = smul.u32 16, %s25
        %p510 = scmp.lt.s32.totalorder %s509, 63
        %s511 = scalar_select %p510, %s509, 63
        %s512 = smul.addr %s511, 7
        %s513 = smul.addr %s512, 4
        %s514 = scalar_lea.vmem %s0, %s513
        %s515 = smul.u32 16, %s25
      $region84: #{autoencoder_forward.1} parent=79 // pred_fallthru
        _
    $region80: #{autoencoder_forward.1} parent=5 // pred_fallthru
      _
    %p516 = scmp.le.s32.totalorder 1, %s25
    %p517 = scmp.lt.s32.totalorder %s25, 5
    %p518 = pnand %p516, %p517
    %p519 = pneg %p518
    // Predicated region
    $region85: #{autoencoder_forward.1} parent=5 // pred_check
      _
    $region86: #{autoencoder_forward.1} parent=5 // pred_check_branch
      %521 = sbr.rel (%p518) target = $region88
    $region87: #{autoencoder_forward.1} parent=5 // pred_region
      %s522 = ssub.s32 %s25, 1
      %s523 = smul.u32 16, %s30
      %p524 = scmp.lt.s32.totalorder %s523, 63
      %s525 = scalar_select %p524, %s523, 63
      %s526 = smul.addr %s525, 7
      %s527 = smul.addr %s526, 4
      %s528 = scalar_lea.vmem %s0, %s527
      %p529 = pneg %p51
      %p530 = pneg %p48
      %p531 = pneg %p72
      %p532 = pneg %p69
      %p533 = pneg %p93
      %p534 = pneg %p90
      %p535 = pneg %p114
      %p536 = pneg %p111
      %p537 = pneg %p135
      %p538 = pneg %p132
      %p539 = pneg %p156
      %p540 = pneg %p153
      %p541 = pneg %p177
      %p542 = pneg %p174
      %p543 = pneg %p198
      %p544 = pneg %p195
      %p545 = pneg %p219
      %p546 = pneg %p216
      %p547 = pneg %p240
      %p548 = pneg %p237
      %p549 = pneg %p261
      %p550 = pneg %p258
      %p551 = pneg %p282
      %p552 = pneg %p279
      %p553 = pneg %p303
      %p554 = pneg %p300
      %p555 = pneg %p324
      %p556 = pneg %p321
      %p557 = pneg %p345
      %p558 = pneg %p342
      %p559 = pneg %p366
      %p560 = pneg %p363
      %p561 = pneg %p387
      %p562 = pneg %p384
      %p563 = pneg %p413
      %p564 = pneg %p410
      %s565 = smul.u32 16, %s30
      %p566 = scmp.lt.s32.totalorder %s565, 63
      %s567 = scalar_select %p566, %s565, 63
      %s568 = smul.addr %s567, 8
      %s569 = scalar_lea.vmem %s17, %s568
      %p570 = pneg %p439
      %p571 = pneg %p436
      %s572 = smul.u32 16, %s30
      %p573 = scmp.lt.s32.totalorder %s572, 63
      %s574 = scalar_select %p573, %s572, 63
      %s575 = smul.addr %s574, 7
      %s576 = smul.addr %s575, 8
      %s577 = scalar_lea.vmem %s18, %s576
      %s578 = smul.u32 16, %s30
      %p579 = scmp.lt.s32.totalorder %s578, 63
      %s580 = scalar_select %p579, %s578, 63
      %s581 = smul.addr %s580, 7
      %s582 = smul.addr %s581, 4
      %s583 = scalar_lea.vmem %s0, %s582
      %s584 = smul.u32 16, %s30
      %s585 = smul.u32 16, %s30
      %p586 = scmp.lt.s32.totalorder %s585, 63
      %s587 = scalar_select %p586, %s585, 63
      %s588 = smul.addr %s587, 8
      %s589 = scalar_lea.vmem %s17, %s588
      %s590 = smul.u32 16, %s30
      %s591 = smul.u32 16, %s30
      %p592 = scmp.lt.s32.totalorder %s591, 63
      %s593 = scalar_select %p592, %s591, 63
      %s594 = smul.addr %s593, 7
      %s595 = smul.addr %s594, 8
      %s596 = scalar_lea.vmem %s18, %s595
      %s597 = smul.u32 16, %s30
      %v599 = vld [vmem:[%s583] sm:$0xff]
      %v600 = vld [vmem:[%s583 + $0x8] sm:$0xff]
      %v601 = vld [vmem:[%s583 + $0x10] sm:$0xff]
      %v602 = vld [vmem:[%s583 + $0x18] sm:$0xf]
      %v603 = vld [vmem:[%s583 + $0x1c] sm:$0xff]
      %v604 = vld [vmem:[%s583 + $0x24] sm:$0xff]
      %v605 = vld [vmem:[%s583 + $0x2c] sm:$0xff]
      %v606 = vld [vmem:[%s583 + $0x34] sm:$0xf]
      %v607 = vld [vmem:[%s583 + $0x38] sm:$0xff]
      %v608 = vld [vmem:[%s583 + $0x40] sm:$0xff]
      %v609 = vld [vmem:[%s583 + $0x48] sm:$0xff]
      %v610 = vld [vmem:[%s583 + $0x50] sm:$0xf]
      %v611 = vld [vmem:[%s583 + $0x54] sm:$0xff]
      %v612 = vld [vmem:[%s583 + $0x5c] sm:$0xff]
      %v613 = vld [vmem:[%s583 + $0x64] sm:$0xff]
      %v614 = vld [vmem:[%s583 + $0x6c] sm:$0xf]
      %v615 = vld [vmem:[%s583 + $0x70] sm:$0xff]
      %v616 = vld [vmem:[%s583 + $0x78] sm:$0xff]
      %v617 = vld [vmem:[%s583 + $0x80] sm:$0xff]
      %v618 = vld [vmem:[%s583 + $0x88] sm:$0xf]
      %v619 = vld [vmem:[%s583 + $0x8c] sm:$0xff]
      %v620 = vld [vmem:[%s583 + $0x94] sm:$0xff]
      %v621 = vld [vmem:[%s583 + $0x9c] sm:$0xff]
      %v622 = vld [vmem:[%s583 + $0xa4] sm:$0xf]
      %v623 = vld [vmem:[%s583 + $0xa8] sm:$0xff]
      %v624 = vld [vmem:[%s583 + $0xb0] sm:$0xff]
      %v625 = vld [vmem:[%s583 + $0xb8] sm:$0xff]
      %v626 = vld [vmem:[%s583 + $0xc0] sm:$0xf]
      %v627 = vld [vmem:[%s583 + $0xc4] sm:$0xff]
      %v628 = vld [vmem:[%s583 + $0xcc] sm:$0xff]
      %v629 = vld [vmem:[%s583 + $0xd4] sm:$0xff]
      %v630 = vld [vmem:[%s583 + $0xdc] sm:$0xf]
      %v631 = vld [vmem:[%s583 + $0xe0] sm:$0xff]
      %v632 = vld [vmem:[%s583 + $0xe8] sm:$0xff]
      %v633 = vld [vmem:[%s583 + $0xf0] sm:$0xff]
      %v634 = vld [vmem:[%s583 + $0xf8] sm:$0xf]
      %v635 = vld [vmem:[%s583 + $0xfc] sm:$0xff]
      %v636 = vld [vmem:[%s583 + $0x104] sm:$0xff]
      %v637 = vld [vmem:[%s583 + $0x10c] sm:$0xff]
      %v638 = vld [vmem:[%s583 + $0x114] sm:$0xf]
      %v639 = vld [vmem:[%s583 + $0x118] sm:$0xff]
      %v640 = vld [vmem:[%s583 + $0x120] sm:$0xff]
      %v641 = vld [vmem:[%s583 + $0x128] sm:$0xff]
      %v642 = vld [vmem:[%s583 + $0x130] sm:$0xf]
      %v643 = vld [vmem:[%s583 + $0x134] sm:$0xff]
      %v644 = vld [vmem:[%s583 + $0x13c] sm:$0xff]
      %v645 = vld [vmem:[%s583 + $0x144] sm:$0xff]
      %v646 = vld [vmem:[%s583 + $0x14c] sm:$0xf]
      %v647 = vld [vmem:[%s583 + $0x150] sm:$0xff]
      %v648 = vld [vmem:[%s583 + $0x158] sm:$0xff]
      %v649 = vld [vmem:[%s583 + $0x160] sm:$0xff]
      %v650 = vld [vmem:[%s583 + $0x168] sm:$0xf]
      %v651 = vld [vmem:[%s583 + $0x16c] sm:$0xff]
      %v652 = vld [vmem:[%s583 + $0x174] sm:$0xff]
      %v653 = vld [vmem:[%s583 + $0x17c] sm:$0xff]
      %v654 = vld [vmem:[%s583 + $0x184] sm:$0xf]
      %v655 = vld [vmem:[%s583 + $0x188] sm:$0xff]
      %v656 = vld [vmem:[%s583 + $0x190] sm:$0xff]
      %v657 = vld [vmem:[%s583 + $0x198] sm:$0xff]
      %v658 = vld [vmem:[%s583 + $0x1a0] sm:$0xf]
      %v659 = vld [vmem:[%s583 + $0x1a4] sm:$0xff]
      %v660 = vld [vmem:[%s583 + $0x1ac] sm:$0xff]
      %v661 = vld [vmem:[%s583 + $0x1b4] sm:$0xff]
      %v662 = vld [vmem:[%s583 + $0x1bc] sm:$0xf]
      %v663 = vld [vmem:[%s1] sm:$0xf]
      %v664 = vld [vmem:[%s1 + $0x4] sm:$0xf]
      %v665 = vld [vmem:[%s1 + $0x8] sm:$0xf]
      %v666 = vld [vmem:[%s1 + $0xc] sm:$0xf]
      %v667 = vld [vmem:[%s1 + $0x10] sm:$0xf]
      %v668 = vld [vmem:[%s1 + $0x14] sm:$0xf]
      %v669 = vld [vmem:[%s1 + $0x18] sm:$0xf]
      %v670 = vld [vmem:[%s1 + $0x1c] sm:$0xf]
      %v671 = vld [vmem:[%s1 + $0x20] sm:$0xf]
      %v672 = vld [vmem:[%s1 + $0x24] sm:$0xf]
      %v673 = vld [vmem:[%s1 + $0x28] sm:$0xf]
      %v674 = vld [vmem:[%s1 + $0x2c] sm:$0xf]
      %v675 = vld [vmem:[%s1 + $0x30] sm:$0xf]
      %v676 = vld [vmem:[%s1 + $0x34] sm:$0xf]
      %v677 = vld [vmem:[%s1 + $0x38] sm:$0xf]
      %v678 = vld [vmem:[%s1 + $0x3c] sm:$0xf]
      %v679 = vld [vmem:[%s1 + $0x40] sm:$0xf]
      %v680 = vld [vmem:[%s1 + $0x44] sm:$0xf]
      %v681 = vld [vmem:[%s1 + $0x48] sm:$0xf]
      %v682 = vld [vmem:[%s1 + $0x4c] sm:$0xf]
      %v683 = vld [vmem:[%s1 + $0x50] sm:$0xf]
      %v684 = vld [vmem:[%s1 + $0x54] sm:$0xf]
      %v685 = vld [vmem:[%s1 + $0x58] sm:$0xf]
      %v686 = vld [vmem:[%s1 + $0x5c] sm:$0xf]
      %v687 = vld [vmem:[%s1 + $0x60] sm:$0xf]
      %v688 = vld [vmem:[%s1 + $0x64] sm:$0xf]
      %v689 = vld [vmem:[%s1 + $0x68] sm:$0xf]
      %v690 = vld [vmem:[%s1 + $0x6c] sm:$0xf]
      %v691 = vld [vmem:[%s1 + $0x70] sm:$0xf]
      %v692 = vld [vmem:[%s1 + $0x74] sm:$0xf]
      %v693 = vld [vmem:[%s1 + $0x78] sm:$0xf]
      %v694 = vld [vmem:[%s1 + $0x7c] sm:$0xf]
      %v695 = vld [vmem:[%s1 + $0x80] sm:$0xf]
      %v696 = vld [vmem:[%s1 + $0x84] sm:$0xf]
      %v697 = vld [vmem:[%s1 + $0x88] sm:$0xf]
      %v698 = vld [vmem:[%s1 + $0x8c] sm:$0xf]
      %v699 = vld [vmem:[%s1 + $0x90] sm:$0xf]
      %v700 = vld [vmem:[%s1 + $0x94] sm:$0xf]
      %v701 = vld [vmem:[%s1 + $0x98] sm:$0xf]
      %v702 = vld [vmem:[%s1 + $0x9c] sm:$0xf]
      %v703 = vld [vmem:[%s1 + $0xa0] sm:$0xf]
      %v704 = vld [vmem:[%s1 + $0xa4] sm:$0xf]
      %v705 = vld [vmem:[%s1 + $0xa8] sm:$0xf]
      %v706 = vld [vmem:[%s1 + $0xac] sm:$0xf]
      %v707 = vld [vmem:[%s1 + $0xb0] sm:$0xf]
      %v708 = vld [vmem:[%s1 + $0xb4] sm:$0xf]
      %v709 = vld [vmem:[%s1 + $0xb8] sm:$0xf]
      %v710 = vld [vmem:[%s1 + $0xbc] sm:$0xf]
      %v711 = vld [vmem:[%s1 + $0xc0] sm:$0xf]
      %v712 = vld [vmem:[%s1 + $0xc4] sm:$0xf]
      %v713 = vld [vmem:[%s1 + $0xc8] sm:$0xf]
      %v714 = vld [vmem:[%s1 + $0xcc] sm:$0xf]
      %v715 = vld [vmem:[%s1 + $0xd0] sm:$0xf]
      %v716 = vld [vmem:[%s1 + $0xd4] sm:$0xf]
      %v717 = vld [vmem:[%s1 + $0xd8] sm:$0xf]
      %v718 = vld [vmem:[%s1 + $0xdc] sm:$0xf]
      %v719 = vld [vmem:[%s1 + $0xe0] sm:$0xf]
      %v720 = vld [vmem:[%s1 + $0xe4] sm:$0xf]
      %v721 = vld [vmem:[%s1 + $0xe8] sm:$0xf]
      %v722 = vld [vmem:[%s1 + $0xec] sm:$0xf]
      %v723 = vld [vmem:[%s1 + $0xf0] sm:$0xf]
      %v724 = vld [vmem:[%s1 + $0xf4] sm:$0xf]
      %v725 = vld [vmem:[%s1 + $0xf8] sm:$0xf]
      %v726 = vld [vmem:[%s1 + $0xfc] sm:$0xf]
      %v727 = vld [vmem:[%s1 + $0x100] sm:$0xf]
      %v728 = vld [vmem:[%s1 + $0x104] sm:$0xf]
      %v729 = vld [vmem:[%s1 + $0x108] sm:$0xf]
      %v730 = vld [vmem:[%s1 + $0x10c] sm:$0xf]
      %v731 = vld [vmem:[%s1 + $0x110] sm:$0xf]
      %v732 = vld [vmem:[%s1 + $0x114] sm:$0xf]
      %v733 = vld [vmem:[%s1 + $0x118] sm:$0xf]
      %v734 = vld [vmem:[%s1 + $0x11c] sm:$0xf]
      %v735 = vld [vmem:[%s1 + $0x120] sm:$0xf]
      %v736 = vld [vmem:[%s1 + $0x124] sm:$0xf]
      %v737 = vld [vmem:[%s1 + $0x128] sm:$0xf]
      %v738 = vld [vmem:[%s1 + $0x12c] sm:$0xf]
      %v739 = vld [vmem:[%s1 + $0x130] sm:$0xf]
      %v740 = vld [vmem:[%s1 + $0x134] sm:$0xf]
      %v741 = vld [vmem:[%s1 + $0x138] sm:$0xf]
      %v742 = vld [vmem:[%s1 + $0x13c] sm:$0xf]
      %v743 = vld [vmem:[%s1 + $0x140] sm:$0xf]
      %v744 = vld [vmem:[%s1 + $0x144] sm:$0xf]
      %v745 = vld [vmem:[%s1 + $0x148] sm:$0xf]
      %v746 = vld [vmem:[%s1 + $0x14c] sm:$0xf]
      %v747 = vld [vmem:[%s1 + $0x150] sm:$0xf]
      %v748 = vld [vmem:[%s1 + $0x154] sm:$0xf]
      %v749 = vld [vmem:[%s1 + $0x158] sm:$0xf]
      %v750 = vld [vmem:[%s1 + $0x15c] sm:$0xf]
      %v751 = vld [vmem:[%s1 + $0x160] sm:$0xf]
      %v752 = vld [vmem:[%s1 + $0x164] sm:$0xf]
      %v753 = vld [vmem:[%s1 + $0x168] sm:$0xf]
      %v754 = vld [vmem:[%s1 + $0x16c] sm:$0xf]
      %v755 = vld [vmem:[%s1 + $0x170] sm:$0xf]
      %v756 = vld [vmem:[%s1 + $0x174] sm:$0xf]
      %v757 = vld [vmem:[%s1 + $0x178] sm:$0xf]
      %v758 = vld [vmem:[%s1 + $0x17c] sm:$0xf]
      %v759 = vld [vmem:[%s1 + $0x180] sm:$0xf]
      %v760 = vld [vmem:[%s1 + $0x184] sm:$0xf]
      %v761 = vld [vmem:[%s2] sm:$0x1]
      %v763 = vperm.slane %v761, 0
      %v829 = vunpack.c.l.b16 %v599
      %v830 = vunpack.c.h.b16 %v599
      %v831 = vunpack.c.l.b16 %v600
      %v832 = vunpack.c.h.b16 %v600
      %v833 = vunpack.c.l.b16 %v601
      %v834 = vunpack.c.h.b16 %v601
      %v835 = vunpack.c.l.b16 %v602
      %v836 = vunpack.c.l.b16 %v603
      %v837 = vunpack.c.h.b16 %v603
      %v838 = vunpack.c.l.b16 %v604
      %v839 = vunpack.c.h.b16 %v604
      %v840 = vunpack.c.l.b16 %v605
      %v841 = vunpack.c.h.b16 %v605
      %v842 = vunpack.c.l.b16 %v606
      %v843 = vunpack.c.l.b16 %v607
      %v844 = vunpack.c.h.b16 %v607
      %v845 = vunpack.c.l.b16 %v608
      %v846 = vunpack.c.h.b16 %v608
      %v847 = vunpack.c.l.b16 %v609
      %v848 = vunpack.c.h.b16 %v609
      %v849 = vunpack.c.l.b16 %v610
      %v850 = vunpack.c.l.b16 %v611
      %v851 = vunpack.c.h.b16 %v611
      %v852 = vunpack.c.l.b16 %v612
      %v853 = vunpack.c.h.b16 %v612
      %v854 = vunpack.c.l.b16 %v613
      %v855 = vunpack.c.h.b16 %v613
      %v856 = vunpack.c.l.b16 %v614
      %v857 = vunpack.c.l.b16 %v615
      %v858 = vunpack.c.h.b16 %v615
      %v859 = vunpack.c.l.b16 %v616
      %v860 = vunpack.c.h.b16 %v616
      %v861 = vunpack.c.l.b16 %v617
      %v862 = vunpack.c.h.b16 %v617
      %v863 = vunpack.c.l.b16 %v618
      %v864 = vunpack.c.l.b16 %v619
      %v865 = vunpack.c.h.b16 %v619
      %v866 = vunpack.c.l.b16 %v620
      %v867 = vunpack.c.h.b16 %v620
      %v868 = vunpack.c.l.b16 %v621
      %v869 = vunpack.c.h.b16 %v621
      %v870 = vunpack.c.l.b16 %v622
      %v871 = vunpack.c.l.b16 %v623
      %v872 = vunpack.c.h.b16 %v623
      %v873 = vunpack.c.l.b16 %v624
      %v874 = vunpack.c.h.b16 %v624
      %v875 = vunpack.c.l.b16 %v625
      %v876 = vunpack.c.h.b16 %v625
      %v877 = vunpack.c.l.b16 %v626
      %v878 = vunpack.c.l.b16 %v627
      %v879 = vunpack.c.h.b16 %v627
      %v880 = vunpack.c.l.b16 %v628
      %v881 = vunpack.c.h.b16 %v628
      %v882 = vunpack.c.l.b16 %v629
      %v883 = vunpack.c.h.b16 %v629
      %v884 = vunpack.c.l.b16 %v630
      %v885 = vunpack.c.l.b16 %v631
      %v886 = vunpack.c.h.b16 %v631
      %v887 = vunpack.c.l.b16 %v632
      %v888 = vunpack.c.h.b16 %v632
      %v889 = vunpack.c.l.b16 %v633
      %v890 = vunpack.c.h.b16 %v633
      %v891 = vunpack.c.l.b16 %v634
      %v892 = vunpack.c.l.b16 %v635
      %v893 = vunpack.c.h.b16 %v635
      %v894 = vunpack.c.l.b16 %v636
      %v895 = vunpack.c.h.b16 %v636
      %v896 = vunpack.c.l.b16 %v637
      %v897 = vunpack.c.h.b16 %v637
      %v898 = vunpack.c.l.b16 %v638
      %v899 = vunpack.c.l.b16 %v639
      %v900 = vunpack.c.h.b16 %v639
      %v901 = vunpack.c.l.b16 %v640
      %v902 = vunpack.c.h.b16 %v640
      %v903 = vunpack.c.l.b16 %v641
      %v904 = vunpack.c.h.b16 %v641
      %v905 = vunpack.c.l.b16 %v642
      %v906 = vunpack.c.l.b16 %v643
      %v907 = vunpack.c.h.b16 %v643
      %v908 = vunpack.c.l.b16 %v644
      %v909 = vunpack.c.h.b16 %v644
      %v910 = vunpack.c.l.b16 %v645
      %v911 = vunpack.c.h.b16 %v645
      %v912 = vunpack.c.l.b16 %v646
      %v913 = vunpack.c.l.b16 %v647
      %v914 = vunpack.c.h.b16 %v647
      %v915 = vunpack.c.l.b16 %v648
      %v916 = vunpack.c.h.b16 %v648
      %v917 = vunpack.c.l.b16 %v649
      %v918 = vunpack.c.h.b16 %v649
      %v919 = vunpack.c.l.b16 %v650
      %v920 = vunpack.c.l.b16 %v651
      %v921 = vunpack.c.h.b16 %v651
      %v922 = vunpack.c.l.b16 %v652
      %v923 = vunpack.c.h.b16 %v652
      %v924 = vunpack.c.l.b16 %v653
      %v925 = vunpack.c.h.b16 %v653
      %v926 = vunpack.c.l.b16 %v654
      %v927 = vunpack.c.l.b16 %v655
      %v928 = vunpack.c.h.b16 %v655
      %v929 = vunpack.c.l.b16 %v656
      %v930 = vunpack.c.h.b16 %v656
      %v931 = vunpack.c.l.b16 %v657
      %v932 = vunpack.c.h.b16 %v657
      %v933 = vunpack.c.l.b16 %v658
      %v934 = vunpack.c.l.b16 %v659
      %v935 = vunpack.c.h.b16 %v659
      %v936 = vunpack.c.l.b16 %v660
      %v937 = vunpack.c.h.b16 %v660
      %v938 = vunpack.c.l.b16 %v661
      %v939 = vunpack.c.h.b16 %v661
      %v940 = vunpack.c.l.b16 %v662
      %v941 = vpack.c.b16 %v836, %v829
      %v942 = vpack.c.b16 %v837, %v830
      %v943 = vpack.c.b16 %v838, %v831
      %v944 = vpack.c.b16 %v839, %v832
      %v945 = vpack.c.b16 %v840, %v833
      %v946 = vpack.c.b16 %v841, %v834
      %v947 = vpack.c.b16 %v842, %v835
      %v948 = vpack.c.b16 %v850, %v843
      %v949 = vpack.c.b16 %v851, %v844
      %v950 = vpack.c.b16 %v852, %v845
      %v951 = vpack.c.b16 %v853, %v846
      %v952 = vpack.c.b16 %v854, %v847
      %v953 = vpack.c.b16 %v855, %v848
      %v954 = vpack.c.b16 %v856, %v849
      %v955 = vpack.c.b16 %v864, %v857
      %v956 = vpack.c.b16 %v865, %v858
      %v957 = vpack.c.b16 %v866, %v859
      %v958 = vpack.c.b16 %v867, %v860
      %v959 = vpack.c.b16 %v868, %v861
      %v960 = vpack.c.b16 %v869, %v862
      %v961 = vpack.c.b16 %v870, %v863
      %v962 = vpack.c.b16 %v878, %v871
      %v963 = vpack.c.b16 %v879, %v872
      %v964 = vpack.c.b16 %v880, %v873
      %v965 = vpack.c.b16 %v881, %v874
      %v966 = vpack.c.b16 %v882, %v875
      %v967 = vpack.c.b16 %v883, %v876
      %v968 = vpack.c.b16 %v884, %v877
      %v969 = vpack.c.b16 %v892, %v885
      %v970 = vpack.c.b16 %v893, %v886
      %v971 = vpack.c.b16 %v894, %v887
      %v972 = vpack.c.b16 %v895, %v888
      %v973 = vpack.c.b16 %v896, %v889
      %v974 = vpack.c.b16 %v897, %v890
      %v975 = vpack.c.b16 %v898, %v891
      %v976 = vpack.c.b16 %v906, %v899
      %v977 = vpack.c.b16 %v907, %v900
      %v978 = vpack.c.b16 %v908, %v901
      %v979 = vpack.c.b16 %v909, %v902
      %v980 = vpack.c.b16 %v910, %v903
      %v981 = vpack.c.b16 %v911, %v904
      %v982 = vpack.c.b16 %v912, %v905
      %v983 = vpack.c.b16 %v920, %v913
      %v984 = vpack.c.b16 %v921, %v914
      %v985 = vpack.c.b16 %v922, %v915
      %v986 = vpack.c.b16 %v923, %v916
      %v987 = vpack.c.b16 %v924, %v917
      %v988 = vpack.c.b16 %v925, %v918
      %v989 = vpack.c.b16 %v926, %v919
      %v990 = vpack.c.b16 %v934, %v927
      %v991 = vpack.c.b16 %v935, %v928
      %v992 = vpack.c.b16 %v936, %v929
      %v993 = vpack.c.b16 %v937, %v930
      %v994 = vpack.c.b16 %v938, %v931
      %v995 = vpack.c.b16 %v939, %v932
      %v996 = vpack.c.b16 %v940, %v933
      %v1143 = vunpack.c.l.b16 %v663
      %v1144 = vunpack.c.l.b16 %v664
      %v1145 = vunpack.c.l.b16 %v665
      %v1146 = vunpack.c.l.b16 %v666
      %v1147 = vunpack.c.l.b16 %v667
      %v1148 = vunpack.c.l.b16 %v668
      %v1149 = vunpack.c.l.b16 %v669
      %v1150 = vunpack.c.l.b16 %v670
      %v1151 = vunpack.c.l.b16 %v671
      %v1152 = vunpack.c.l.b16 %v672
      %v1153 = vunpack.c.l.b16 %v673
      %v1154 = vunpack.c.l.b16 %v674
      %v1155 = vunpack.c.l.b16 %v675
      %v1156 = vunpack.c.l.b16 %v676
      %v1157 = vunpack.c.l.b16 %v677
      %v1158 = vunpack.c.l.b16 %v678
      %v1159 = vunpack.c.l.b16 %v679
      %v1160 = vunpack.c.l.b16 %v680
      %v1161 = vunpack.c.l.b16 %v681
      %v1162 = vunpack.c.l.b16 %v682
      %v1163 = vunpack.c.l.b16 %v683
      %v1164 = vunpack.c.l.b16 %v684
      %v1165 = vunpack.c.l.b16 %v685
      %v1166 = vunpack.c.l.b16 %v686
      %v1167 = vunpack.c.l.b16 %v687
      %v1168 = vunpack.c.l.b16 %v688
      %v1169 = vunpack.c.l.b16 %v689
      %v1170 = vunpack.c.l.b16 %v690
      %v1171 = vunpack.c.l.b16 %v691
      %v1172 = vunpack.c.l.b16 %v692
      %v1173 = vunpack.c.l.b16 %v693
      %v1174 = vunpack.c.l.b16 %v694
      %v1175 = vunpack.c.l.b16 %v695
      %v1176 = vunpack.c.l.b16 %v696
      %v1177 = vunpack.c.l.b16 %v697
      %v1178 = vunpack.c.l.b16 %v698
      %v1179 = vunpack.c.l.b16 %v699
      %v1180 = vunpack.c.l.b16 %v700
      %v1181 = vunpack.c.l.b16 %v701
      %v1182 = vunpack.c.l.b16 %v702
      %v1183 = vunpack.c.l.b16 %v703
      %v1184 = vunpack.c.l.b16 %v704
      %v1185 = vunpack.c.l.b16 %v705
      %v1186 = vunpack.c.l.b16 %v706
      %v1187 = vunpack.c.l.b16 %v707
      %v1188 = vunpack.c.l.b16 %v708
      %v1189 = vunpack.c.l.b16 %v709
      %v1190 = vunpack.c.l.b16 %v710
      %v1191 = vunpack.c.l.b16 %v711
      %v1192 = vunpack.c.l.b16 %v712
      %v1193 = vunpack.c.l.b16 %v713
      %v1194 = vunpack.c.l.b16 %v714
      %v1195 = vunpack.c.l.b16 %v715
      %v1196 = vunpack.c.l.b16 %v716
      %v1197 = vunpack.c.l.b16 %v717
      %v1198 = vunpack.c.l.b16 %v718
      %v1199 = vunpack.c.l.b16 %v719
      %v1200 = vunpack.c.l.b16 %v720
      %v1201 = vunpack.c.l.b16 %v721
      %v1202 = vunpack.c.l.b16 %v722
      %v1203 = vunpack.c.l.b16 %v723
      %v1204 = vunpack.c.l.b16 %v724
      %v1205 = vunpack.c.l.b16 %v725
      %v1206 = vunpack.c.l.b16 %v726
      %v1207 = vunpack.c.l.b16 %v727
      %v1208 = vunpack.c.l.b16 %v728
      %v1209 = vunpack.c.l.b16 %v729
      %v1210 = vunpack.c.l.b16 %v730
      %v1211 = vunpack.c.l.b16 %v731
      %v1212 = vunpack.c.l.b16 %v732
      %v1213 = vunpack.c.l.b16 %v733
      %v1214 = vunpack.c.l.b16 %v734
      %v1215 = vunpack.c.l.b16 %v735
      %v1216 = vunpack.c.l.b16 %v736
      %v1217 = vunpack.c.l.b16 %v737
      %v1218 = vunpack.c.l.b16 %v738
      %v1219 = vunpack.c.l.b16 %v739
      %v1220 = vunpack.c.l.b16 %v740
      %v1221 = vunpack.c.l.b16 %v741
      %v1222 = vunpack.c.l.b16 %v742
      %v1223 = vunpack.c.l.b16 %v743
      %v1224 = vunpack.c.l.b16 %v744
      %v1225 = vunpack.c.l.b16 %v745
      %v1226 = vunpack.c.l.b16 %v746
      %v1227 = vunpack.c.l.b16 %v747
      %v1228 = vunpack.c.l.b16 %v748
      %v1229 = vunpack.c.l.b16 %v749
      %v1230 = vunpack.c.l.b16 %v750
      %v1231 = vunpack.c.l.b16 %v751
      %v1232 = vunpack.c.l.b16 %v752
      %v1233 = vunpack.c.l.b16 %v753
      %v1234 = vunpack.c.l.b16 %v754
      %v1235 = vunpack.c.l.b16 %v755
      %v1236 = vunpack.c.l.b16 %v756
      %v1237 = vunpack.c.l.b16 %v757
      %v1238 = vunpack.c.l.b16 %v758
      %v1239 = vunpack.c.l.b16 %v759
      %v1240 = vunpack.c.l.b16 %v760
      %v1241 = vpack.c.b16 %v1144, %v1143
      %v1242 = vpack.c.b16 %v1146, %v1145
      %v1243 = vpack.c.b16 %v1148, %v1147
      %v1244 = vpack.c.b16 %v1150, %v1149
      %v1245 = vpack.c.b16 %v1152, %v1151
      %v1246 = vpack.c.b16 %v1154, %v1153
      %v1247 = vpack.c.b16 %v1156, %v1155
      %v1248 = vpack.c.b16 %v1158, %v1157
      %v1249 = vpack.c.b16 %v1160, %v1159
      %v1250 = vpack.c.b16 %v1162, %v1161
      %v1251 = vpack.c.b16 %v1164, %v1163
      %v1252 = vpack.c.b16 %v1166, %v1165
      %v1253 = vpack.c.b16 %v1168, %v1167
      %v1254 = vpack.c.b16 %v1170, %v1169
      %v1255 = vpack.c.b16 %v1172, %v1171
      %v1256 = vpack.c.b16 %v1174, %v1173
      %v1257 = vpack.c.b16 %v1176, %v1175
      %v1258 = vpack.c.b16 %v1178, %v1177
      %v1259 = vpack.c.b16 %v1180, %v1179
      %v1260 = vpack.c.b16 %v1182, %v1181
      %v1261 = vpack.c.b16 %v1184, %v1183
      %v1262 = vpack.c.b16 %v1186, %v1185
      %v1263 = vpack.c.b16 %v1188, %v1187
      %v1264 = vpack.c.b16 %v1190, %v1189
      %v1265 = vpack.c.b16 %v1192, %v1191
      %v1266 = vpack.c.b16 %v1194, %v1193
      %v1267 = vpack.c.b16 %v1196, %v1195
      %v1268 = vpack.c.b16 %v1198, %v1197
      %v1269 = vpack.c.b16 %v1200, %v1199
      %v1270 = vpack.c.b16 %v1202, %v1201
      %v1271 = vpack.c.b16 %v1204, %v1203
      %v1272 = vpack.c.b16 %v1206, %v1205
      %v1273 = vpack.c.b16 %v1208, %v1207
      %v1274 = vpack.c.b16 %v1210, %v1209
      %v1275 = vpack.c.b16 %v1212, %v1211
      %v1276 = vpack.c.b16 %v1214, %v1213
      %v1277 = vpack.c.b16 %v1216, %v1215
      %v1278 = vpack.c.b16 %v1218, %v1217
      %v1279 = vpack.c.b16 %v1220, %v1219
      %v1280 = vpack.c.b16 %v1222, %v1221
      %v1281 = vpack.c.b16 %v1224, %v1223
      %v1282 = vpack.c.b16 %v1226, %v1225
      %v1283 = vpack.c.b16 %v1228, %v1227
      %v1284 = vpack.c.b16 %v1230, %v1229
      %v1285 = vpack.c.b16 %v1232, %v1231
      %v1286 = vpack.c.b16 %v1234, %v1233
      %v1287 = vpack.c.b16 %v1236, %v1235
      %v1288 = vpack.c.b16 %v1238, %v1237
      %v1289 = vpack.c.b16 %v1240, %v1239
      %vm1339 = vcmask 130048
      %v1341 = vsel %vm1339, %v947, 0
      %v1344 = vsel %vm1339, %v954, 0
      %v1347 = vsel %vm1339, %v961, 0
      %v1350 = vsel %vm1339, %v968, 0
      %v1353 = vsel %vm1339, %v975, 0
      %v1356 = vsel %vm1339, %v982, 0
      %v1359 = vsel %vm1339, %v989, 0
      %v1362 = vsel %vm1339, %v996, 0
      %1364 = vmatpush.bf16.msra.mxu0 %v1248
      %1365 = vmatpush.bf16.msra.mxu0 %v1247
      %1366 = vmatpush.bf16.msra.mxu0 %v1246
      %1367 = vmatpush.bf16.msra.mxu0 %v1245
      %1368 = vmatpush.bf16.msra.mxu0 %v1244
      %1369 = vmatpush.bf16.msra.mxu0 %v1243
      %1370 = vmatpush.bf16.msra.mxu0 %v1242
      %1371 = vmatpush.bf16.msra.mxu0 %v1241
      %1372 = vmatmul.bf16.gmra.mxu0 %v941
      %v1373 = vpop.f32.mrf.mxu0
      %v1374 = vadd.f32 %v763, %v1373
      %v1375 = vpop.f32.mrf.mxu0
      %v1376 = vadd.f32 %v763, %v1375
      %1377 = vmatmul.bf16.gmra.mxu0 %v948
      %v1378 = vpop.f32.mrf.mxu0
      %v1379 = vadd.f32 %v763, %v1378
      %v1380 = vpop.f32.mrf.mxu0
      %v1381 = vadd.f32 %v763, %v1380
      %1382 = vmatmul.bf16.gmra.mxu0 %v955
      %v1383 = vpop.f32.mrf.mxu0
      %v1384 = vadd.f32 %v763, %v1383
      %v1385 = vpop.f32.mrf.mxu0
      %v1386 = vadd.f32 %v763, %v1385
      %1387 = vmatmul.bf16.gmra.mxu0 %v962
      %v1388 = vpop.f32.mrf.mxu0
      %v1389 = vadd.f32 %v763, %v1388
      %v1390 = vpop.f32.mrf.mxu0
      %v1391 = vadd.f32 %v763, %v1390
      %1392 = vmatmul.bf16.gmra.mxu0 %v969
      %v1393 = vpop.f32.mrf.mxu0
      %v1394 = vadd.f32 %v763, %v1393
      %v1395 = vpop.f32.mrf.mxu0
      %v1396 = vadd.f32 %v763, %v1395
      %1397 = vmatmul.bf16.gmra.mxu0 %v976
      %v1398 = vpop.f32.mrf.mxu0
      %v1399 = vadd.f32 %v763, %v1398
      %v1400 = vpop.f32.mrf.mxu0
      %v1401 = vadd.f32 %v763, %v1400
      %1402 = vmatmul.bf16.gmra.mxu0 %v983
      %v1403 = vpop.f32.mrf.mxu0
      %v1404 = vadd.f32 %v763, %v1403
      %v1405 = vpop.f32.mrf.mxu0
      %v1406 = vadd.f32 %v763, %v1405
      %1407 = vmatmul.bf16.gmra.mxu0 %v990
      %v1408 = vpop.f32.mrf.mxu0
      %v1409 = vadd.f32 %v763, %v1408
      %v1410 = vpop.f32.mrf.mxu0
      %v1411 = vadd.f32 %v763, %v1410
      %1412 = vdwg.mxu0
      %1413 = vmatpush.bf16.msra.mxu0 %v1256
      %1414 = vmatpush.bf16.msra.mxu0 %v1255
      %1415 = vmatpush.bf16.msra.mxu0 %v1254
      %1416 = vmatpush.bf16.msra.mxu0 %v1253
      %1417 = vmatpush.bf16.msra.mxu0 %v1252
      %1418 = vmatpush.bf16.msra.mxu0 %v1251
      %1419 = vmatpush.bf16.msra.mxu0 %v1250
      %1420 = vmatpush.bf16.msra.mxu0 %v1249
      %1421 = vmatmul.bf16.gmra.mxu0 %v942
      %v1422 = vpop.f32.mrf.mxu0
      %v1423 = vadd.f32 %v1374, %v1422
      %v1424 = vpop.f32.mrf.mxu0
      %v1425 = vadd.f32 %v1376, %v1424
      %1426 = vmatmul.bf16.gmra.mxu0 %v949
      %v1427 = vpop.f32.mrf.mxu0
      %v1428 = vadd.f32 %v1379, %v1427
      %v1429 = vpop.f32.mrf.mxu0
      %v1430 = vadd.f32 %v1381, %v1429
      %1431 = vmatmul.bf16.gmra.mxu0 %v956
      %v1432 = vpop.f32.mrf.mxu0
      %v1433 = vadd.f32 %v1384, %v1432
      %v1434 = vpop.f32.mrf.mxu0
      %v1435 = vadd.f32 %v1386, %v1434
      %1436 = vmatmul.bf16.gmra.mxu0 %v963
      %v1437 = vpop.f32.mrf.mxu0
      %v1438 = vadd.f32 %v1389, %v1437
      %v1439 = vpop.f32.mrf.mxu0
      %v1440 = vadd.f32 %v1391, %v1439
      %1441 = vmatmul.bf16.gmra.mxu0 %v970
      %v1442 = vpop.f32.mrf.mxu0
      %v1443 = vadd.f32 %v1394, %v1442
      %v1444 = vpop.f32.mrf.mxu0
      %v1445 = vadd.f32 %v1396, %v1444
      %1446 = vmatmul.bf16.gmra.mxu0 %v977
      %v1447 = vpop.f32.mrf.mxu0
      %v1448 = vadd.f32 %v1399, %v1447
      %v1449 = vpop.f32.mrf.mxu0
      %v1450 = vadd.f32 %v1401, %v1449
      %1451 = vmatmul.bf16.gmra.mxu0 %v984
      %v1452 = vpop.f32.mrf.mxu0
      %v1453 = vadd.f32 %v1404, %v1452
      %v1454 = vpop.f32.mrf.mxu0
      %v1455 = vadd.f32 %v1406, %v1454
      %1456 = vmatmul.bf16.gmra.mxu0 %v991
      %v1457 = vpop.f32.mrf.mxu0
      %v1458 = vadd.f32 %v1409, %v1457
      %v1459 = vpop.f32.mrf.mxu0
      %v1460 = vadd.f32 %v1411, %v1459
      %1461 = vdwg.mxu0
      %1462 = vmatpush.bf16.msra.mxu0 %v1264
      %1463 = vmatpush.bf16.msra.mxu0 %v1263
      %1464 = vmatpush.bf16.msra.mxu0 %v1262
      %1465 = vmatpush.bf16.msra.mxu0 %v1261
      %1466 = vmatpush.bf16.msra.mxu0 %v1260
      %1467 = vmatpush.bf16.msra.mxu0 %v1259
      %1468 = vmatpush.bf16.msra.mxu0 %v1258
      %1469 = vmatpush.bf16.msra.mxu0 %v1257
      %1470 = vmatmul.bf16.gmra.mxu0 %v943
      %v1471 = vpop.f32.mrf.mxu0
      %v1472 = vadd.f32 %v1423, %v1471
      %v1473 = vpop.f32.mrf.mxu0
      %v1474 = vadd.f32 %v1425, %v1473
      %1475 = vmatmul.bf16.gmra.mxu0 %v950
      %v1476 = vpop.f32.mrf.mxu0
      %v1477 = vadd.f32 %v1428, %v1476
      %v1478 = vpop.f32.mrf.mxu0
      %v1479 = vadd.f32 %v1430, %v1478
      %1480 = vmatmul.bf16.gmra.mxu0 %v957
      %v1481 = vpop.f32.mrf.mxu0
      %v1482 = vadd.f32 %v1433, %v1481
      %v1483 = vpop.f32.mrf.mxu0
      %v1484 = vadd.f32 %v1435, %v1483
      %1485 = vmatmul.bf16.gmra.mxu0 %v964
      %v1486 = vpop.f32.mrf.mxu0
      %v1487 = vadd.f32 %v1438, %v1486
      %v1488 = vpop.f32.mrf.mxu0
      %v1489 = vadd.f32 %v1440, %v1488
      %1490 = vmatmul.bf16.gmra.mxu0 %v971
      %v1491 = vpop.f32.mrf.mxu0
      %v1492 = vadd.f32 %v1443, %v1491
      %v1493 = vpop.f32.mrf.mxu0
      %v1494 = vadd.f32 %v1445, %v1493
      %1495 = vmatmul.bf16.gmra.mxu0 %v978
      %v1496 = vpop.f32.mrf.mxu0
      %v1497 = vadd.f32 %v1448, %v1496
      %v1498 = vpop.f32.mrf.mxu0
      %v1499 = vadd.f32 %v1450, %v1498
      %1500 = vmatmul.bf16.gmra.mxu0 %v985
      %v1501 = vpop.f32.mrf.mxu0
      %v1502 = vadd.f32 %v1453, %v1501
      %v1503 = vpop.f32.mrf.mxu0
      %v1504 = vadd.f32 %v1455, %v1503
      %1505 = vmatmul.bf16.gmra.mxu0 %v992
      %v1506 = vpop.f32.mrf.mxu0
      %v1507 = vadd.f32 %v1458, %v1506
      %v1508 = vpop.f32.mrf.mxu0
      %v1509 = vadd.f32 %v1460, %v1508
      %1510 = vdwg.mxu0
      %1511 = vmatpush.bf16.msra.mxu0 %v1272
      %1512 = vmatpush.bf16.msra.mxu0 %v1271
      %1513 = vmatpush.bf16.msra.mxu0 %v1270
      %1514 = vmatpush.bf16.msra.mxu0 %v1269
      %1515 = vmatpush.bf16.msra.mxu0 %v1268
      %1516 = vmatpush.bf16.msra.mxu0 %v1267
      %1517 = vmatpush.bf16.msra.mxu0 %v1266
      %1518 = vmatpush.bf16.msra.mxu0 %v1265
      %1519 = vmatmul.bf16.gmra.mxu0 %v944
      %v1520 = vpop.f32.mrf.mxu0
      %v1521 = vadd.f32 %v1472, %v1520
      %v1522 = vpop.f32.mrf.mxu0
      %v1523 = vadd.f32 %v1474, %v1522
      %1524 = vmatmul.bf16.gmra.mxu0 %v951
      %v1525 = vpop.f32.mrf.mxu0
      %v1526 = vadd.f32 %v1477, %v1525
      %v1527 = vpop.f32.mrf.mxu0
      %v1528 = vadd.f32 %v1479, %v1527
      %1529 = vmatmul.bf16.gmra.mxu0 %v958
      %v1530 = vpop.f32.mrf.mxu0
      %v1531 = vadd.f32 %v1482, %v1530
      %v1532 = vpop.f32.mrf.mxu0
      %v1533 = vadd.f32 %v1484, %v1532
      %1534 = vmatmul.bf16.gmra.mxu0 %v965
      %v1535 = vpop.f32.mrf.mxu0
      %v1536 = vadd.f32 %v1487, %v1535
      %v1537 = vpop.f32.mrf.mxu0
      %v1538 = vadd.f32 %v1489, %v1537
      %1539 = vmatmul.bf16.gmra.mxu0 %v972
      %v1540 = vpop.f32.mrf.mxu0
      %v1541 = vadd.f32 %v1492, %v1540
      %v1542 = vpop.f32.mrf.mxu0
      %v1543 = vadd.f32 %v1494, %v1542
      %1544 = vmatmul.bf16.gmra.mxu0 %v979
      %v1545 = vpop.f32.mrf.mxu0
      %v1546 = vadd.f32 %v1497, %v1545
      %v1547 = vpop.f32.mrf.mxu0
      %v1548 = vadd.f32 %v1499, %v1547
      %1549 = vmatmul.bf16.gmra.mxu0 %v986
      %v1550 = vpop.f32.mrf.mxu0
      %v1551 = vadd.f32 %v1502, %v1550
      %v1552 = vpop.f32.mrf.mxu0
      %v1553 = vadd.f32 %v1504, %v1552
      %1554 = vmatmul.bf16.gmra.mxu0 %v993
      %v1555 = vpop.f32.mrf.mxu0
      %v1556 = vadd.f32 %v1507, %v1555
      %v1557 = vpop.f32.mrf.mxu0
      %v1558 = vadd.f32 %v1509, %v1557
      %1559 = vdwg.mxu0
      %1560 = vmatpush.bf16.msra.mxu0 %v1280
      %1561 = vmatpush.bf16.msra.mxu0 %v1279
      %1562 = vmatpush.bf16.msra.mxu0 %v1278
      %1563 = vmatpush.bf16.msra.mxu0 %v1277
      %1564 = vmatpush.bf16.msra.mxu0 %v1276
      %1565 = vmatpush.bf16.msra.mxu0 %v1275
      %1566 = vmatpush.bf16.msra.mxu0 %v1274
      %1567 = vmatpush.bf16.msra.mxu0 %v1273
      %1568 = vmatmul.bf16.gmra.mxu0 %v945
      %v1569 = vpop.f32.mrf.mxu0
      %v1570 = vadd.f32 %v1521, %v1569
      %v1571 = vpop.f32.mrf.mxu0
      %v1572 = vadd.f32 %v1523, %v1571
      %1573 = vmatmul.bf16.gmra.mxu0 %v952
      %v1574 = vpop.f32.mrf.mxu0
      %v1575 = vadd.f32 %v1526, %v1574
      %v1576 = vpop.f32.mrf.mxu0
      %v1577 = vadd.f32 %v1528, %v1576
      %1578 = vmatmul.bf16.gmra.mxu0 %v959
      %v1579 = vpop.f32.mrf.mxu0
      %v1580 = vadd.f32 %v1531, %v1579
      %v1581 = vpop.f32.mrf.mxu0
      %v1582 = vadd.f32 %v1533, %v1581
      %1583 = vmatmul.bf16.gmra.mxu0 %v966
      %v1584 = vpop.f32.mrf.mxu0
      %v1585 = vadd.f32 %v1536, %v1584
      %v1586 = vpop.f32.mrf.mxu0
      %v1587 = vadd.f32 %v1538, %v1586
      %1588 = vmatmul.bf16.gmra.mxu0 %v973
      %v1589 = vpop.f32.mrf.mxu0
      %v1590 = vadd.f32 %v1541, %v1589
      %v1591 = vpop.f32.mrf.mxu0
      %v1592 = vadd.f32 %v1543, %v1591
      %1593 = vmatmul.bf16.gmra.mxu0 %v980
      %v1594 = vpop.f32.mrf.mxu0
      %v1595 = vadd.f32 %v1546, %v1594
      %v1596 = vpop.f32.mrf.mxu0
      %v1597 = vadd.f32 %v1548, %v1596
      %1598 = vmatmul.bf16.gmra.mxu0 %v987
      %v1599 = vpop.f32.mrf.mxu0
      %v1600 = vadd.f32 %v1551, %v1599
      %v1601 = vpop.f32.mrf.mxu0
      %v1602 = vadd.f32 %v1553, %v1601
      %1603 = vmatmul.bf16.gmra.mxu0 %v994
      %v1604 = vpop.f32.mrf.mxu0
      %v1605 = vadd.f32 %v1556, %v1604
      %v1606 = vpop.f32.mrf.mxu0
      %v1607 = vadd.f32 %v1558, %v1606
      %1608 = vdwg.mxu0
      %1609 = vmatpush.bf16.msra.mxu0 %v1288
      %1610 = vmatpush.bf16.msra.mxu0 %v1287
      %1611 = vmatpush.bf16.msra.mxu0 %v1286
      %1612 = vmatpush.bf16.msra.mxu0 %v1285
      %1613 = vmatpush.bf16.msra.mxu0 %v1284
      %1614 = vmatpush.bf16.msra.mxu0 %v1283
      %1615 = vmatpush.bf16.msra.mxu0 %v1282
      %1616 = vmatpush.bf16.msra.mxu0 %v1281
      %1617 = vmatmul.bf16.gmra.mxu0 %v946
      %v1618 = vpop.f32.mrf.mxu0
      %v1619 = vadd.f32 %v1570, %v1618
      %v1620 = vpop.f32.mrf.mxu0
      %v1621 = vadd.f32 %v1572, %v1620
      %1622 = vmatmul.bf16.gmra.mxu0 %v953
      %v1623 = vpop.f32.mrf.mxu0
      %v1624 = vadd.f32 %v1575, %v1623
      %v1625 = vpop.f32.mrf.mxu0
      %v1626 = vadd.f32 %v1577, %v1625
      %1627 = vmatmul.bf16.gmra.mxu0 %v960
      %v1628 = vpop.f32.mrf.mxu0
      %v1629 = vadd.f32 %v1580, %v1628
      %v1630 = vpop.f32.mrf.mxu0
      %v1631 = vadd.f32 %v1582, %v1630
      %1632 = vmatmul.bf16.gmra.mxu0 %v967
      %v1633 = vpop.f32.mrf.mxu0
      %v1634 = vadd.f32 %v1585, %v1633
      %v1635 = vpop.f32.mrf.mxu0
      %v1636 = vadd.f32 %v1587, %v1635
      %1637 = vmatmul.bf16.gmra.mxu0 %v974
      %v1638 = vpop.f32.mrf.mxu0
      %v1639 = vadd.f32 %v1590, %v1638
      %v1640 = vpop.f32.mrf.mxu0
      %v1641 = vadd.f32 %v1592, %v1640
      %1642 = vmatmul.bf16.gmra.mxu0 %v981
      %v1643 = vpop.f32.mrf.mxu0
      %v1644 = vadd.f32 %v1595, %v1643
      %v1645 = vpop.f32.mrf.mxu0
      %v1646 = vadd.f32 %v1597, %v1645
      %1647 = vmatmul.bf16.gmra.mxu0 %v988
      %v1648 = vpop.f32.mrf.mxu0
      %v1649 = vadd.f32 %v1600, %v1648
      %v1650 = vpop.f32.mrf.mxu0
      %v1651 = vadd.f32 %v1602, %v1650
      %1652 = vmatmul.bf16.gmra.mxu0 %v995
      %v1653 = vpop.f32.mrf.mxu0
      %v1654 = vadd.f32 %v1605, %v1653
      %v1655 = vpop.f32.mrf.mxu0
      %v1656 = vadd.f32 %v1607, %v1655
      %1657 = vdwg.mxu0
      %1658 = vmatpush.bf16.msra.mxu0 0
      %1659 = vmatpush.bf16.msra.mxu0 0
      %1660 = vmatpush.bf16.msra.mxu0 0
      %1661 = vmatpush.bf16.msra.mxu0 0
      %1662 = vmatpush.bf16.msra.mxu0 0
      %1663 = vmatpush.bf16.msra.mxu0 0
      %1664 = vmatpush.bf16.msra.mxu0 0
      %1665 = vmatpush.bf16.msra.mxu0 %v1289
      %1666 = vmatmul.bf16.gmra.mxu0 %v1341
      %v1667 = vpop.f32.mrf.mxu0
      %v1668 = vadd.f32 %v1619, %v1667
      %v1669 = vpop.f32.mrf.mxu0
      %v1670 = vadd.f32 %v1621, %v1669
      %1671 = vmatmul.bf16.gmra.mxu0 %v1344
      %v1672 = vpop.f32.mrf.mxu0
      %v1673 = vadd.f32 %v1624, %v1672
      %v1674 = vpop.f32.mrf.mxu0
      %v1675 = vadd.f32 %v1626, %v1674
      %1676 = vmatmul.bf16.gmra.mxu0 %v1347
      %v1677 = vpop.f32.mrf.mxu0
      %v1678 = vadd.f32 %v1629, %v1677
      %v1679 = vpop.f32.mrf.mxu0
      %v1680 = vadd.f32 %v1631, %v1679
      %1681 = vmatmul.bf16.gmra.mxu0 %v1350
      %v1682 = vpop.f32.mrf.mxu0
      %v1683 = vadd.f32 %v1634, %v1682
      %v1684 = vpop.f32.mrf.mxu0
      %v1685 = vadd.f32 %v1636, %v1684
      %1686 = vmatmul.bf16.gmra.mxu0 %v1353
      %v1687 = vpop.f32.mrf.mxu0
      %v1688 = vadd.f32 %v1639, %v1687
      %v1689 = vpop.f32.mrf.mxu0
      %v1690 = vadd.f32 %v1641, %v1689
      %1691 = vmatmul.bf16.gmra.mxu0 %v1356
      %v1692 = vpop.f32.mrf.mxu0
      %v1693 = vadd.f32 %v1644, %v1692
      %v1694 = vpop.f32.mrf.mxu0
      %v1695 = vadd.f32 %v1646, %v1694
      %1696 = vmatmul.bf16.gmra.mxu0 %v1359
      %v1697 = vpop.f32.mrf.mxu0
      %v1698 = vadd.f32 %v1649, %v1697
      %v1699 = vpop.f32.mrf.mxu0
      %v1700 = vadd.f32 %v1651, %v1699
      %1701 = vmatmul.bf16.gmra.mxu0 %v1362
      %v1702 = vpop.f32.mrf.mxu0
      %v1703 = vadd.f32 %v1654, %v1702
      %v1704 = vpop.f32.mrf.mxu0
      %v1705 = vadd.f32 %v1656, %v1704
      %1706 = vdwg.mxu0
      %v1707 = vpack.c.bf16 %v1670, %v1668
      %v1708 = vpack.c.bf16 %v1675, %v1673
      %v1709 = vpack.c.bf16 %v1680, %v1678
      %v1710 = vpack.c.bf16 %v1685, %v1683
      %v1711 = vpack.c.bf16 %v1690, %v1688
      %v1712 = vpack.c.bf16 %v1695, %v1693
      %v1713 = vpack.c.bf16 %v1700, %v1698
      %v1714 = vpack.c.bf16 %v1705, %v1703
      %v1715 = vunpack.c.l.bf16 %v1707
      %v1716 = vunpack.c.h.bf16 %v1707
      %v1717 = vunpack.c.l.bf16 %v1708
      %v1718 = vunpack.c.h.bf16 %v1708
      %v1719 = vunpack.c.l.bf16 %v1709
      %v1720 = vunpack.c.h.bf16 %v1709
      %v1721 = vunpack.c.l.bf16 %v1710
      %v1722 = vunpack.c.h.bf16 %v1710
      %v1723 = vunpack.c.l.bf16 %v1711
      %v1724 = vunpack.c.h.bf16 %v1711
      %v1725 = vunpack.c.l.bf16 %v1712
      %v1726 = vunpack.c.h.bf16 %v1712
      %v1727 = vunpack.c.l.bf16 %v1713
      %v1728 = vunpack.c.h.bf16 %v1713
      %v1729 = vunpack.c.l.bf16 %v1714
      %v1730 = vunpack.c.h.bf16 %v1714
      %v1731 = vtanh.pop %v1715
      %v1732 = vtanh.pop %v1716
      %v1733 = vtanh.pop %v1717
      %v1734 = vtanh.pop %v1718
      %v1735 = vtanh.pop %v1719
      %v1736 = vtanh.pop %v1720
      %v1737 = vtanh.pop %v1721
      %v1738 = vtanh.pop %v1722
      %v1739 = vtanh.pop %v1723
      %v1740 = vtanh.pop %v1724
      %v1741 = vtanh.pop %v1725
      %v1742 = vtanh.pop %v1726
      %v1743 = vtanh.pop %v1727
      %v1744 = vtanh.pop %v1728
      %v1745 = vtanh.pop %v1729
      %v1746 = vtanh.pop %v1730
      %v1747 = vpack.c.bf16 %v1732, %v1731
      %v1748 = vpack.c.bf16 %v1734, %v1733
      %v1749 = vpack.c.bf16 %v1736, %v1735
      %v1750 = vpack.c.bf16 %v1738, %v1737
      %v1751 = vpack.c.bf16 %v1740, %v1739
      %v1752 = vpack.c.bf16 %v1742, %v1741
      %v1753 = vpack.c.bf16 %v1744, %v1743
      %v1754 = vpack.c.bf16 %v1746, %v1745
      %v1755 = vld [vmem:[%s3] sm:$0xf]
      %v1756 = vld [vmem:[%s3 + $0x4] sm:$0xf]
      %v1757 = vld [vmem:[%s3 + $0x8] sm:$0xf]
      %v1758 = vld [vmem:[%s3 + $0xc] sm:$0xf]
      %v1759 = vld [vmem:[%s3 + $0x10] sm:$0xf]
      %v1760 = vld [vmem:[%s3 + $0x14] sm:$0xf]
      %v1761 = vld [vmem:[%s3 + $0x18] sm:$0xf]
      %v1762 = vld [vmem:[%s3 + $0x1c] sm:$0xf]
      %v1763 = vld [vmem:[%s3 + $0x20] sm:$0xf]
      %v1764 = vld [vmem:[%s3 + $0x24] sm:$0xf]
      %v1765 = vld [vmem:[%s3 + $0x28] sm:$0xf]
      %v1766 = vld [vmem:[%s3 + $0x2c] sm:$0xf]
      %v1767 = vld [vmem:[%s3 + $0x30] sm:$0xf]
      %v1768 = vld [vmem:[%s3 + $0x34] sm:$0xf]
      %v1769 = vld [vmem:[%s3 + $0x38] sm:$0xf]
      %v1770 = vld [vmem:[%s3 + $0x3c] sm:$0xf]
      %v1771 = vld [vmem:[%s4] sm:$0x1]
      %v1773 = vperm.slane %v1771, 0
      %v1791 = vunpack.c.l.b16 %v1755
      %v1792 = vunpack.c.l.b16 %v1756
      %v1793 = vunpack.c.l.b16 %v1757
      %v1794 = vunpack.c.l.b16 %v1758
      %v1795 = vunpack.c.l.b16 %v1759
      %v1796 = vunpack.c.l.b16 %v1760
      %v1797 = vunpack.c.l.b16 %v1761
      %v1798 = vunpack.c.l.b16 %v1762
      %v1799 = vunpack.c.l.b16 %v1763
      %v1800 = vunpack.c.l.b16 %v1764
      %v1801 = vunpack.c.l.b16 %v1765
      %v1802 = vunpack.c.l.b16 %v1766
      %v1803 = vunpack.c.l.b16 %v1767
      %v1804 = vunpack.c.l.b16 %v1768
      %v1805 = vunpack.c.l.b16 %v1769
      %v1806 = vunpack.c.l.b16 %v1770
      %v1807 = vpack.c.b16 %v1792, %v1791
      %v1808 = vpack.c.b16 %v1794, %v1793
      %v1809 = vpack.c.b16 %v1796, %v1795
      %v1810 = vpack.c.b16 %v1798, %v1797
      %v1811 = vpack.c.b16 %v1800, %v1799
      %v1812 = vpack.c.b16 %v1802, %v1801
      %v1813 = vpack.c.b16 %v1804, %v1803
      %v1814 = vpack.c.b16 %v1806, %v1805
      %1823 = vmatpush.bf16.msra.mxu0 %v1814
      %1824 = vmatpush.bf16.msra.mxu0 %v1813
      %1825 = vmatpush.bf16.msra.mxu0 %v1812
      %1826 = vmatpush.bf16.msra.mxu0 %v1811
      %1827 = vmatpush.bf16.msra.mxu0 %v1810
      %1828 = vmatpush.bf16.msra.mxu0 %v1809
      %1829 = vmatpush.bf16.msra.mxu0 %v1808
      %1830 = vmatpush.bf16.msra.mxu0 %v1807
      %1831 = vmatmul.bf16.gmra.mxu0 %v1747
      %v1832 = vpop.f32.mrf.mxu0
      %v1833 = vadd.f32 %v1773, %v1832
      %v1834 = vpop.f32.mrf.mxu0
      %v1835 = vadd.f32 %v1773, %v1834
      %1836 = vmatmul.bf16.gmra.mxu0 %v1748
      %v1837 = vpop.f32.mrf.mxu0
      %v1838 = vadd.f32 %v1773, %v1837
      %v1839 = vpop.f32.mrf.mxu0
      %v1840 = vadd.f32 %v1773, %v1839
      %1841 = vmatmul.bf16.gmra.mxu0 %v1749
      %v1842 = vpop.f32.mrf.mxu0
      %v1843 = vadd.f32 %v1773, %v1842
      %v1844 = vpop.f32.mrf.mxu0
      %v1845 = vadd.f32 %v1773, %v1844
      %1846 = vmatmul.bf16.gmra.mxu0 %v1750
      %v1847 = vpop.f32.mrf.mxu0
      %v1848 = vadd.f32 %v1773, %v1847
      %v1849 = vpop.f32.mrf.mxu0
      %v1850 = vadd.f32 %v1773, %v1849
      %1851 = vmatmul.bf16.gmra.mxu0 %v1751
      %v1852 = vpop.f32.mrf.mxu0
      %v1853 = vadd.f32 %v1773, %v1852
      %v1854 = vpop.f32.mrf.mxu0
      %v1855 = vadd.f32 %v1773, %v1854
      %1856 = vmatmul.bf16.gmra.mxu0 %v1752
      %v1857 = vpop.f32.mrf.mxu0
      %v1858 = vadd.f32 %v1773, %v1857
      %v1859 = vpop.f32.mrf.mxu0
      %v1860 = vadd.f32 %v1773, %v1859
      %1861 = vmatmul.bf16.gmra.mxu0 %v1753
      %v1862 = vpop.f32.mrf.mxu0
      %v1863 = vadd.f32 %v1773, %v1862
      %v1864 = vpop.f32.mrf.mxu0
      %v1865 = vadd.f32 %v1773, %v1864
      %1866 = vmatmul.bf16.gmra.mxu0 %v1754
      %v1867 = vpop.f32.mrf.mxu0
      %v1868 = vadd.f32 %v1773, %v1867
      %v1869 = vpop.f32.mrf.mxu0
      %v1870 = vadd.f32 %v1773, %v1869
      %1871 = vdwg.mxu0
      %v1872 = vpack.c.bf16 %v1835, %v1833
      %v1873 = vpack.c.bf16 %v1840, %v1838
      %v1874 = vpack.c.bf16 %v1845, %v1843
      %v1875 = vpack.c.bf16 %v1850, %v1848
      %v1876 = vpack.c.bf16 %v1855, %v1853
      %v1877 = vpack.c.bf16 %v1860, %v1858
      %v1878 = vpack.c.bf16 %v1865, %v1863
      %v1879 = vpack.c.bf16 %v1870, %v1868
      %v1880 = vunpack.c.l.bf16 %v1872
      %v1881 = vunpack.c.h.bf16 %v1872
      %v1882 = vunpack.c.l.bf16 %v1873
      %v1883 = vunpack.c.h.bf16 %v1873
      %v1884 = vunpack.c.l.bf16 %v1874
      %v1885 = vunpack.c.h.bf16 %v1874
      %v1886 = vunpack.c.l.bf16 %v1875
      %v1887 = vunpack.c.h.bf16 %v1875
      %v1888 = vunpack.c.l.bf16 %v1876
      %v1889 = vunpack.c.h.bf16 %v1876
      %v1890 = vunpack.c.l.bf16 %v1877
      %v1891 = vunpack.c.h.bf16 %v1877
      %v1892 = vunpack.c.l.bf16 %v1878
      %v1893 = vunpack.c.h.bf16 %v1878
      %v1894 = vunpack.c.l.bf16 %v1879
      %v1895 = vunpack.c.h.bf16 %v1879
      %v1896 = vtanh.pop %v1880
      %v1897 = vtanh.pop %v1881
      %v1898 = vtanh.pop %v1882
      %v1899 = vtanh.pop %v1883
      %v1900 = vtanh.pop %v1884
      %v1901 = vtanh.pop %v1885
      %v1902 = vtanh.pop %v1886
      %v1903 = vtanh.pop %v1887
      %v1904 = vtanh.pop %v1888
      %v1905 = vtanh.pop %v1889
      %v1906 = vtanh.pop %v1890
      %v1907 = vtanh.pop %v1891
      %v1908 = vtanh.pop %v1892
      %v1909 = vtanh.pop %v1893
      %v1910 = vtanh.pop %v1894
      %v1911 = vtanh.pop %v1895
      %v1912 = vpack.c.bf16 %v1897, %v1896
      %v1913 = vpack.c.bf16 %v1899, %v1898
      %v1914 = vpack.c.bf16 %v1901, %v1900
      %v1915 = vpack.c.bf16 %v1903, %v1902
      %v1916 = vpack.c.bf16 %v1905, %v1904
      %v1917 = vpack.c.bf16 %v1907, %v1906
      %v1918 = vpack.c.bf16 %v1909, %v1908
      %v1919 = vpack.c.bf16 %v1911, %v1910
      %v1920 = vld [vmem:[%s5] sm:$0xf]
      %v1921 = vld [vmem:[%s5 + $0x4] sm:$0xf]
      %v1922 = vld [vmem:[%s5 + $0x8] sm:$0xf]
      %v1923 = vld [vmem:[%s5 + $0xc] sm:$0xf]
      %v1924 = vld [vmem:[%s5 + $0x10] sm:$0xf]
      %v1925 = vld [vmem:[%s5 + $0x14] sm:$0xf]
      %v1926 = vld [vmem:[%s5 + $0x18] sm:$0xf]
      %v1927 = vld [vmem:[%s5 + $0x1c] sm:$0xf]
      %v1928 = vld [vmem:[%s5 + $0x20] sm:$0xf]
      %v1929 = vld [vmem:[%s5 + $0x24] sm:$0xf]
      %v1930 = vld [vmem:[%s5 + $0x28] sm:$0xf]
      %v1931 = vld [vmem:[%s5 + $0x2c] sm:$0xf]
      %v1932 = vld [vmem:[%s5 + $0x30] sm:$0xf]
      %v1933 = vld [vmem:[%s5 + $0x34] sm:$0xf]
      %v1934 = vld [vmem:[%s5 + $0x38] sm:$0xf]
      %v1935 = vld [vmem:[%s5 + $0x3c] sm:$0xf]
      %v1936 = vld [vmem:[%s6] sm:$0x1]
      %v1938 = vperm.slane %v1936, 0
      %v1956 = vunpack.c.l.b16 %v1920
      %v1957 = vunpack.c.l.b16 %v1921
      %v1958 = vunpack.c.l.b16 %v1922
      %v1959 = vunpack.c.l.b16 %v1923
      %v1960 = vunpack.c.l.b16 %v1924
      %v1961 = vunpack.c.l.b16 %v1925
      %v1962 = vunpack.c.l.b16 %v1926
      %v1963 = vunpack.c.l.b16 %v1927
      %v1964 = vunpack.c.l.b16 %v1928
      %v1965 = vunpack.c.l.b16 %v1929
      %v1966 = vunpack.c.l.b16 %v1930
      %v1967 = vunpack.c.l.b16 %v1931
      %v1968 = vunpack.c.l.b16 %v1932
      %v1969 = vunpack.c.l.b16 %v1933
      %v1970 = vunpack.c.l.b16 %v1934
      %v1971 = vunpack.c.l.b16 %v1935
      %v1972 = vpack.c.b16 %v1957, %v1956
      %v1973 = vpack.c.b16 %v1959, %v1958
      %v1974 = vpack.c.b16 %v1961, %v1960
      %v1975 = vpack.c.b16 %v1963, %v1962
      %v1976 = vpack.c.b16 %v1965, %v1964
      %v1977 = vpack.c.b16 %v1967, %v1966
      %v1978 = vpack.c.b16 %v1969, %v1968
      %v1979 = vpack.c.b16 %v1971, %v1970
      %1988 = vmatpush.bf16.msra.mxu0 %v1979
      %1989 = vmatpush.bf16.msra.mxu0 %v1978
      %1990 = vmatpush.bf16.msra.mxu0 %v1977
      %1991 = vmatpush.bf16.msra.mxu0 %v1976
      %1992 = vmatpush.bf16.msra.mxu0 %v1975
      %1993 = vmatpush.bf16.msra.mxu0 %v1974
      %1994 = vmatpush.bf16.msra.mxu0 %v1973
      %1995 = vmatpush.bf16.msra.mxu0 %v1972
      %1996 = vmatmul.bf16.gmra.mxu0 %v1912
      %v1997 = vpop.f32.mrf.mxu0
      %v1998 = vadd.f32 %v1938, %v1997
      %v1999 = vpop.f32.mrf.mxu0
      %v2000 = vadd.f32 %v1938, %v1999
      %2001 = vmatmul.bf16.gmra.mxu0 %v1913
      %v2002 = vpop.f32.mrf.mxu0
      %v2003 = vadd.f32 %v1938, %v2002
      %v2004 = vpop.f32.mrf.mxu0
      %v2005 = vadd.f32 %v1938, %v2004
      %2006 = vmatmul.bf16.gmra.mxu0 %v1914
      %v2007 = vpop.f32.mrf.mxu0
      %v2008 = vadd.f32 %v1938, %v2007
      %v2009 = vpop.f32.mrf.mxu0
      %v2010 = vadd.f32 %v1938, %v2009
      %2011 = vmatmul.bf16.gmra.mxu0 %v1915
      %v2012 = vpop.f32.mrf.mxu0
      %v2013 = vadd.f32 %v1938, %v2012
      %v2014 = vpop.f32.mrf.mxu0
      %v2015 = vadd.f32 %v1938, %v2014
      %2016 = vmatmul.bf16.gmra.mxu0 %v1916
      %v2017 = vpop.f32.mrf.mxu0
      %v2018 = vadd.f32 %v1938, %v2017
      %v2019 = vpop.f32.mrf.mxu0
      %v2020 = vadd.f32 %v1938, %v2019
      %2021 = vmatmul.bf16.gmra.mxu0 %v1917
      %v2022 = vpop.f32.mrf.mxu0
      %v2023 = vadd.f32 %v1938, %v2022
      %v2024 = vpop.f32.mrf.mxu0
      %v2025 = vadd.f32 %v1938, %v2024
      %2026 = vmatmul.bf16.gmra.mxu0 %v1918
      %v2027 = vpop.f32.mrf.mxu0
      %v2028 = vadd.f32 %v1938, %v2027
      %v2029 = vpop.f32.mrf.mxu0
      %v2030 = vadd.f32 %v1938, %v2029
      %2031 = vmatmul.bf16.gmra.mxu0 %v1919
      %v2032 = vpop.f32.mrf.mxu0
      %v2033 = vadd.f32 %v1938, %v2032
      %v2034 = vpop.f32.mrf.mxu0
      %v2035 = vadd.f32 %v1938, %v2034
      %2036 = vdwg.mxu0
      %v2037 = vpack.c.bf16 %v2000, %v1998
      %v2038 = vpack.c.bf16 %v2005, %v2003
      %v2039 = vpack.c.bf16 %v2010, %v2008
      %v2040 = vpack.c.bf16 %v2015, %v2013
      %v2041 = vpack.c.bf16 %v2020, %v2018
      %v2042 = vpack.c.bf16 %v2025, %v2023
      %v2043 = vpack.c.bf16 %v2030, %v2028
      %v2044 = vpack.c.bf16 %v2035, %v2033
      %v2045 = vunpack.c.l.bf16 %v2037
      %v2046 = vunpack.c.h.bf16 %v2037
      %v2047 = vunpack.c.l.bf16 %v2038
      %v2048 = vunpack.c.h.bf16 %v2038
      %v2049 = vunpack.c.l.bf16 %v2039
      %v2050 = vunpack.c.h.bf16 %v2039
      %v2051 = vunpack.c.l.bf16 %v2040
      %v2052 = vunpack.c.h.bf16 %v2040
      %v2053 = vunpack.c.l.bf16 %v2041
      %v2054 = vunpack.c.h.bf16 %v2041
      %v2055 = vunpack.c.l.bf16 %v2042
      %v2056 = vunpack.c.h.bf16 %v2042
      %v2057 = vunpack.c.l.bf16 %v2043
      %v2058 = vunpack.c.h.bf16 %v2043
      %v2059 = vunpack.c.l.bf16 %v2044
      %v2060 = vunpack.c.h.bf16 %v2044
      %v2061 = vtanh.pop %v2045
      %v2062 = vtanh.pop %v2046
      %v2063 = vtanh.pop %v2047
      %v2064 = vtanh.pop %v2048
      %v2065 = vtanh.pop %v2049
      %v2066 = vtanh.pop %v2050
      %v2067 = vtanh.pop %v2051
      %v2068 = vtanh.pop %v2052
      %v2069 = vtanh.pop %v2053
      %v2070 = vtanh.pop %v2054
      %v2071 = vtanh.pop %v2055
      %v2072 = vtanh.pop %v2056
      %v2073 = vtanh.pop %v2057
      %v2074 = vtanh.pop %v2058
      %v2075 = vtanh.pop %v2059
      %v2076 = vtanh.pop %v2060
      %v2077 = vpack.c.bf16 %v2062, %v2061
      %v2078 = vpack.c.bf16 %v2064, %v2063
      %v2079 = vpack.c.bf16 %v2066, %v2065
      %v2080 = vpack.c.bf16 %v2068, %v2067
      %v2081 = vpack.c.bf16 %v2070, %v2069
      %v2082 = vpack.c.bf16 %v2072, %v2071
      %v2083 = vpack.c.bf16 %v2074, %v2073
      %v2084 = vpack.c.bf16 %v2076, %v2075
      %v2085 = vld [vmem:[%s7] sm:$0xf]
      %v2086 = vld [vmem:[%s7 + $0x4] sm:$0xf]
      %v2087 = vld [vmem:[%s7 + $0x8] sm:$0xf]
      %v2088 = vld [vmem:[%s7 + $0xc] sm:$0xf]
      %v2089 = vld [vmem:[%s7 + $0x10] sm:$0xf]
      %v2090 = vld [vmem:[%s7 + $0x14] sm:$0xf]
      %v2091 = vld [vmem:[%s7 + $0x18] sm:$0xf]
      %v2092 = vld [vmem:[%s7 + $0x1c] sm:$0xf]
      %v2093 = vld [vmem:[%s7 + $0x20] sm:$0xf]
      %v2094 = vld [vmem:[%s7 + $0x24] sm:$0xf]
      %v2095 = vld [vmem:[%s7 + $0x28] sm:$0xf]
      %v2096 = vld [vmem:[%s7 + $0x2c] sm:$0xf]
      %v2097 = vld [vmem:[%s7 + $0x30] sm:$0xf]
      %v2098 = vld [vmem:[%s7 + $0x34] sm:$0xf]
      %v2099 = vld [vmem:[%s7 + $0x38] sm:$0xf]
      %v2100 = vld [vmem:[%s7 + $0x3c] sm:$0xf]
      %v2101 = vld [vmem:[%s8] sm:$0x1]
      %v2103 = vperm.slane %v2101, 0
      %v2121 = vunpack.c.l.b16 %v2085
      %v2122 = vunpack.c.l.b16 %v2086
      %v2123 = vunpack.c.l.b16 %v2087
      %v2124 = vunpack.c.l.b16 %v2088
      %v2125 = vunpack.c.l.b16 %v2089
      %v2126 = vunpack.c.l.b16 %v2090
      %v2127 = vunpack.c.l.b16 %v2091
      %v2128 = vunpack.c.l.b16 %v2092
      %v2129 = vunpack.c.l.b16 %v2093
      %v2130 = vunpack.c.l.b16 %v2094
      %v2131 = vunpack.c.l.b16 %v2095
      %v2132 = vunpack.c.l.b16 %v2096
      %v2133 = vunpack.c.l.b16 %v2097
      %v2134 = vunpack.c.l.b16 %v2098
      %v2135 = vunpack.c.l.b16 %v2099
      %v2136 = vunpack.c.l.b16 %v2100
      %v2137 = vpack.c.b16 %v2122, %v2121
      %v2138 = vpack.c.b16 %v2124, %v2123
      %v2139 = vpack.c.b16 %v2126, %v2125
      %v2140 = vpack.c.b16 %v2128, %v2127
      %v2141 = vpack.c.b16 %v2130, %v2129
      %v2142 = vpack.c.b16 %v2132, %v2131
      %v2143 = vpack.c.b16 %v2134, %v2133
      %v2144 = vpack.c.b16 %v2136, %v2135
      %2153 = vmatpush.bf16.msra.mxu0 %v2144
      %2154 = vmatpush.bf16.msra.mxu0 %v2143
      %2155 = vmatpush.bf16.msra.mxu0 %v2142
      %2156 = vmatpush.bf16.msra.mxu0 %v2141
      %2157 = vmatpush.bf16.msra.mxu0 %v2140
      %2158 = vmatpush.bf16.msra.mxu0 %v2139
      %2159 = vmatpush.bf16.msra.mxu0 %v2138
      %2160 = vmatpush.bf16.msra.mxu0 %v2137
      %2161 = vmatmul.bf16.gmra.mxu0 %v2077
      %v2162 = vpop.f32.mrf.mxu0
      %v2163 = vadd.f32 %v2103, %v2162
      %v2164 = vpop.f32.mrf.mxu0
      %v2165 = vadd.f32 %v2103, %v2164
      %2166 = vmatmul.bf16.gmra.mxu0 %v2078
      %v2167 = vpop.f32.mrf.mxu0
      %v2168 = vadd.f32 %v2103, %v2167
      %v2169 = vpop.f32.mrf.mxu0
      %v2170 = vadd.f32 %v2103, %v2169
      %2171 = vmatmul.bf16.gmra.mxu0 %v2079
      %v2172 = vpop.f32.mrf.mxu0
      %v2173 = vadd.f32 %v2103, %v2172
      %v2174 = vpop.f32.mrf.mxu0
      %v2175 = vadd.f32 %v2103, %v2174
      %2176 = vmatmul.bf16.gmra.mxu0 %v2080
      %v2177 = vpop.f32.mrf.mxu0
      %v2178 = vadd.f32 %v2103, %v2177
      %v2179 = vpop.f32.mrf.mxu0
      %v2180 = vadd.f32 %v2103, %v2179
      %2181 = vmatmul.bf16.gmra.mxu0 %v2081
      %v2182 = vpop.f32.mrf.mxu0
      %v2183 = vadd.f32 %v2103, %v2182
      %v2184 = vpop.f32.mrf.mxu0
      %v2185 = vadd.f32 %v2103, %v2184
      %2186 = vmatmul.bf16.gmra.mxu0 %v2082
      %v2187 = vpop.f32.mrf.mxu0
      %v2188 = vadd.f32 %v2103, %v2187
      %v2189 = vpop.f32.mrf.mxu0
      %v2190 = vadd.f32 %v2103, %v2189
      %2191 = vmatmul.bf16.gmra.mxu0 %v2083
      %v2192 = vpop.f32.mrf.mxu0
      %v2193 = vadd.f32 %v2103, %v2192
      %v2194 = vpop.f32.mrf.mxu0
      %v2195 = vadd.f32 %v2103, %v2194
      %2196 = vmatmul.bf16.gmra.mxu0 %v2084
      %v2197 = vpop.f32.mrf.mxu0
      %v2198 = vadd.f32 %v2103, %v2197
      %v2199 = vpop.f32.mrf.mxu0
      %v2200 = vadd.f32 %v2103, %v2199
      %2201 = vdwg.mxu0
      %2202 = vst.msk [vmem:[%s589] sm:$0xff] %vm1339, %v2163
      %2203 = vst.msk [vmem:[%s589 + $0x8] sm:$0xff] %vm1339, %v2165
      %2204 = vst.msk [vmem:[%s589 + $0x10] sm:$0xff] %vm1339, %v2168
      %2205 = vst.msk [vmem:[%s589 + $0x18] sm:$0xff] %vm1339, %v2170
      %2206 = vst.msk [vmem:[%s589 + $0x20] sm:$0xff] %vm1339, %v2173
      %2207 = vst.msk [vmem:[%s589 + $0x28] sm:$0xff] %vm1339, %v2175
      %2208 = vst.msk [vmem:[%s589 + $0x30] sm:$0xff] %vm1339, %v2178
      %2209 = vst.msk [vmem:[%s589 + $0x38] sm:$0xff] %vm1339, %v2180
      %2210 = vst.msk [vmem:[%s589 + $0x40] sm:$0xff] %vm1339, %v2183
      %2211 = vst.msk [vmem:[%s589 + $0x48] sm:$0xff] %vm1339, %v2185
      %2212 = vst.msk [vmem:[%s589 + $0x50] sm:$0xff] %vm1339, %v2188
      %2213 = vst.msk [vmem:[%s589 + $0x58] sm:$0xff] %vm1339, %v2190
      %2214 = vst.msk [vmem:[%s589 + $0x60] sm:$0xff] %vm1339, %v2193
      %2215 = vst.msk [vmem:[%s589 + $0x68] sm:$0xff] %vm1339, %v2195
      %2216 = vst.msk [vmem:[%s589 + $0x70] sm:$0xff] %vm1339, %v2198
      %2217 = vst.msk [vmem:[%s589 + $0x78] sm:$0xff] %vm1339, %v2200
      %v2218 = vpack.c.bf16 %v2165, %v2163
      %v2219 = vpack.c.bf16 %v2170, %v2168
      %v2220 = vpack.c.bf16 %v2175, %v2173
      %v2221 = vpack.c.bf16 %v2180, %v2178
      %v2222 = vpack.c.bf16 %v2185, %v2183
      %v2223 = vpack.c.bf16 %v2190, %v2188
      %v2224 = vpack.c.bf16 %v2195, %v2193
      %v2225 = vpack.c.bf16 %v2200, %v2198
      %v2226 = vld [vmem:[%s9] sm:$0xf]
      %v2227 = vld [vmem:[%s9 + $0x4] sm:$0xf]
      %v2228 = vld [vmem:[%s10] sm:$0x1]
      %v2230 = vperm.slane %v2228, 0
      %v2234 = vunpack.c.l.b16 %v2226
      %v2235 = vunpack.c.l.b16 %v2227
      %v2236 = vpack.c.b16 %v2235, %v2234
      %v2239 = vsel %vm1339, %v2218, 0
      %v2242 = vsel %vm1339, %v2219, 0
      %v2245 = vsel %vm1339, %v2220, 0
      %v2248 = vsel %vm1339, %v2221, 0
      %v2251 = vsel %vm1339, %v2222, 0
      %v2254 = vsel %vm1339, %v2223, 0
      %v2257 = vsel %vm1339, %v2224, 0
      %v2260 = vsel %vm1339, %v2225, 0
      %2262 = vmatpush.bf16.msra.mxu0 0
      %2263 = vmatpush.bf16.msra.mxu0 0
      %2264 = vmatpush.bf16.msra.mxu0 0
      %2265 = vmatpush.bf16.msra.mxu0 0
      %2266 = vmatpush.bf16.msra.mxu0 0
      %2267 = vmatpush.bf16.msra.mxu0 0
      %2268 = vmatpush.bf16.msra.mxu0 0
      %2269 = vmatpush.bf16.msra.mxu0 %v2236
      %2270 = vmatmul.bf16.gmra.mxu0 %v2239
      %v2271 = vpop.f32.mrf.mxu0
      %v2272 = vadd.f32 %v2230, %v2271
      %v2273 = vpop.f32.mrf.mxu0
      %v2274 = vadd.f32 %v2230, %v2273
      %2275 = vmatmul.bf16.gmra.mxu0 %v2242
      %v2276 = vpop.f32.mrf.mxu0
      %v2277 = vadd.f32 %v2230, %v2276
      %v2278 = vpop.f32.mrf.mxu0
      %v2279 = vadd.f32 %v2230, %v2278
      %2280 = vmatmul.bf16.gmra.mxu0 %v2245
      %v2281 = vpop.f32.mrf.mxu0
      %v2282 = vadd.f32 %v2230, %v2281
      %v2283 = vpop.f32.mrf.mxu0
      %v2284 = vadd.f32 %v2230, %v2283
      %2285 = vmatmul.bf16.gmra.mxu0 %v2248
      %v2286 = vpop.f32.mrf.mxu0
      %v2287 = vadd.f32 %v2230, %v2286
      %v2288 = vpop.f32.mrf.mxu0
      %v2289 = vadd.f32 %v2230, %v2288
      %2290 = vmatmul.bf16.gmra.mxu0 %v2251
      %v2291 = vpop.f32.mrf.mxu0
      %v2292 = vadd.f32 %v2230, %v2291
      %v2293 = vpop.f32.mrf.mxu0
      %v2294 = vadd.f32 %v2230, %v2293
      %2295 = vmatmul.bf16.gmra.mxu0 %v2254
      %v2296 = vpop.f32.mrf.mxu0
      %v2297 = vadd.f32 %v2230, %v2296
      %v2298 = vpop.f32.mrf.mxu0
      %v2299 = vadd.f32 %v2230, %v2298
      %2300 = vmatmul.bf16.gmra.mxu0 %v2257
      %v2301 = vpop.f32.mrf.mxu0
      %v2302 = vadd.f32 %v2230, %v2301
      %v2303 = vpop.f32.mrf.mxu0
      %v2304 = vadd.f32 %v2230, %v2303
      %2305 = vmatmul.bf16.gmra.mxu0 %v2260
      %v2306 = vpop.f32.mrf.mxu0
      %v2307 = vadd.f32 %v2230, %v2306
      %v2308 = vpop.f32.mrf.mxu0
      %v2309 = vadd.f32 %v2230, %v2308
      %2310 = vdwg.mxu0
      %v2311 = vpack.c.bf16 %v2274, %v2272
      %v2312 = vpack.c.bf16 %v2279, %v2277
      %v2313 = vpack.c.bf16 %v2284, %v2282
      %v2314 = vpack.c.bf16 %v2289, %v2287
      %v2315 = vpack.c.bf16 %v2294, %v2292
      %v2316 = vpack.c.bf16 %v2299, %v2297
      %v2317 = vpack.c.bf16 %v2304, %v2302
      %v2318 = vpack.c.bf16 %v2309, %v2307
      %v2319 = vunpack.c.l.bf16 %v2311
      %v2320 = vunpack.c.h.bf16 %v2311
      %v2321 = vunpack.c.l.bf16 %v2312
      %v2322 = vunpack.c.h.bf16 %v2312
      %v2323 = vunpack.c.l.bf16 %v2313
      %v2324 = vunpack.c.h.bf16 %v2313
      %v2325 = vunpack.c.l.bf16 %v2314
      %v2326 = vunpack.c.h.bf16 %v2314
      %v2327 = vunpack.c.l.bf16 %v2315
      %v2328 = vunpack.c.h.bf16 %v2315
      %v2329 = vunpack.c.l.bf16 %v2316
      %v2330 = vunpack.c.h.bf16 %v2316
      %v2331 = vunpack.c.l.bf16 %v2317
      %v2332 = vunpack.c.h.bf16 %v2317
      %v2333 = vunpack.c.l.bf16 %v2318
      %v2334 = vunpack.c.h.bf16 %v2318
      %v2335 = vtanh.pop %v2319
      %v2336 = vtanh.pop %v2320
      %v2337 = vtanh.pop %v2321
      %v2338 = vtanh.pop %v2322
      %v2339 = vtanh.pop %v2323
      %v2340 = vtanh.pop %v2324
      %v2341 = vtanh.pop %v2325
      %v2342 = vtanh.pop %v2326
      %v2343 = vtanh.pop %v2327
      %v2344 = vtanh.pop %v2328
      %v2345 = vtanh.pop %v2329
      %v2346 = vtanh.pop %v2330
      %v2347 = vtanh.pop %v2331
      %v2348 = vtanh.pop %v2332
      %v2349 = vtanh.pop %v2333
      %v2350 = vtanh.pop %v2334
      %v2351 = vpack.c.bf16 %v2336, %v2335
      %v2352 = vpack.c.bf16 %v2338, %v2337
      %v2353 = vpack.c.bf16 %v2340, %v2339
      %v2354 = vpack.c.bf16 %v2342, %v2341
      %v2355 = vpack.c.bf16 %v2344, %v2343
      %v2356 = vpack.c.bf16 %v2346, %v2345
      %v2357 = vpack.c.bf16 %v2348, %v2347
      %v2358 = vpack.c.bf16 %v2350, %v2349
      %v2359 = vld [vmem:[%s11] sm:$0xf]
      %v2360 = vld [vmem:[%s11 + $0x4] sm:$0xf]
      %v2361 = vld [vmem:[%s11 + $0x8] sm:$0xf]
      %v2362 = vld [vmem:[%s11 + $0xc] sm:$0xf]
      %v2363 = vld [vmem:[%s11 + $0x10] sm:$0xf]
      %v2364 = vld [vmem:[%s11 + $0x14] sm:$0xf]
      %v2365 = vld [vmem:[%s11 + $0x18] sm:$0xf]
      %v2366 = vld [vmem:[%s11 + $0x1c] sm:$0xf]
      %v2367 = vld [vmem:[%s11 + $0x20] sm:$0xf]
      %v2368 = vld [vmem:[%s11 + $0x24] sm:$0xf]
      %v2369 = vld [vmem:[%s11 + $0x28] sm:$0xf]
      %v2370 = vld [vmem:[%s11 + $0x2c] sm:$0xf]
      %v2371 = vld [vmem:[%s11 + $0x30] sm:$0xf]
      %v2372 = vld [vmem:[%s11 + $0x34] sm:$0xf]
      %v2373 = vld [vmem:[%s11 + $0x38] sm:$0xf]
      %v2374 = vld [vmem:[%s11 + $0x3c] sm:$0xf]
      %v2375 = vld [vmem:[%s12] sm:$0x1]
      %v2377 = vperm.slane %v2375, 0
      %v2395 = vunpack.c.l.b16 %v2359
      %v2396 = vunpack.c.l.b16 %v2360
      %v2397 = vunpack.c.l.b16 %v2361
      %v2398 = vunpack.c.l.b16 %v2362
      %v2399 = vunpack.c.l.b16 %v2363
      %v2400 = vunpack.c.l.b16 %v2364
      %v2401 = vunpack.c.l.b16 %v2365
      %v2402 = vunpack.c.l.b16 %v2366
      %v2403 = vunpack.c.l.b16 %v2367
      %v2404 = vunpack.c.l.b16 %v2368
      %v2405 = vunpack.c.l.b16 %v2369
      %v2406 = vunpack.c.l.b16 %v2370
      %v2407 = vunpack.c.l.b16 %v2371
      %v2408 = vunpack.c.l.b16 %v2372
      %v2409 = vunpack.c.l.b16 %v2373
      %v2410 = vunpack.c.l.b16 %v2374
      %v2411 = vpack.c.b16 %v2396, %v2395
      %v2412 = vpack.c.b16 %v2398, %v2397
      %v2413 = vpack.c.b16 %v2400, %v2399
      %v2414 = vpack.c.b16 %v2402, %v2401
      %v2415 = vpack.c.b16 %v2404, %v2403
      %v2416 = vpack.c.b16 %v2406, %v2405
      %v2417 = vpack.c.b16 %v2408, %v2407
      %v2418 = vpack.c.b16 %v2410, %v2409
      %2427 = vmatpush.bf16.msra.mxu0 %v2418
      %2428 = vmatpush.bf16.msra.mxu0 %v2417
      %2429 = vmatpush.bf16.msra.mxu0 %v2416
      %2430 = vmatpush.bf16.msra.mxu0 %v2415
      %2431 = vmatpush.bf16.msra.mxu0 %v2414
      %2432 = vmatpush.bf16.msra.mxu0 %v2413
      %2433 = vmatpush.bf16.msra.mxu0 %v2412
      %2434 = vmatpush.bf16.msra.mxu0 %v2411
      %2435 = vmatmul.bf16.gmra.mxu0 %v2351
      %v2436 = vpop.f32.mrf.mxu0
      %v2437 = vadd.f32 %v2377, %v2436
      %v2438 = vpop.f32.mrf.mxu0
      %v2439 = vadd.f32 %v2377, %v2438
      %2440 = vmatmul.bf16.gmra.mxu0 %v2352
      %v2441 = vpop.f32.mrf.mxu0
      %v2442 = vadd.f32 %v2377, %v2441
      %v2443 = vpop.f32.mrf.mxu0
      %v2444 = vadd.f32 %v2377, %v2443
      %2445 = vmatmul.bf16.gmra.mxu0 %v2353
      %v2446 = vpop.f32.mrf.mxu0
      %v2447 = vadd.f32 %v2377, %v2446
      %v2448 = vpop.f32.mrf.mxu0
      %v2449 = vadd.f32 %v2377, %v2448
      %2450 = vmatmul.bf16.gmra.mxu0 %v2354
      %v2451 = vpop.f32.mrf.mxu0
      %v2452 = vadd.f32 %v2377, %v2451
      %v2453 = vpop.f32.mrf.mxu0
      %v2454 = vadd.f32 %v2377, %v2453
      %2455 = vmatmul.bf16.gmra.mxu0 %v2355
      %v2456 = vpop.f32.mrf.mxu0
      %v2457 = vadd.f32 %v2377, %v2456
      %v2458 = vpop.f32.mrf.mxu0
      %v2459 = vadd.f32 %v2377, %v2458
      %2460 = vmatmul.bf16.gmra.mxu0 %v2356
      %v2461 = vpop.f32.mrf.mxu0
      %v2462 = vadd.f32 %v2377, %v2461
      %v2463 = vpop.f32.mrf.mxu0
      %v2464 = vadd.f32 %v2377, %v2463
      %2465 = vmatmul.bf16.gmra.mxu0 %v2357
      %v2466 = vpop.f32.mrf.mxu0
      %v2467 = vadd.f32 %v2377, %v2466
      %v2468 = vpop.f32.mrf.mxu0
      %v2469 = vadd.f32 %v2377, %v2468
      %2470 = vmatmul.bf16.gmra.mxu0 %v2358
      %v2471 = vpop.f32.mrf.mxu0
      %v2472 = vadd.f32 %v2377, %v2471
      %v2473 = vpop.f32.mrf.mxu0
      %v2474 = vadd.f32 %v2377, %v2473
      %2475 = vdwg.mxu0
      %v2476 = vpack.c.bf16 %v2439, %v2437
      %v2477 = vpack.c.bf16 %v2444, %v2442
      %v2478 = vpack.c.bf16 %v2449, %v2447
      %v2479 = vpack.c.bf16 %v2454, %v2452
      %v2480 = vpack.c.bf16 %v2459, %v2457
      %v2481 = vpack.c.bf16 %v2464, %v2462
      %v2482 = vpack.c.bf16 %v2469, %v2467
      %v2483 = vpack.c.bf16 %v2474, %v2472
      %v2484 = vunpack.c.l.bf16 %v2476
      %v2485 = vunpack.c.h.bf16 %v2476
      %v2486 = vunpack.c.l.bf16 %v2477
      %v2487 = vunpack.c.h.bf16 %v2477
      %v2488 = vunpack.c.l.bf16 %v2478
      %v2489 = vunpack.c.h.bf16 %v2478
      %v2490 = vunpack.c.l.bf16 %v2479
      %v2491 = vunpack.c.h.bf16 %v2479
      %v2492 = vunpack.c.l.bf16 %v2480
      %v2493 = vunpack.c.h.bf16 %v2480
      %v2494 = vunpack.c.l.bf16 %v2481
      %v2495 = vunpack.c.h.bf16 %v2481
      %v2496 = vunpack.c.l.bf16 %v2482
      %v2497 = vunpack.c.h.bf16 %v2482
      %v2498 = vunpack.c.l.bf16 %v2483
      %v2499 = vunpack.c.h.bf16 %v2483
      %v2500 = vtanh.pop %v2484
      %v2501 = vtanh.pop %v2485
      %v2502 = vtanh.pop %v2486
      %v2503 = vtanh.pop %v2487
      %v2504 = vtanh.pop %v2488
      %v2505 = vtanh.pop %v2489
      %v2506 = vtanh.pop %v2490
      %v2507 = vtanh.pop %v2491
      %v2508 = vtanh.pop %v2492
      %v2509 = vtanh.pop %v2493
      %v2510 = vtanh.pop %v2494
      %v2511 = vtanh.pop %v2495
      %v2512 = vtanh.pop %v2496
      %v2513 = vtanh.pop %v2497
      %v2514 = vtanh.pop %v2498
      %v2515 = vtanh.pop %v2499
      %v2516 = vpack.c.bf16 %v2501, %v2500
      %v2517 = vpack.c.bf16 %v2503, %v2502
      %v2518 = vpack.c.bf16 %v2505, %v2504
      %v2519 = vpack.c.bf16 %v2507, %v2506
      %v2520 = vpack.c.bf16 %v2509, %v2508
      %v2521 = vpack.c.bf16 %v2511, %v2510
      %v2522 = vpack.c.bf16 %v2513, %v2512
      %v2523 = vpack.c.bf16 %v2515, %v2514
      %v2524 = vld [vmem:[%s13] sm:$0xf]
      %v2525 = vld [vmem:[%s13 + $0x4] sm:$0xf]
      %v2526 = vld [vmem:[%s13 + $0x8] sm:$0xf]
      %v2527 = vld [vmem:[%s13 + $0xc] sm:$0xf]
      %v2528 = vld [vmem:[%s13 + $0x10] sm:$0xf]
      %v2529 = vld [vmem:[%s13 + $0x14] sm:$0xf]
      %v2530 = vld [vmem:[%s13 + $0x18] sm:$0xf]
      %v2531 = vld [vmem:[%s13 + $0x1c] sm:$0xf]
      %v2532 = vld [vmem:[%s13 + $0x20] sm:$0xf]
      %v2533 = vld [vmem:[%s13 + $0x24] sm:$0xf]
      %v2534 = vld [vmem:[%s13 + $0x28] sm:$0xf]
      %v2535 = vld [vmem:[%s13 + $0x2c] sm:$0xf]
      %v2536 = vld [vmem:[%s13 + $0x30] sm:$0xf]
      %v2537 = vld [vmem:[%s13 + $0x34] sm:$0xf]
      %v2538 = vld [vmem:[%s13 + $0x38] sm:$0xf]
      %v2539 = vld [vmem:[%s13 + $0x3c] sm:$0xf]
      %v2540 = vld [vmem:[%s14] sm:$0x1]
      %v2542 = vperm.slane %v2540, 0
      %v2560 = vunpack.c.l.b16 %v2524
      %v2561 = vunpack.c.l.b16 %v2525
      %v2562 = vunpack.c.l.b16 %v2526
      %v2563 = vunpack.c.l.b16 %v2527
      %v2564 = vunpack.c.l.b16 %v2528
      %v2565 = vunpack.c.l.b16 %v2529
      %v2566 = vunpack.c.l.b16 %v2530
      %v2567 = vunpack.c.l.b16 %v2531
      %v2568 = vunpack.c.l.b16 %v2532
      %v2569 = vunpack.c.l.b16 %v2533
      %v2570 = vunpack.c.l.b16 %v2534
      %v2571 = vunpack.c.l.b16 %v2535
      %v2572 = vunpack.c.l.b16 %v2536
      %v2573 = vunpack.c.l.b16 %v2537
      %v2574 = vunpack.c.l.b16 %v2538
      %v2575 = vunpack.c.l.b16 %v2539
      %v2576 = vpack.c.b16 %v2561, %v2560
      %v2577 = vpack.c.b16 %v2563, %v2562
      %v2578 = vpack.c.b16 %v2565, %v2564
      %v2579 = vpack.c.b16 %v2567, %v2566
      %v2580 = vpack.c.b16 %v2569, %v2568
      %v2581 = vpack.c.b16 %v2571, %v2570
      %v2582 = vpack.c.b16 %v2573, %v2572
      %v2583 = vpack.c.b16 %v2575, %v2574
      %2592 = vmatpush.bf16.msra.mxu0 %v2583
      %2593 = vmatpush.bf16.msra.mxu0 %v2582
      %2594 = vmatpush.bf16.msra.mxu0 %v2581
      %2595 = vmatpush.bf16.msra.mxu0 %v2580
      %2596 = vmatpush.bf16.msra.mxu0 %v2579
      %2597 = vmatpush.bf16.msra.mxu0 %v2578
      %2598 = vmatpush.bf16.msra.mxu0 %v2577
      %2599 = vmatpush.bf16.msra.mxu0 %v2576
      %2600 = vmatmul.bf16.gmra.mxu0 %v2516
      %v2601 = vpop.f32.mrf.mxu0
      %v2602 = vadd.f32 %v2542, %v2601
      %v2603 = vpop.f32.mrf.mxu0
      %v2604 = vadd.f32 %v2542, %v2603
      %2605 = vmatmul.bf16.gmra.mxu0 %v2517
      %v2606 = vpop.f32.mrf.mxu0
      %v2607 = vadd.f32 %v2542, %v2606
      %v2608 = vpop.f32.mrf.mxu0
      %v2609 = vadd.f32 %v2542, %v2608
      %2610 = vmatmul.bf16.gmra.mxu0 %v2518
      %v2611 = vpop.f32.mrf.mxu0
      %v2612 = vadd.f32 %v2542, %v2611
      %v2613 = vpop.f32.mrf.mxu0
      %v2614 = vadd.f32 %v2542, %v2613
      %2615 = vmatmul.bf16.gmra.mxu0 %v2519
      %v2616 = vpop.f32.mrf.mxu0
      %v2617 = vadd.f32 %v2542, %v2616
      %v2618 = vpop.f32.mrf.mxu0
      %v2619 = vadd.f32 %v2542, %v2618
      %2620 = vmatmul.bf16.gmra.mxu0 %v2520
      %v2621 = vpop.f32.mrf.mxu0
      %v2622 = vadd.f32 %v2542, %v2621
      %v2623 = vpop.f32.mrf.mxu0
      %v2624 = vadd.f32 %v2542, %v2623
      %2625 = vmatmul.bf16.gmra.mxu0 %v2521
      %v2626 = vpop.f32.mrf.mxu0
      %v2627 = vadd.f32 %v2542, %v2626
      %v2628 = vpop.f32.mrf.mxu0
      %v2629 = vadd.f32 %v2542, %v2628
      %2630 = vmatmul.bf16.gmra.mxu0 %v2522
      %v2631 = vpop.f32.mrf.mxu0
      %v2632 = vadd.f32 %v2542, %v2631
      %v2633 = vpop.f32.mrf.mxu0
      %v2634 = vadd.f32 %v2542, %v2633
      %2635 = vmatmul.bf16.gmra.mxu0 %v2523
      %v2636 = vpop.f32.mrf.mxu0
      %v2637 = vadd.f32 %v2542, %v2636
      %v2638 = vpop.f32.mrf.mxu0
      %v2639 = vadd.f32 %v2542, %v2638
      %2640 = vdwg.mxu0
      %v2641 = vpack.c.bf16 %v2604, %v2602
      %v2642 = vpack.c.bf16 %v2609, %v2607
      %v2643 = vpack.c.bf16 %v2614, %v2612
      %v2644 = vpack.c.bf16 %v2619, %v2617
      %v2645 = vpack.c.bf16 %v2624, %v2622
      %v2646 = vpack.c.bf16 %v2629, %v2627
      %v2647 = vpack.c.bf16 %v2634, %v2632
      %v2648 = vpack.c.bf16 %v2639, %v2637
      %v2649 = vunpack.c.l.bf16 %v2641
      %v2650 = vunpack.c.h.bf16 %v2641
      %v2651 = vunpack.c.l.bf16 %v2642
      %v2652 = vunpack.c.h.bf16 %v2642
      %v2653 = vunpack.c.l.bf16 %v2643
      %v2654 = vunpack.c.h.bf16 %v2643
      %v2655 = vunpack.c.l.bf16 %v2644
      %v2656 = vunpack.c.h.bf16 %v2644
      %v2657 = vunpack.c.l.bf16 %v2645
      %v2658 = vunpack.c.h.bf16 %v2645
      %v2659 = vunpack.c.l.bf16 %v2646
      %v2660 = vunpack.c.h.bf16 %v2646
      %v2661 = vunpack.c.l.bf16 %v2647
      %v2662 = vunpack.c.h.bf16 %v2647
      %v2663 = vunpack.c.l.bf16 %v2648
      %v2664 = vunpack.c.h.bf16 %v2648
      %v2665 = vtanh.pop %v2649
      %v2666 = vtanh.pop %v2650
      %v2667 = vtanh.pop %v2651
      %v2668 = vtanh.pop %v2652
      %v2669 = vtanh.pop %v2653
      %v2670 = vtanh.pop %v2654
      %v2671 = vtanh.pop %v2655
      %v2672 = vtanh.pop %v2656
      %v2673 = vtanh.pop %v2657
      %v2674 = vtanh.pop %v2658
      %v2675 = vtanh.pop %v2659
      %v2676 = vtanh.pop %v2660
      %v2677 = vtanh.pop %v2661
      %v2678 = vtanh.pop %v2662
      %v2679 = vtanh.pop %v2663
      %v2680 = vtanh.pop %v2664
      %v2681 = vpack.c.bf16 %v2666, %v2665
      %v2682 = vpack.c.bf16 %v2668, %v2667
      %v2683 = vpack.c.bf16 %v2670, %v2669
      %v2684 = vpack.c.bf16 %v2672, %v2671
      %v2685 = vpack.c.bf16 %v2674, %v2673
      %v2686 = vpack.c.bf16 %v2676, %v2675
      %v2687 = vpack.c.bf16 %v2678, %v2677
      %v2688 = vpack.c.bf16 %v2680, %v2679
      %v2689 = vld [vmem:[%s15] sm:$0xff]
      %v2690 = vld [vmem:[%s15 + $0x8] sm:$0xff]
      %v2691 = vld [vmem:[%s15 + $0x10] sm:$0xff]
      %v2692 = vld [vmem:[%s15 + $0x18] sm:$0xf]
      %v2693 = vld [vmem:[%s15 + $0x1c] sm:$0xff]
      %v2694 = vld [vmem:[%s15 + $0x24] sm:$0xff]
      %v2695 = vld [vmem:[%s15 + $0x2c] sm:$0xff]
      %v2696 = vld [vmem:[%s15 + $0x34] sm:$0xf]
      %v2697 = vld [vmem:[%s15 + $0x38] sm:$0xff]
      %v2698 = vld [vmem:[%s15 + $0x40] sm:$0xff]
      %v2699 = vld [vmem:[%s15 + $0x48] sm:$0xff]
      %v2700 = vld [vmem:[%s15 + $0x50] sm:$0xf]
      %v2701 = vld [vmem:[%s15 + $0x54] sm:$0xff]
      %v2702 = vld [vmem:[%s15 + $0x5c] sm:$0xff]
      %v2703 = vld [vmem:[%s15 + $0x64] sm:$0xff]
      %v2704 = vld [vmem:[%s15 + $0x6c] sm:$0xf]
      %v2705 = vld [vmem:[%s15 + $0x70] sm:$0xff]
      %v2706 = vld [vmem:[%s15 + $0x78] sm:$0xff]
      %v2707 = vld [vmem:[%s15 + $0x80] sm:$0xff]
      %v2708 = vld [vmem:[%s15 + $0x88] sm:$0xf]
      %v2709 = vld [vmem:[%s15 + $0x8c] sm:$0xff]
      %v2710 = vld [vmem:[%s15 + $0x94] sm:$0xff]
      %v2711 = vld [vmem:[%s15 + $0x9c] sm:$0xff]
      %v2712 = vld [vmem:[%s15 + $0xa4] sm:$0xf]
      %v2713 = vld [vmem:[%s15 + $0xa8] sm:$0xff]
      %v2714 = vld [vmem:[%s15 + $0xb0] sm:$0xff]
      %v2715 = vld [vmem:[%s15 + $0xb8] sm:$0xff]
      %v2716 = vld [vmem:[%s15 + $0xc0] sm:$0xf]
      %v2717 = vld [vmem:[%s15 + $0xc4] sm:$0xff]
      %v2718 = vld [vmem:[%s15 + $0xcc] sm:$0xff]
      %v2719 = vld [vmem:[%s15 + $0xd4] sm:$0xff]
      %v2720 = vld [vmem:[%s15 + $0xdc] sm:$0xf]
      %v2721 = vld [vmem:[%s15 + $0xe0] sm:$0xff]
      %v2722 = vld [vmem:[%s15 + $0xe8] sm:$0xff]
      %v2723 = vld [vmem:[%s15 + $0xf0] sm:$0xff]
      %v2724 = vld [vmem:[%s15 + $0xf8] sm:$0xf]
      %v2725 = vld [vmem:[%s15 + $0xfc] sm:$0xff]
      %v2726 = vld [vmem:[%s15 + $0x104] sm:$0xff]
      %v2727 = vld [vmem:[%s15 + $0x10c] sm:$0xff]
      %v2728 = vld [vmem:[%s15 + $0x114] sm:$0xf]
      %v2729 = vld [vmem:[%s15 + $0x118] sm:$0xff]
      %v2730 = vld [vmem:[%s15 + $0x120] sm:$0xff]
      %v2731 = vld [vmem:[%s15 + $0x128] sm:$0xff]
      %v2732 = vld [vmem:[%s15 + $0x130] sm:$0xf]
      %v2733 = vld [vmem:[%s15 + $0x134] sm:$0xff]
      %v2734 = vld [vmem:[%s15 + $0x13c] sm:$0xff]
      %v2735 = vld [vmem:[%s15 + $0x144] sm:$0xff]
      %v2736 = vld [vmem:[%s15 + $0x14c] sm:$0xf]
      %v2737 = vld [vmem:[%s15 + $0x150] sm:$0xff]
      %v2738 = vld [vmem:[%s15 + $0x158] sm:$0xff]
      %v2739 = vld [vmem:[%s15 + $0x160] sm:$0xff]
      %v2740 = vld [vmem:[%s15 + $0x168] sm:$0xf]
      %v2741 = vld [vmem:[%s15 + $0x16c] sm:$0xff]
      %v2742 = vld [vmem:[%s15 + $0x174] sm:$0xff]
      %v2743 = vld [vmem:[%s15 + $0x17c] sm:$0xff]
      %v2744 = vld [vmem:[%s15 + $0x184] sm:$0xf]
      %v2745 = vld [vmem:[%s15 + $0x188] sm:$0xff]
      %v2746 = vld [vmem:[%s15 + $0x190] sm:$0xff]
      %v2747 = vld [vmem:[%s15 + $0x198] sm:$0xff]
      %v2748 = vld [vmem:[%s15 + $0x1a0] sm:$0xf]
      %v2749 = vld [vmem:[%s15 + $0x1a4] sm:$0xff]
      %v2750 = vld [vmem:[%s15 + $0x1ac] sm:$0xff]
      %v2751 = vld [vmem:[%s15 + $0x1b4] sm:$0xff]
      %v2752 = vld [vmem:[%s15 + $0x1bc] sm:$0xf]
      %v2753 = vld [vmem:[%s16] sm:$0x7f]
      %v2755 = vperm.slane %v2753, 0
      %v2756 = vperm.slane %v2753, 1
      %v2757 = vperm.slane %v2753, 2
      %v2758 = vperm.slane %v2753, 3
      %v2759 = vperm.slane %v2753, 4
      %v2760 = vperm.slane %v2753, 5
      %v2761 = vperm.slane %v2753, 6
      %v2833 = vunpack.c.l.b16 %v2689
      %v2834 = vunpack.c.h.b16 %v2689
      %v2835 = vunpack.c.l.b16 %v2690
      %v2836 = vunpack.c.h.b16 %v2690
      %v2837 = vunpack.c.l.b16 %v2691
      %v2838 = vunpack.c.h.b16 %v2691
      %v2839 = vunpack.c.l.b16 %v2692
      %v2840 = vunpack.c.l.b16 %v2693
      %v2841 = vunpack.c.h.b16 %v2693
      %v2842 = vunpack.c.l.b16 %v2694
      %v2843 = vunpack.c.h.b16 %v2694
      %v2844 = vunpack.c.l.b16 %v2695
      %v2845 = vunpack.c.h.b16 %v2695
      %v2846 = vunpack.c.l.b16 %v2696
      %v2847 = vunpack.c.l.b16 %v2697
      %v2848 = vunpack.c.h.b16 %v2697
      %v2849 = vunpack.c.l.b16 %v2698
      %v2850 = vunpack.c.h.b16 %v2698
      %v2851 = vunpack.c.l.b16 %v2699
      %v2852 = vunpack.c.h.b16 %v2699
      %v2853 = vunpack.c.l.b16 %v2700
      %v2854 = vunpack.c.l.b16 %v2701
      %v2855 = vunpack.c.h.b16 %v2701
      %v2856 = vunpack.c.l.b16 %v2702
      %v2857 = vunpack.c.h.b16 %v2702
      %v2858 = vunpack.c.l.b16 %v2703
      %v2859 = vunpack.c.h.b16 %v2703
      %v2860 = vunpack.c.l.b16 %v2704
      %v2861 = vunpack.c.l.b16 %v2705
      %v2862 = vunpack.c.h.b16 %v2705
      %v2863 = vunpack.c.l.b16 %v2706
      %v2864 = vunpack.c.h.b16 %v2706
      %v2865 = vunpack.c.l.b16 %v2707
      %v2866 = vunpack.c.h.b16 %v2707
      %v2867 = vunpack.c.l.b16 %v2708
      %v2868 = vunpack.c.l.b16 %v2709
      %v2869 = vunpack.c.h.b16 %v2709
      %v2870 = vunpack.c.l.b16 %v2710
      %v2871 = vunpack.c.h.b16 %v2710
      %v2872 = vunpack.c.l.b16 %v2711
      %v2873 = vunpack.c.h.b16 %v2711
      %v2874 = vunpack.c.l.b16 %v2712
      %v2875 = vunpack.c.l.b16 %v2713
      %v2876 = vunpack.c.h.b16 %v2713
      %v2877 = vunpack.c.l.b16 %v2714
      %v2878 = vunpack.c.h.b16 %v2714
      %v2879 = vunpack.c.l.b16 %v2715
      %v2880 = vunpack.c.h.b16 %v2715
      %v2881 = vunpack.c.l.b16 %v2716
      %v2882 = vunpack.c.l.b16 %v2717
      %v2883 = vunpack.c.h.b16 %v2717
      %v2884 = vunpack.c.l.b16 %v2718
      %v2885 = vunpack.c.h.b16 %v2718
      %v2886 = vunpack.c.l.b16 %v2719
      %v2887 = vunpack.c.h.b16 %v2719
      %v2888 = vunpack.c.l.b16 %v2720
      %v2889 = vunpack.c.l.b16 %v2721
      %v2890 = vunpack.c.h.b16 %v2721
      %v2891 = vunpack.c.l.b16 %v2722
      %v2892 = vunpack.c.h.b16 %v2722
      %v2893 = vunpack.c.l.b16 %v2723
      %v2894 = vunpack.c.h.b16 %v2723
      %v2895 = vunpack.c.l.b16 %v2724
      %v2896 = vunpack.c.l.b16 %v2725
      %v2897 = vunpack.c.h.b16 %v2725
      %v2898 = vunpack.c.l.b16 %v2726
      %v2899 = vunpack.c.h.b16 %v2726
      %v2900 = vunpack.c.l.b16 %v2727
      %v2901 = vunpack.c.h.b16 %v2727
      %v2902 = vunpack.c.l.b16 %v2728
      %v2903 = vunpack.c.l.b16 %v2729
      %v2904 = vunpack.c.h.b16 %v2729
      %v2905 = vunpack.c.l.b16 %v2730
      %v2906 = vunpack.c.h.b16 %v2730
      %v2907 = vunpack.c.l.b16 %v2731
      %v2908 = vunpack.c.h.b16 %v2731
      %v2909 = vunpack.c.l.b16 %v2732
      %v2910 = vunpack.c.l.b16 %v2733
      %v2911 = vunpack.c.h.b16 %v2733
      %v2912 = vunpack.c.l.b16 %v2734
      %v2913 = vunpack.c.h.b16 %v2734
      %v2914 = vunpack.c.l.b16 %v2735
      %v2915 = vunpack.c.h.b16 %v2735
      %v2916 = vunpack.c.l.b16 %v2736
      %v2917 = vunpack.c.l.b16 %v2737
      %v2918 = vunpack.c.h.b16 %v2737
      %v2919 = vunpack.c.l.b16 %v2738
      %v2920 = vunpack.c.h.b16 %v2738
      %v2921 = vunpack.c.l.b16 %v2739
      %v2922 = vunpack.c.h.b16 %v2739
      %v2923 = vunpack.c.l.b16 %v2740
      %v2924 = vunpack.c.l.b16 %v2741
      %v2925 = vunpack.c.h.b16 %v2741
      %v2926 = vunpack.c.l.b16 %v2742
      %v2927 = vunpack.c.h.b16 %v2742
      %v2928 = vunpack.c.l.b16 %v2743
      %v2929 = vunpack.c.h.b16 %v2743
      %v2930 = vunpack.c.l.b16 %v2744
      %v2931 = vunpack.c.l.b16 %v2745
      %v2932 = vunpack.c.h.b16 %v2745
      %v2933 = vunpack.c.l.b16 %v2746
      %v2934 = vunpack.c.h.b16 %v2746
      %v2935 = vunpack.c.l.b16 %v2747
      %v2936 = vunpack.c.h.b16 %v2747
      %v2937 = vunpack.c.l.b16 %v2748
      %v2938 = vunpack.c.l.b16 %v2749
      %v2939 = vunpack.c.h.b16 %v2749
      %v2940 = vunpack.c.l.b16 %v2750
      %v2941 = vunpack.c.h.b16 %v2750
      %v2942 = vunpack.c.l.b16 %v2751
      %v2943 = vunpack.c.h.b16 %v2751
      %v2944 = vunpack.c.l.b16 %v2752
      %v2945 = vpack.c.b16 %v2840, %v2833
      %v2946 = vpack.c.b16 %v2841, %v2834
      %v2947 = vpack.c.b16 %v2842, %v2835
      %v2948 = vpack.c.b16 %v2843, %v2836
      %v2949 = vpack.c.b16 %v2844, %v2837
      %v2950 = vpack.c.b16 %v2845, %v2838
      %v2951 = vpack.c.b16 %v2846, %v2839
      %v2952 = vpack.c.b16 %v2854, %v2847
      %v2953 = vpack.c.b16 %v2855, %v2848
      %v2954 = vpack.c.b16 %v2856, %v2849
      %v2955 = vpack.c.b16 %v2857, %v2850
      %v2956 = vpack.c.b16 %v2858, %v2851
      %v2957 = vpack.c.b16 %v2859, %v2852
      %v2958 = vpack.c.b16 %v2860, %v2853
      %v2959 = vpack.c.b16 %v2868, %v2861
      %v2960 = vpack.c.b16 %v2869, %v2862
      %v2961 = vpack.c.b16 %v2870, %v2863
      %v2962 = vpack.c.b16 %v2871, %v2864
      %v2963 = vpack.c.b16 %v2872, %v2865
      %v2964 = vpack.c.b16 %v2873, %v2866
      %v2965 = vpack.c.b16 %v2874, %v2867
      %v2966 = vpack.c.b16 %v2882, %v2875
      %v2967 = vpack.c.b16 %v2883, %v2876
      %v2968 = vpack.c.b16 %v2884, %v2877
      %v2969 = vpack.c.b16 %v2885, %v2878
      %v2970 = vpack.c.b16 %v2886, %v2879
      %v2971 = vpack.c.b16 %v2887, %v2880
      %v2972 = vpack.c.b16 %v2888, %v2881
      %v2973 = vpack.c.b16 %v2896, %v2889
      %v2974 = vpack.c.b16 %v2897, %v2890
      %v2975 = vpack.c.b16 %v2898, %v2891
      %v2976 = vpack.c.b16 %v2899, %v2892
      %v2977 = vpack.c.b16 %v2900, %v2893
      %v2978 = vpack.c.b16 %v2901, %v2894
      %v2979 = vpack.c.b16 %v2902, %v2895
      %v2980 = vpack.c.b16 %v2910, %v2903
      %v2981 = vpack.c.b16 %v2911, %v2904
      %v2982 = vpack.c.b16 %v2912, %v2905
      %v2983 = vpack.c.b16 %v2913, %v2906
      %v2984 = vpack.c.b16 %v2914, %v2907
      %v2985 = vpack.c.b16 %v2915, %v2908
      %v2986 = vpack.c.b16 %v2916, %v2909
      %v2987 = vpack.c.b16 %v2924, %v2917
      %v2988 = vpack.c.b16 %v2925, %v2918
      %v2989 = vpack.c.b16 %v2926, %v2919
      %v2990 = vpack.c.b16 %v2927, %v2920
      %v2991 = vpack.c.b16 %v2928, %v2921
      %v2992 = vpack.c.b16 %v2929, %v2922
      %v2993 = vpack.c.b16 %v2930, %v2923
      %v2994 = vpack.c.b16 %v2938, %v2931
      %v2995 = vpack.c.b16 %v2939, %v2932
      %v2996 = vpack.c.b16 %v2940, %v2933
      %v2997 = vpack.c.b16 %v2941, %v2934
      %v2998 = vpack.c.b16 %v2942, %v2935
      %v2999 = vpack.c.b16 %v2943, %v2936
      %v3000 = vpack.c.b16 %v2944, %v2937
      %3057 = vmatpush.bf16.msra.mxu0 %v2994
      %3058 = vmatpush.bf16.msra.mxu0 %v2987
      %3059 = vmatpush.bf16.msra.mxu0 %v2980
      %3060 = vmatpush.bf16.msra.mxu0 %v2973
      %3061 = vmatpush.bf16.msra.mxu0 %v2966
      %3062 = vmatpush.bf16.msra.mxu0 %v2959
      %3063 = vmatpush.bf16.msra.mxu0 %v2952
      %3064 = vmatpush.bf16.msra.mxu0 %v2945
      %3065 = vmatmul.bf16.gmra.mxu0 %v2681
      %v3066 = vpop.f32.mrf.mxu0
      %v3067 = vadd.f32 %v2755, %v3066
      %v3068 = vpop.f32.mrf.mxu0
      %v3069 = vadd.f32 %v2755, %v3068
      %3070 = vmatmul.bf16.gmra.mxu0 %v2682
      %v3071 = vpop.f32.mrf.mxu0
      %v3072 = vadd.f32 %v2755, %v3071
      %v3073 = vpop.f32.mrf.mxu0
      %v3074 = vadd.f32 %v2755, %v3073
      %3075 = vmatmul.bf16.gmra.mxu0 %v2683
      %v3076 = vpop.f32.mrf.mxu0
      %v3077 = vadd.f32 %v2755, %v3076
      %v3078 = vpop.f32.mrf.mxu0
      %v3079 = vadd.f32 %v2755, %v3078
      %3080 = vmatmul.bf16.gmra.mxu0 %v2684
      %v3081 = vpop.f32.mrf.mxu0
      %v3082 = vadd.f32 %v2755, %v3081
      %v3083 = vpop.f32.mrf.mxu0
      %v3084 = vadd.f32 %v2755, %v3083
      %3085 = vmatmul.bf16.gmra.mxu0 %v2685
      %v3086 = vpop.f32.mrf.mxu0
      %v3087 = vadd.f32 %v2755, %v3086
      %v3088 = vpop.f32.mrf.mxu0
      %v3089 = vadd.f32 %v2755, %v3088
      %3090 = vmatmul.bf16.gmra.mxu0 %v2686
      %v3091 = vpop.f32.mrf.mxu0
      %v3092 = vadd.f32 %v2755, %v3091
      %v3093 = vpop.f32.mrf.mxu0
      %v3094 = vadd.f32 %v2755, %v3093
      %3095 = vmatmul.bf16.gmra.mxu0 %v2687
      %v3096 = vpop.f32.mrf.mxu0
      %v3097 = vadd.f32 %v2755, %v3096
      %v3098 = vpop.f32.mrf.mxu0
      %v3099 = vadd.f32 %v2755, %v3098
      %3100 = vmatmul.bf16.gmra.mxu0 %v2688
      %v3101 = vpop.f32.mrf.mxu0
      %v3102 = vadd.f32 %v2755, %v3101
      %v3103 = vpop.f32.mrf.mxu0
      %v3104 = vadd.f32 %v2755, %v3103
      %3105 = vdwg.mxu0
      %3106 = vmatpush.bf16.msra.mxu0 %v2995
      %3107 = vmatpush.bf16.msra.mxu0 %v2988
      %3108 = vmatpush.bf16.msra.mxu0 %v2981
      %3109 = vmatpush.bf16.msra.mxu0 %v2974
      %3110 = vmatpush.bf16.msra.mxu0 %v2967
      %3111 = vmatpush.bf16.msra.mxu0 %v2960
      %3112 = vmatpush.bf16.msra.mxu0 %v2953
      %3113 = vmatpush.bf16.msra.mxu0 %v2946
      %3114 = vmatmul.bf16.gmra.mxu0 %v2681
      %v3115 = vpop.f32.mrf.mxu0
      %v3116 = vadd.f32 %v2756, %v3115
      %v3117 = vpop.f32.mrf.mxu0
      %v3118 = vadd.f32 %v2756, %v3117
      %3119 = vmatmul.bf16.gmra.mxu0 %v2682
      %v3120 = vpop.f32.mrf.mxu0
      %v3121 = vadd.f32 %v2756, %v3120
      %v3122 = vpop.f32.mrf.mxu0
      %v3123 = vadd.f32 %v2756, %v3122
      %3124 = vmatmul.bf16.gmra.mxu0 %v2683
      %v3125 = vpop.f32.mrf.mxu0
      %v3126 = vadd.f32 %v2756, %v3125
      %v3127 = vpop.f32.mrf.mxu0
      %v3128 = vadd.f32 %v2756, %v3127
      %3129 = vmatmul.bf16.gmra.mxu0 %v2684
      %v3130 = vpop.f32.mrf.mxu0
      %v3131 = vadd.f32 %v2756, %v3130
      %v3132 = vpop.f32.mrf.mxu0
      %v3133 = vadd.f32 %v2756, %v3132
      %3134 = vmatmul.bf16.gmra.mxu0 %v2685
      %v3135 = vpop.f32.mrf.mxu0
      %v3136 = vadd.f32 %v2756, %v3135
      %v3137 = vpop.f32.mrf.mxu0
      %v3138 = vadd.f32 %v2756, %v3137
      %3139 = vmatmul.bf16.gmra.mxu0 %v2686
      %v3140 = vpop.f32.mrf.mxu0
      %v3141 = vadd.f32 %v2756, %v3140
      %v3142 = vpop.f32.mrf.mxu0
      %v3143 = vadd.f32 %v2756, %v3142
      %3144 = vmatmul.bf16.gmra.mxu0 %v2687
      %v3145 = vpop.f32.mrf.mxu0
      %v3146 = vadd.f32 %v2756, %v3145
      %v3147 = vpop.f32.mrf.mxu0
      %v3148 = vadd.f32 %v2756, %v3147
      %3149 = vmatmul.bf16.gmra.mxu0 %v2688
      %v3150 = vpop.f32.mrf.mxu0
      %v3151 = vadd.f32 %v2756, %v3150
      %v3152 = vpop.f32.mrf.mxu0
      %v3153 = vadd.f32 %v2756, %v3152
      %3154 = vdwg.mxu0
      %3155 = vmatpush.bf16.msra.mxu0 %v2996
      %3156 = vmatpush.bf16.msra.mxu0 %v2989
      %3157 = vmatpush.bf16.msra.mxu0 %v2982
      %3158 = vmatpush.bf16.msra.mxu0 %v2975
      %3159 = vmatpush.bf16.msra.mxu0 %v2968
      %3160 = vmatpush.bf16.msra.mxu0 %v2961
      %3161 = vmatpush.bf16.msra.mxu0 %v2954
      %3162 = vmatpush.bf16.msra.mxu0 %v2947
      %3163 = vmatmul.bf16.gmra.mxu0 %v2681
      %v3164 = vpop.f32.mrf.mxu0
      %v3165 = vadd.f32 %v2757, %v3164
      %v3166 = vpop.f32.mrf.mxu0
      %v3167 = vadd.f32 %v2757, %v3166
      %3168 = vmatmul.bf16.gmra.mxu0 %v2682
      %v3169 = vpop.f32.mrf.mxu0
      %v3170 = vadd.f32 %v2757, %v3169
      %v3171 = vpop.f32.mrf.mxu0
      %v3172 = vadd.f32 %v2757, %v3171
      %3173 = vmatmul.bf16.gmra.mxu0 %v2683
      %v3174 = vpop.f32.mrf.mxu0
      %v3175 = vadd.f32 %v2757, %v3174
      %v3176 = vpop.f32.mrf.mxu0
      %v3177 = vadd.f32 %v2757, %v3176
      %3178 = vmatmul.bf16.gmra.mxu0 %v2684
      %v3179 = vpop.f32.mrf.mxu0
      %v3180 = vadd.f32 %v2757, %v3179
      %v3181 = vpop.f32.mrf.mxu0
      %v3182 = vadd.f32 %v2757, %v3181
      %3183 = vmatmul.bf16.gmra.mxu0 %v2685
      %v3184 = vpop.f32.mrf.mxu0
      %v3185 = vadd.f32 %v2757, %v3184
      %v3186 = vpop.f32.mrf.mxu0
      %v3187 = vadd.f32 %v2757, %v3186
      %3188 = vmatmul.bf16.gmra.mxu0 %v2686
      %v3189 = vpop.f32.mrf.mxu0
      %v3190 = vadd.f32 %v2757, %v3189
      %v3191 = vpop.f32.mrf.mxu0
      %v3192 = vadd.f32 %v2757, %v3191
      %3193 = vmatmul.bf16.gmra.mxu0 %v2687
      %v3194 = vpop.f32.mrf.mxu0
      %v3195 = vadd.f32 %v2757, %v3194
      %v3196 = vpop.f32.mrf.mxu0
      %v3197 = vadd.f32 %v2757, %v3196
      %3198 = vmatmul.bf16.gmra.mxu0 %v2688
      %v3199 = vpop.f32.mrf.mxu0
      %v3200 = vadd.f32 %v2757, %v3199
      %v3201 = vpop.f32.mrf.mxu0
      %v3202 = vadd.f32 %v2757, %v3201
      %3203 = vdwg.mxu0
      %3204 = vmatpush.bf16.msra.mxu0 %v2997
      %3205 = vmatpush.bf16.msra.mxu0 %v2990
      %3206 = vmatpush.bf16.msra.mxu0 %v2983
      %3207 = vmatpush.bf16.msra.mxu0 %v2976
      %3208 = vmatpush.bf16.msra.mxu0 %v2969
      %3209 = vmatpush.bf16.msra.mxu0 %v2962
      %3210 = vmatpush.bf16.msra.mxu0 %v2955
      %3211 = vmatpush.bf16.msra.mxu0 %v2948
      %3212 = vmatmul.bf16.gmra.mxu0 %v2681
      %v3213 = vpop.f32.mrf.mxu0
      %v3214 = vadd.f32 %v2758, %v3213
      %v3215 = vpop.f32.mrf.mxu0
      %v3216 = vadd.f32 %v2758, %v3215
      %3217 = vmatmul.bf16.gmra.mxu0 %v2682
      %v3218 = vpop.f32.mrf.mxu0
      %v3219 = vadd.f32 %v2758, %v3218
      %v3220 = vpop.f32.mrf.mxu0
      %v3221 = vadd.f32 %v2758, %v3220
      %3222 = vmatmul.bf16.gmra.mxu0 %v2683
      %v3223 = vpop.f32.mrf.mxu0
      %v3224 = vadd.f32 %v2758, %v3223
      %v3225 = vpop.f32.mrf.mxu0
      %v3226 = vadd.f32 %v2758, %v3225
      %3227 = vmatmul.bf16.gmra.mxu0 %v2684
      %v3228 = vpop.f32.mrf.mxu0
      %v3229 = vadd.f32 %v2758, %v3228
      %v3230 = vpop.f32.mrf.mxu0
      %v3231 = vadd.f32 %v2758, %v3230
      %3232 = vmatmul.bf16.gmra.mxu0 %v2685
      %v3233 = vpop.f32.mrf.mxu0
      %v3234 = vadd.f32 %v2758, %v3233
      %v3235 = vpop.f32.mrf.mxu0
      %v3236 = vadd.f32 %v2758, %v3235
      %3237 = vmatmul.bf16.gmra.mxu0 %v2686
      %v3238 = vpop.f32.mrf.mxu0
      %v3239 = vadd.f32 %v2758, %v3238
      %v3240 = vpop.f32.mrf.mxu0
      %v3241 = vadd.f32 %v2758, %v3240
      %3242 = vmatmul.bf16.gmra.mxu0 %v2687
      %v3243 = vpop.f32.mrf.mxu0
      %v3244 = vadd.f32 %v2758, %v3243
      %v3245 = vpop.f32.mrf.mxu0
      %v3246 = vadd.f32 %v2758, %v3245
      %3247 = vmatmul.bf16.gmra.mxu0 %v2688
      %v3248 = vpop.f32.mrf.mxu0
      %v3249 = vadd.f32 %v2758, %v3248
      %v3250 = vpop.f32.mrf.mxu0
      %v3251 = vadd.f32 %v2758, %v3250
      %3252 = vdwg.mxu0
      %3253 = vmatpush.bf16.msra.mxu0 %v2998
      %3254 = vmatpush.bf16.msra.mxu0 %v2991
      %3255 = vmatpush.bf16.msra.mxu0 %v2984
      %3256 = vmatpush.bf16.msra.mxu0 %v2977
      %3257 = vmatpush.bf16.msra.mxu0 %v2970
      %3258 = vmatpush.bf16.msra.mxu0 %v2963
      %3259 = vmatpush.bf16.msra.mxu0 %v2956
      %3260 = vmatpush.bf16.msra.mxu0 %v2949
      %3261 = vmatmul.bf16.gmra.mxu0 %v2681
      %v3262 = vpop.f32.mrf.mxu0
      %v3263 = vadd.f32 %v2759, %v3262
      %v3264 = vpop.f32.mrf.mxu0
      %v3265 = vadd.f32 %v2759, %v3264
      %3266 = vmatmul.bf16.gmra.mxu0 %v2682
      %v3267 = vpop.f32.mrf.mxu0
      %v3268 = vadd.f32 %v2759, %v3267
      %v3269 = vpop.f32.mrf.mxu0
      %v3270 = vadd.f32 %v2759, %v3269
      %3271 = vmatmul.bf16.gmra.mxu0 %v2683
      %v3272 = vpop.f32.mrf.mxu0
      %v3273 = vadd.f32 %v2759, %v3272
      %v3274 = vpop.f32.mrf.mxu0
      %v3275 = vadd.f32 %v2759, %v3274
      %3276 = vmatmul.bf16.gmra.mxu0 %v2684
      %v3277 = vpop.f32.mrf.mxu0
      %v3278 = vadd.f32 %v2759, %v3277
      %v3279 = vpop.f32.mrf.mxu0
      %v3280 = vadd.f32 %v2759, %v3279
      %3281 = vmatmul.bf16.gmra.mxu0 %v2685
      %v3282 = vpop.f32.mrf.mxu0
      %v3283 = vadd.f32 %v2759, %v3282
      %v3284 = vpop.f32.mrf.mxu0
      %v3285 = vadd.f32 %v2759, %v3284
      %3286 = vmatmul.bf16.gmra.mxu0 %v2686
      %v3287 = vpop.f32.mrf.mxu0
      %v3288 = vadd.f32 %v2759, %v3287
      %v3289 = vpop.f32.mrf.mxu0
      %v3290 = vadd.f32 %v2759, %v3289
      %3291 = vmatmul.bf16.gmra.mxu0 %v2687
      %v3292 = vpop.f32.mrf.mxu0
      %v3293 = vadd.f32 %v2759, %v3292
      %v3294 = vpop.f32.mrf.mxu0
      %v3295 = vadd.f32 %v2759, %v3294
      %3296 = vmatmul.bf16.gmra.mxu0 %v2688
      %v3297 = vpop.f32.mrf.mxu0
      %v3298 = vadd.f32 %v2759, %v3297
      %v3299 = vpop.f32.mrf.mxu0
      %v3300 = vadd.f32 %v2759, %v3299
      %3301 = vdwg.mxu0
      %3302 = vmatpush.bf16.msra.mxu0 %v2999
      %3303 = vmatpush.bf16.msra.mxu0 %v2992
      %3304 = vmatpush.bf16.msra.mxu0 %v2985
      %3305 = vmatpush.bf16.msra.mxu0 %v2978
      %3306 = vmatpush.bf16.msra.mxu0 %v2971
      %3307 = vmatpush.bf16.msra.mxu0 %v2964
      %3308 = vmatpush.bf16.msra.mxu0 %v2957
      %3309 = vmatpush.bf16.msra.mxu0 %v2950
      %3310 = vmatmul.bf16.gmra.mxu0 %v2681
      %v3311 = vpop.f32.mrf.mxu0
      %v3312 = vadd.f32 %v2760, %v3311
      %v3313 = vpop.f32.mrf.mxu0
      %v3314 = vadd.f32 %v2760, %v3313
      %3315 = vmatmul.bf16.gmra.mxu0 %v2682
      %v3316 = vpop.f32.mrf.mxu0
      %v3317 = vadd.f32 %v2760, %v3316
      %v3318 = vpop.f32.mrf.mxu0
      %v3319 = vadd.f32 %v2760, %v3318
      %3320 = vmatmul.bf16.gmra.mxu0 %v2683
      %v3321 = vpop.f32.mrf.mxu0
      %v3322 = vadd.f32 %v2760, %v3321
      %v3323 = vpop.f32.mrf.mxu0
      %v3324 = vadd.f32 %v2760, %v3323
      %3325 = vmatmul.bf16.gmra.mxu0 %v2684
      %v3326 = vpop.f32.mrf.mxu0
      %v3327 = vadd.f32 %v2760, %v3326
      %v3328 = vpop.f32.mrf.mxu0
      %v3329 = vadd.f32 %v2760, %v3328
      %3330 = vmatmul.bf16.gmra.mxu0 %v2685
      %v3331 = vpop.f32.mrf.mxu0
      %v3332 = vadd.f32 %v2760, %v3331
      %v3333 = vpop.f32.mrf.mxu0
      %v3334 = vadd.f32 %v2760, %v3333
      %3335 = vmatmul.bf16.gmra.mxu0 %v2686
      %v3336 = vpop.f32.mrf.mxu0
      %v3337 = vadd.f32 %v2760, %v3336
      %v3338 = vpop.f32.mrf.mxu0
      %v3339 = vadd.f32 %v2760, %v3338
      %3340 = vmatmul.bf16.gmra.mxu0 %v2687
      %v3341 = vpop.f32.mrf.mxu0
      %v3342 = vadd.f32 %v2760, %v3341
      %v3343 = vpop.f32.mrf.mxu0
      %v3344 = vadd.f32 %v2760, %v3343
      %3345 = vmatmul.bf16.gmra.mxu0 %v2688
      %v3346 = vpop.f32.mrf.mxu0
      %v3347 = vadd.f32 %v2760, %v3346
      %v3348 = vpop.f32.mrf.mxu0
      %v3349 = vadd.f32 %v2760, %v3348
      %3350 = vdwg.mxu0
      %3351 = vmatpush.bf16.msra.mxu0 %v3000
      %3352 = vmatpush.bf16.msra.mxu0 %v2993
      %3353 = vmatpush.bf16.msra.mxu0 %v2986
      %3354 = vmatpush.bf16.msra.mxu0 %v2979
      %3355 = vmatpush.bf16.msra.mxu0 %v2972
      %3356 = vmatpush.bf16.msra.mxu0 %v2965
      %3357 = vmatpush.bf16.msra.mxu0 %v2958
      %3358 = vmatpush.bf16.msra.mxu0 %v2951
      %3359 = vmatmul.bf16.gmra.mxu0 %v2681
      %v3360 = vpop.f32.mrf.mxu0
      %v3361 = vadd.f32 %v2761, %v3360
      %v3362 = vpop.f32.mrf.mxu0
      %v3363 = vadd.f32 %v2761, %v3362
      %3364 = vmatmul.bf16.gmra.mxu0 %v2682
      %v3365 = vpop.f32.mrf.mxu0
      %v3366 = vadd.f32 %v2761, %v3365
      %v3367 = vpop.f32.mrf.mxu0
      %v3368 = vadd.f32 %v2761, %v3367
      %3369 = vmatmul.bf16.gmra.mxu0 %v2683
      %v3370 = vpop.f32.mrf.mxu0
      %v3371 = vadd.f32 %v2761, %v3370
      %v3372 = vpop.f32.mrf.mxu0
      %v3373 = vadd.f32 %v2761, %v3372
      %3374 = vmatmul.bf16.gmra.mxu0 %v2684
      %v3375 = vpop.f32.mrf.mxu0
      %v3376 = vadd.f32 %v2761, %v3375
      %v3377 = vpop.f32.mrf.mxu0
      %v3378 = vadd.f32 %v2761, %v3377
      %3379 = vmatmul.bf16.gmra.mxu0 %v2685
      %v3380 = vpop.f32.mrf.mxu0
      %v3381 = vadd.f32 %v2761, %v3380
      %v3382 = vpop.f32.mrf.mxu0
      %v3383 = vadd.f32 %v2761, %v3382
      %3384 = vmatmul.bf16.gmra.mxu0 %v2686
      %v3385 = vpop.f32.mrf.mxu0
      %v3386 = vadd.f32 %v2761, %v3385
      %v3387 = vpop.f32.mrf.mxu0
      %v3388 = vadd.f32 %v2761, %v3387
      %3389 = vmatmul.bf16.gmra.mxu0 %v2687
      %v3390 = vpop.f32.mrf.mxu0
      %v3391 = vadd.f32 %v2761, %v3390
      %v3392 = vpop.f32.mrf.mxu0
      %v3393 = vadd.f32 %v2761, %v3392
      %3394 = vmatmul.bf16.gmra.mxu0 %v2688
      %v3395 = vpop.f32.mrf.mxu0
      %v3396 = vadd.f32 %v2761, %v3395
      %v3397 = vpop.f32.mrf.mxu0
      %v3398 = vadd.f32 %v2761, %v3397
      %3399 = vdwg.mxu0
      %v3400 = vxor.u32 %v3067, 2147483648
      %v3401 = vxor.u32 %v3116, 2147483648
      %v3402 = vxor.u32 %v3165, 2147483648
      %v3403 = vxor.u32 %v3214, 2147483648
      %v3404 = vxor.u32 %v3263, 2147483648
      %v3405 = vxor.u32 %v3312, 2147483648
      %v3406 = vxor.u32 %v3361, 2147483648
      %v3407 = vxor.u32 %v3069, 2147483648
      %v3408 = vxor.u32 %v3118, 2147483648
      %v3409 = vxor.u32 %v3167, 2147483648
      %v3410 = vxor.u32 %v3216, 2147483648
      %v3411 = vxor.u32 %v3265, 2147483648
      %v3412 = vxor.u32 %v3314, 2147483648
      %v3413 = vxor.u32 %v3363, 2147483648
      %v3414 = vxor.u32 %v3072, 2147483648
      %v3415 = vxor.u32 %v3121, 2147483648
      %v3416 = vxor.u32 %v3170, 2147483648
      %v3417 = vxor.u32 %v3219, 2147483648
      %v3418 = vxor.u32 %v3268, 2147483648
      %v3419 = vxor.u32 %v3317, 2147483648
      %v3420 = vxor.u32 %v3366, 2147483648
      %v3421 = vxor.u32 %v3074, 2147483648
      %v3422 = vxor.u32 %v3123, 2147483648
      %v3423 = vxor.u32 %v3172, 2147483648
      %v3424 = vxor.u32 %v3221, 2147483648
      %v3425 = vxor.u32 %v3270, 2147483648
      %v3426 = vxor.u32 %v3319, 2147483648
      %v3427 = vxor.u32 %v3368, 2147483648
      %v3428 = vxor.u32 %v3077, 2147483648
      %v3429 = vxor.u32 %v3126, 2147483648
      %v3430 = vxor.u32 %v3175, 2147483648
      %v3431 = vxor.u32 %v3224, 2147483648
      %v3432 = vxor.u32 %v3273, 2147483648
      %v3433 = vxor.u32 %v3322, 2147483648
      %v3434 = vxor.u32 %v3371, 2147483648
      %v3435 = vxor.u32 %v3079, 2147483648
      %v3436 = vxor.u32 %v3128, 2147483648
      %v3437 = vxor.u32 %v3177, 2147483648
      %v3438 = vxor.u32 %v3226, 2147483648
      %v3439 = vxor.u32 %v3275, 2147483648
      %v3440 = vxor.u32 %v3324, 2147483648
      %v3441 = vxor.u32 %v3373, 2147483648
      %v3442 = vxor.u32 %v3082, 2147483648
      %v3443 = vxor.u32 %v3131, 2147483648
      %v3444 = vxor.u32 %v3180, 2147483648
      %v3445 = vxor.u32 %v3229, 2147483648
      %v3446 = vxor.u32 %v3278, 2147483648
      %v3447 = vxor.u32 %v3327, 2147483648
      %v3448 = vxor.u32 %v3376, 2147483648
      %v3449 = vxor.u32 %v3084, 2147483648
      %v3450 = vxor.u32 %v3133, 2147483648
      %v3451 = vxor.u32 %v3182, 2147483648
      %v3452 = vxor.u32 %v3231, 2147483648
      %v3453 = vxor.u32 %v3280, 2147483648
      %v3454 = vxor.u32 %v3329, 2147483648
      %v3455 = vxor.u32 %v3378, 2147483648
      %v3456 = vxor.u32 %v3087, 2147483648
      %v3457 = vxor.u32 %v3136, 2147483648
      %v3458 = vxor.u32 %v3185, 2147483648
      %v3459 = vxor.u32 %v3234, 2147483648
      %v3460 = vxor.u32 %v3283, 2147483648
      %v3461 = vxor.u32 %v3332, 2147483648
      %v3462 = vxor.u32 %v3381, 2147483648
      %v3463 = vxor.u32 %v3089, 2147483648
      %v3464 = vxor.u32 %v3138, 2147483648
      %v3465 = vxor.u32 %v3187, 2147483648
      %v3466 = vxor.u32 %v3236, 2147483648
      %v3467 = vxor.u32 %v3285, 2147483648
      %v3468 = vxor.u32 %v3334, 2147483648
      %v3469 = vxor.u32 %v3383, 2147483648
      %v3470 = vxor.u32 %v3092, 2147483648
      %v3471 = vxor.u32 %v3141, 2147483648
      %v3472 = vxor.u32 %v3190, 2147483648
      %v3473 = vxor.u32 %v3239, 2147483648
      %v3474 = vxor.u32 %v3288, 2147483648
      %v3475 = vxor.u32 %v3337, 2147483648
      %v3476 = vxor.u32 %v3386, 2147483648
      %v3477 = vxor.u32 %v3094, 2147483648
      %v3478 = vxor.u32 %v3143, 2147483648
      %v3479 = vxor.u32 %v3192, 2147483648
      %v3480 = vxor.u32 %v3241, 2147483648
      %v3481 = vxor.u32 %v3290, 2147483648
      %v3482 = vxor.u32 %v3339, 2147483648
      %v3483 = vxor.u32 %v3388, 2147483648
      %v3484 = vxor.u32 %v3097, 2147483648
      %v3485 = vxor.u32 %v3146, 2147483648
      %v3486 = vxor.u32 %v3195, 2147483648
      %v3487 = vxor.u32 %v3244, 2147483648
      %v3488 = vxor.u32 %v3293, 2147483648
      %v3489 = vxor.u32 %v3342, 2147483648
      %v3490 = vxor.u32 %v3391, 2147483648
      %v3491 = vxor.u32 %v3099, 2147483648
      %v3492 = vxor.u32 %v3148, 2147483648
      %v3493 = vxor.u32 %v3197, 2147483648
      %v3494 = vxor.u32 %v3246, 2147483648
      %v3495 = vxor.u32 %v3295, 2147483648
      %v3496 = vxor.u32 %v3344, 2147483648
      %v3497 = vxor.u32 %v3393, 2147483648
      %v3498 = vxor.u32 %v3102, 2147483648
      %v3499 = vxor.u32 %v3151, 2147483648
      %v3500 = vxor.u32 %v3200, 2147483648
      %v3501 = vxor.u32 %v3249, 2147483648
      %v3502 = vxor.u32 %v3298, 2147483648
      %v3503 = vxor.u32 %v3347, 2147483648
      %v3504 = vxor.u32 %v3396, 2147483648
      %v3505 = vxor.u32 %v3104, 2147483648
      %v3506 = vxor.u32 %v3153, 2147483648
      %v3507 = vxor.u32 %v3202, 2147483648
      %v3508 = vxor.u32 %v3251, 2147483648
      %v3509 = vxor.u32 %v3300, 2147483648
      %v3510 = vxor.u32 %v3349, 2147483648
      %v3511 = vxor.u32 %v3398, 2147483648
      %v3512 = vmul.f32 %v3400, 1.442695
      %v3513 = vpow.pop %v3512
      %v3514 = vmul.f32 %v3401, 1.442695
      %v3515 = vpow.pop %v3514
      %v3516 = vmul.f32 %v3402, 1.442695
      %v3517 = vpow.pop %v3516
      %v3518 = vmul.f32 %v3403, 1.442695
      %v3519 = vpow.pop %v3518
      %v3520 = vmul.f32 %v3404, 1.442695
      %v3521 = vpow.pop %v3520
      %v3522 = vmul.f32 %v3405, 1.442695
      %v3523 = vpow.pop %v3522
      %v3524 = vmul.f32 %v3406, 1.442695
      %v3525 = vpow.pop %v3524
      %v3526 = vmul.f32 %v3407, 1.442695
      %v3527 = vpow.pop %v3526
      %v3528 = vmul.f32 %v3408, 1.442695
      %v3529 = vpow.pop %v3528
      %v3530 = vmul.f32 %v3409, 1.442695
      %v3531 = vpow.pop %v3530
      %v3532 = vmul.f32 %v3410, 1.442695
      %v3533 = vpow.pop %v3532
      %v3534 = vmul.f32 %v3411, 1.442695
      %v3535 = vpow.pop %v3534
      %v3536 = vmul.f32 %v3412, 1.442695
      %v3537 = vpow.pop %v3536
      %v3538 = vmul.f32 %v3413, 1.442695
      %v3539 = vpow.pop %v3538
      %v3540 = vmul.f32 %v3414, 1.442695
      %v3541 = vpow.pop %v3540
      %v3542 = vmul.f32 %v3415, 1.442695
      %v3543 = vpow.pop %v3542
      %v3544 = vmul.f32 %v3416, 1.442695
      %v3545 = vpow.pop %v3544
      %v3546 = vmul.f32 %v3417, 1.442695
      %v3547 = vpow.pop %v3546
      %v3548 = vmul.f32 %v3418, 1.442695
      %v3549 = vpow.pop %v3548
      %v3550 = vmul.f32 %v3419, 1.442695
      %v3551 = vpow.pop %v3550
      %v3552 = vmul.f32 %v3420, 1.442695
      %v3553 = vpow.pop %v3552
      %v3554 = vmul.f32 %v3421, 1.442695
      %v3555 = vpow.pop %v3554
      %v3556 = vmul.f32 %v3422, 1.442695
      %v3557 = vpow.pop %v3556
      %v3558 = vmul.f32 %v3423, 1.442695
      %v3559 = vpow.pop %v3558
      %v3560 = vmul.f32 %v3424, 1.442695
      %v3561 = vpow.pop %v3560
      %v3562 = vmul.f32 %v3425, 1.442695
      %v3563 = vpow.pop %v3562
      %v3564 = vmul.f32 %v3426, 1.442695
      %v3565 = vpow.pop %v3564
      %v3566 = vmul.f32 %v3427, 1.442695
      %v3567 = vpow.pop %v3566
      %v3568 = vmul.f32 %v3428, 1.442695
      %v3569 = vpow.pop %v3568
      %v3570 = vmul.f32 %v3429, 1.442695
      %v3571 = vpow.pop %v3570
      %v3572 = vmul.f32 %v3430, 1.442695
      %v3573 = vpow.pop %v3572
      %v3574 = vmul.f32 %v3431, 1.442695
      %v3575 = vpow.pop %v3574
      %v3576 = vmul.f32 %v3432, 1.442695
      %v3577 = vpow.pop %v3576
      %v3578 = vmul.f32 %v3433, 1.442695
      %v3579 = vpow.pop %v3578
      %v3580 = vmul.f32 %v3434, 1.442695
      %v3581 = vpow.pop %v3580
      %v3582 = vmul.f32 %v3435, 1.442695
      %v3583 = vpow.pop %v3582
      %v3584 = vmul.f32 %v3436, 1.442695
      %v3585 = vpow.pop %v3584
      %v3586 = vmul.f32 %v3437, 1.442695
      %v3587 = vpow.pop %v3586
      %v3588 = vmul.f32 %v3438, 1.442695
      %v3589 = vpow.pop %v3588
      %v3590 = vmul.f32 %v3439, 1.442695
      %v3591 = vpow.pop %v3590
      %v3592 = vmul.f32 %v3440, 1.442695
      %v3593 = vpow.pop %v3592
      %v3594 = vmul.f32 %v3441, 1.442695
      %v3595 = vpow.pop %v3594
      %v3596 = vmul.f32 %v3442, 1.442695
      %v3597 = vpow.pop %v3596
      %v3598 = vmul.f32 %v3443, 1.442695
      %v3599 = vpow.pop %v3598
      %v3600 = vmul.f32 %v3444, 1.442695
      %v3601 = vpow.pop %v3600
      %v3602 = vmul.f32 %v3445, 1.442695
      %v3603 = vpow.pop %v3602
      %v3604 = vmul.f32 %v3446, 1.442695
      %v3605 = vpow.pop %v3604
      %v3606 = vmul.f32 %v3447, 1.442695
      %v3607 = vpow.pop %v3606
      %v3608 = vmul.f32 %v3448, 1.442695
      %v3609 = vpow.pop %v3608
      %v3610 = vmul.f32 %v3449, 1.442695
      %v3611 = vpow.pop %v3610
      %v3612 = vmul.f32 %v3450, 1.442695
      %v3613 = vpow.pop %v3612
      %v3614 = vmul.f32 %v3451, 1.442695
      %v3615 = vpow.pop %v3614
      %v3616 = vmul.f32 %v3452, 1.442695
      %v3617 = vpow.pop %v3616
      %v3618 = vmul.f32 %v3453, 1.442695
      %v3619 = vpow.pop %v3618
      %v3620 = vmul.f32 %v3454, 1.442695
      %v3621 = vpow.pop %v3620
      %v3622 = vmul.f32 %v3455, 1.442695
      %v3623 = vpow.pop %v3622
      %v3624 = vmul.f32 %v3456, 1.442695
      %v3625 = vpow.pop %v3624
      %v3626 = vmul.f32 %v3457, 1.442695
      %v3627 = vpow.pop %v3626
      %v3628 = vmul.f32 %v3458, 1.442695
      %v3629 = vpow.pop %v3628
      %v3630 = vmul.f32 %v3459, 1.442695
      %v3631 = vpow.pop %v3630
      %v3632 = vmul.f32 %v3460, 1.442695
      %v3633 = vpow.pop %v3632
      %v3634 = vmul.f32 %v3461, 1.442695
      %v3635 = vpow.pop %v3634
      %v3636 = vmul.f32 %v3462, 1.442695
      %v3637 = vpow.pop %v3636
      %v3638 = vmul.f32 %v3463, 1.442695
      %v3639 = vpow.pop %v3638
      %v3640 = vmul.f32 %v3464, 1.442695
      %v3641 = vpow.pop %v3640
      %v3642 = vmul.f32 %v3465, 1.442695
      %v3643 = vpow.pop %v3642
      %v3644 = vmul.f32 %v3466, 1.442695
      %v3645 = vpow.pop %v3644
      %v3646 = vmul.f32 %v3467, 1.442695
      %v3647 = vpow.pop %v3646
      %v3648 = vmul.f32 %v3468, 1.442695
      %v3649 = vpow.pop %v3648
      %v3650 = vmul.f32 %v3469, 1.442695
      %v3651 = vpow.pop %v3650
      %v3652 = vmul.f32 %v3470, 1.442695
      %v3653 = vpow.pop %v3652
      %v3654 = vmul.f32 %v3471, 1.442695
      %v3655 = vpow.pop %v3654
      %v3656 = vmul.f32 %v3472, 1.442695
      %v3657 = vpow.pop %v3656
      %v3658 = vmul.f32 %v3473, 1.442695
      %v3659 = vpow.pop %v3658
      %v3660 = vmul.f32 %v3474, 1.442695
      %v3661 = vpow.pop %v3660
      %v3662 = vmul.f32 %v3475, 1.442695
      %v3663 = vpow.pop %v3662
      %v3664 = vmul.f32 %v3476, 1.442695
      %v3665 = vpow.pop %v3664
      %v3666 = vmul.f32 %v3477, 1.442695
      %v3667 = vpow.pop %v3666
      %v3668 = vmul.f32 %v3478, 1.442695
      %v3669 = vpow.pop %v3668
      %v3670 = vmul.f32 %v3479, 1.442695
      %v3671 = vpow.pop %v3670
      %v3672 = vmul.f32 %v3480, 1.442695
      %v3673 = vpow.pop %v3672
      %v3674 = vmul.f32 %v3481, 1.442695
      %v3675 = vpow.pop %v3674
      %v3676 = vmul.f32 %v3482, 1.442695
      %v3677 = vpow.pop %v3676
      %v3678 = vmul.f32 %v3483, 1.442695
      %v3679 = vpow.pop %v3678
      %v3680 = vmul.f32 %v3484, 1.442695
      %v3681 = vpow.pop %v3680
      %v3682 = vmul.f32 %v3485, 1.442695
      %v3683 = vpow.pop %v3682
      %v3684 = vmul.f32 %v3486, 1.442695
      %v3685 = vpow.pop %v3684
      %v3686 = vmul.f32 %v3487, 1.442695
      %v3687 = vpow.pop %v3686
      %v3688 = vmul.f32 %v3488, 1.442695
      %v3689 = vpow.pop %v3688
      %v3690 = vmul.f32 %v3489, 1.442695
      %v3691 = vpow.pop %v3690
      %v3692 = vmul.f32 %v3490, 1.442695
      %v3693 = vpow.pop %v3692
      %v3694 = vmul.f32 %v3491, 1.442695
      %v3695 = vpow.pop %v3694
      %v3696 = vmul.f32 %v3492, 1.442695
      %v3697 = vpow.pop %v3696
      %v3698 = vmul.f32 %v3493, 1.442695
      %v3699 = vpow.pop %v3698
      %v3700 = vmul.f32 %v3494, 1.442695
      %v3701 = vpow.pop %v3700
      %v3702 = vmul.f32 %v3495, 1.442695
      %v3703 = vpow.pop %v3702
      %v3704 = vmul.f32 %v3496, 1.442695
      %v3705 = vpow.pop %v3704
      %v3706 = vmul.f32 %v3497, 1.442695
      %v3707 = vpow.pop %v3706
      %v3708 = vmul.f32 %v3498, 1.442695
      %v3709 = vpow.pop %v3708
      %v3710 = vmul.f32 %v3499, 1.442695
      %v3711 = vpow.pop %v3710
      %v3712 = vmul.f32 %v3500, 1.442695
      %v3713 = vpow.pop %v3712
      %v3714 = vmul.f32 %v3501, 1.442695
      %v3715 = vpow.pop %v3714
      %v3716 = vmul.f32 %v3502, 1.442695
      %v3717 = vpow.pop %v3716
      %v3718 = vmul.f32 %v3503, 1.442695
      %v3719 = vpow.pop %v3718
      %v3720 = vmul.f32 %v3504, 1.442695
      %v3721 = vpow.pop %v3720
      %v3722 = vmul.f32 %v3505, 1.442695
      %v3723 = vpow.pop %v3722
      %v3724 = vmul.f32 %v3506, 1.442695
      %v3725 = vpow.pop %v3724
      %v3726 = vmul.f32 %v3507, 1.442695
      %v3727 = vpow.pop %v3726
      %v3728 = vmul.f32 %v3508, 1.442695
      %v3729 = vpow.pop %v3728
      %v3730 = vmul.f32 %v3509, 1.442695
      %v3731 = vpow.pop %v3730
      %v3732 = vmul.f32 %v3510, 1.442695
      %v3733 = vpow.pop %v3732
      %v3734 = vmul.f32 %v3511, 1.442695
      %v3735 = vpow.pop %v3734
      %v3736 = vadd.f32 %v3513, 1.0
      %v3737 = vadd.f32 %v3515, 1.0
      %v3738 = vadd.f32 %v3517, 1.0
      %v3739 = vadd.f32 %v3519, 1.0
      %v3740 = vadd.f32 %v3521, 1.0
      %v3741 = vadd.f32 %v3523, 1.0
      %v3742 = vadd.f32 %v3525, 1.0
      %v3743 = vadd.f32 %v3527, 1.0
      %v3744 = vadd.f32 %v3529, 1.0
      %v3745 = vadd.f32 %v3531, 1.0
      %v3746 = vadd.f32 %v3533, 1.0
      %v3747 = vadd.f32 %v3535, 1.0
      %v3748 = vadd.f32 %v3537, 1.0
      %v3749 = vadd.f32 %v3539, 1.0
      %v3750 = vadd.f32 %v3541, 1.0
      %v3751 = vadd.f32 %v3543, 1.0
      %v3752 = vadd.f32 %v3545, 1.0
      %v3753 = vadd.f32 %v3547, 1.0
      %v3754 = vadd.f32 %v3549, 1.0
      %v3755 = vadd.f32 %v3551, 1.0
      %v3756 = vadd.f32 %v3553, 1.0
      %v3757 = vadd.f32 %v3555, 1.0
      %v3758 = vadd.f32 %v3557, 1.0
      %v3759 = vadd.f32 %v3559, 1.0
      %v3760 = vadd.f32 %v3561, 1.0
      %v3761 = vadd.f32 %v3563, 1.0
      %v3762 = vadd.f32 %v3565, 1.0
      %v3763 = vadd.f32 %v3567, 1.0
      %v3764 = vadd.f32 %v3569, 1.0
      %v3765 = vadd.f32 %v3571, 1.0
      %v3766 = vadd.f32 %v3573, 1.0
      %v3767 = vadd.f32 %v3575, 1.0
      %v3768 = vadd.f32 %v3577, 1.0
      %v3769 = vadd.f32 %v3579, 1.0
      %v3770 = vadd.f32 %v3581, 1.0
      %v3771 = vadd.f32 %v3583, 1.0
      %v3772 = vadd.f32 %v3585, 1.0
      %v3773 = vadd.f32 %v3587, 1.0
      %v3774 = vadd.f32 %v3589, 1.0
      %v3775 = vadd.f32 %v3591, 1.0
      %v3776 = vadd.f32 %v3593, 1.0
      %v3777 = vadd.f32 %v3595, 1.0
      %v3778 = vadd.f32 %v3597, 1.0
      %v3779 = vadd.f32 %v3599, 1.0
      %v3780 = vadd.f32 %v3601, 1.0
      %v3781 = vadd.f32 %v3603, 1.0
      %v3782 = vadd.f32 %v3605, 1.0
      %v3783 = vadd.f32 %v3607, 1.0
      %v3784 = vadd.f32 %v3609, 1.0
      %v3785 = vadd.f32 %v3611, 1.0
      %v3786 = vadd.f32 %v3613, 1.0
      %v3787 = vadd.f32 %v3615, 1.0
      %v3788 = vadd.f32 %v3617, 1.0
      %v3789 = vadd.f32 %v3619, 1.0
      %v3790 = vadd.f32 %v3621, 1.0
      %v3791 = vadd.f32 %v3623, 1.0
      %v3792 = vadd.f32 %v3625, 1.0
      %v3793 = vadd.f32 %v3627, 1.0
      %v3794 = vadd.f32 %v3629, 1.0
      %v3795 = vadd.f32 %v3631, 1.0
      %v3796 = vadd.f32 %v3633, 1.0
      %v3797 = vadd.f32 %v3635, 1.0
      %v3798 = vadd.f32 %v3637, 1.0
      %v3799 = vadd.f32 %v3639, 1.0
      %v3800 = vadd.f32 %v3641, 1.0
      %v3801 = vadd.f32 %v3643, 1.0
      %v3802 = vadd.f32 %v3645, 1.0
      %v3803 = vadd.f32 %v3647, 1.0
      %v3804 = vadd.f32 %v3649, 1.0
      %v3805 = vadd.f32 %v3651, 1.0
      %v3806 = vadd.f32 %v3653, 1.0
      %v3807 = vadd.f32 %v3655, 1.0
      %v3808 = vadd.f32 %v3657, 1.0
      %v3809 = vadd.f32 %v3659, 1.0
      %v3810 = vadd.f32 %v3661, 1.0
      %v3811 = vadd.f32 %v3663, 1.0
      %v3812 = vadd.f32 %v3665, 1.0
      %v3813 = vadd.f32 %v3667, 1.0
      %v3814 = vadd.f32 %v3669, 1.0
      %v3815 = vadd.f32 %v3671, 1.0
      %v3816 = vadd.f32 %v3673, 1.0
      %v3817 = vadd.f32 %v3675, 1.0
      %v3818 = vadd.f32 %v3677, 1.0
      %v3819 = vadd.f32 %v3679, 1.0
      %v3820 = vadd.f32 %v3681, 1.0
      %v3821 = vadd.f32 %v3683, 1.0
      %v3822 = vadd.f32 %v3685, 1.0
      %v3823 = vadd.f32 %v3687, 1.0
      %v3824 = vadd.f32 %v3689, 1.0
      %v3825 = vadd.f32 %v3691, 1.0
      %v3826 = vadd.f32 %v3693, 1.0
      %v3827 = vadd.f32 %v3695, 1.0
      %v3828 = vadd.f32 %v3697, 1.0
      %v3829 = vadd.f32 %v3699, 1.0
      %v3830 = vadd.f32 %v3701, 1.0
      %v3831 = vadd.f32 %v3703, 1.0
      %v3832 = vadd.f32 %v3705, 1.0
      %v3833 = vadd.f32 %v3707, 1.0
      %v3834 = vadd.f32 %v3709, 1.0
      %v3835 = vadd.f32 %v3711, 1.0
      %v3836 = vadd.f32 %v3713, 1.0
      %v3837 = vadd.f32 %v3715, 1.0
      %v3838 = vadd.f32 %v3717, 1.0
      %v3839 = vadd.f32 %v3719, 1.0
      %v3840 = vadd.f32 %v3721, 1.0
      %v3841 = vadd.f32 %v3723, 1.0
      %v3842 = vadd.f32 %v3725, 1.0
      %v3843 = vadd.f32 %v3727, 1.0
      %v3844 = vadd.f32 %v3729, 1.0
      %v3845 = vadd.f32 %v3731, 1.0
      %v3846 = vadd.f32 %v3733, 1.0
      %v3847 = vadd.f32 %v3735, 1.0
      %v3848 = vrcp.pop %v3736
      %v3849 = vmul.f32 %v3736, %v3848
      %v3850 = vsub.f32 1.0, %v3849
      %v3851 = vmul.f32 %v3848, %v3850
      %v3852 = vadd.f32 %v3848, %v3851
      %vm3853 = vweird.f32 %v3736
      %vm3854 = vweird.f32 %v3848
      %vm3855 = vmor %vm3853, %vm3854
      %v3856 = vsel %vm3855, %v3848, %v3852
      %v3857 = vand.u32 2147483647, %v3736
      %vm3858 = vcmp.eq.f32.partialorder %v3857, 8.507059e+37
      %v3859 = vand.u32 %v3736, 2147483648
      %v3860 = vor.u32 1.1754944e-38, %v3859
      %v3861 = vsel %vm3858, %v3860, %v3856
      %v3862 = vmul.f32 1.0, %v3861
      %v3863 = vrcp.pop %v3737
      %v3864 = vmul.f32 %v3737, %v3863
      %v3865 = vsub.f32 1.0, %v3864
      %v3866 = vmul.f32 %v3863, %v3865
      %v3867 = vadd.f32 %v3863, %v3866
      %vm3868 = vweird.f32 %v3737
      %vm3869 = vweird.f32 %v3863
      %vm3870 = vmor %vm3868, %vm3869
      %v3871 = vsel %vm3870, %v3863, %v3867
      %v3872 = vand.u32 2147483647, %v3737
      %vm3873 = vcmp.eq.f32.partialorder %v3872, 8.507059e+37
      %v3874 = vand.u32 %v3737, 2147483648
      %v3875 = vor.u32 1.1754944e-38, %v3874
      %v3876 = vsel %vm3873, %v3875, %v3871
      %v3877 = vmul.f32 1.0, %v3876
      %v3878 = vrcp.pop %v3738
      %v3879 = vmul.f32 %v3738, %v3878
      %v3880 = vsub.f32 1.0, %v3879
      %v3881 = vmul.f32 %v3878, %v3880
      %v3882 = vadd.f32 %v3878, %v3881
      %vm3883 = vweird.f32 %v3738
      %vm3884 = vweird.f32 %v3878
      %vm3885 = vmor %vm3883, %vm3884
      %v3886 = vsel %vm3885, %v3878, %v3882
      %v3887 = vand.u32 2147483647, %v3738
      %vm3888 = vcmp.eq.f32.partialorder %v3887, 8.507059e+37
      %v3889 = vand.u32 %v3738, 2147483648
      %v3890 = vor.u32 1.1754944e-38, %v3889
      %v3891 = vsel %vm3888, %v3890, %v3886
      %v3892 = vmul.f32 1.0, %v3891
      %v3893 = vrcp.pop %v3739
      %v3894 = vmul.f32 %v3739, %v3893
      %v3895 = vsub.f32 1.0, %v3894
      %v3896 = vmul.f32 %v3893, %v3895
      %v3897 = vadd.f32 %v3893, %v3896
      %vm3898 = vweird.f32 %v3739
      %vm3899 = vweird.f32 %v3893
      %vm3900 = vmor %vm3898, %vm3899
      %v3901 = vsel %vm3900, %v3893, %v3897
      %v3902 = vand.u32 2147483647, %v3739
      %vm3903 = vcmp.eq.f32.partialorder %v3902, 8.507059e+37
      %v3904 = vand.u32 %v3739, 2147483648
      %v3905 = vor.u32 1.1754944e-38, %v3904
      %v3906 = vsel %vm3903, %v3905, %v3901
      %v3907 = vmul.f32 1.0, %v3906
      %v3908 = vrcp.pop %v3740
      %v3909 = vmul.f32 %v3740, %v3908
      %v3910 = vsub.f32 1.0, %v3909
      %v3911 = vmul.f32 %v3908, %v3910
      %v3912 = vadd.f32 %v3908, %v3911
      %vm3913 = vweird.f32 %v3740
      %vm3914 = vweird.f32 %v3908
      %vm3915 = vmor %vm3913, %vm3914
      %v3916 = vsel %vm3915, %v3908, %v3912
      %v3917 = vand.u32 2147483647, %v3740
      %vm3918 = vcmp.eq.f32.partialorder %v3917, 8.507059e+37
      %v3919 = vand.u32 %v3740, 2147483648
      %v3920 = vor.u32 1.1754944e-38, %v3919
      %v3921 = vsel %vm3918, %v3920, %v3916
      %v3922 = vmul.f32 1.0, %v3921
      %v3923 = vrcp.pop %v3741
      %v3924 = vmul.f32 %v3741, %v3923
      %v3925 = vsub.f32 1.0, %v3924
      %v3926 = vmul.f32 %v3923, %v3925
      %v3927 = vadd.f32 %v3923, %v3926
      %vm3928 = vweird.f32 %v3741
      %vm3929 = vweird.f32 %v3923
      %vm3930 = vmor %vm3928, %vm3929
      %v3931 = vsel %vm3930, %v3923, %v3927
      %v3932 = vand.u32 2147483647, %v3741
      %vm3933 = vcmp.eq.f32.partialorder %v3932, 8.507059e+37
      %v3934 = vand.u32 %v3741, 2147483648
      %v3935 = vor.u32 1.1754944e-38, %v3934
      %v3936 = vsel %vm3933, %v3935, %v3931
      %v3937 = vmul.f32 1.0, %v3936
      %v3938 = vrcp.pop %v3742
      %v3939 = vmul.f32 %v3742, %v3938
      %v3940 = vsub.f32 1.0, %v3939
      %v3941 = vmul.f32 %v3938, %v3940
      %v3942 = vadd.f32 %v3938, %v3941
      %vm3943 = vweird.f32 %v3742
      %vm3944 = vweird.f32 %v3938
      %vm3945 = vmor %vm3943, %vm3944
      %v3946 = vsel %vm3945, %v3938, %v3942
      %v3947 = vand.u32 2147483647, %v3742
      %vm3948 = vcmp.eq.f32.partialorder %v3947, 8.507059e+37
      %v3949 = vand.u32 %v3742, 2147483648
      %v3950 = vor.u32 1.1754944e-38, %v3949
      %v3951 = vsel %vm3948, %v3950, %v3946
      %v3952 = vmul.f32 1.0, %v3951
      %v3953 = vrcp.pop %v3743
      %v3954 = vmul.f32 %v3743, %v3953
      %v3955 = vsub.f32 1.0, %v3954
      %v3956 = vmul.f32 %v3953, %v3955
      %v3957 = vadd.f32 %v3953, %v3956
      %vm3958 = vweird.f32 %v3743
      %vm3959 = vweird.f32 %v3953
      %vm3960 = vmor %vm3958, %vm3959
      %v3961 = vsel %vm3960, %v3953, %v3957
      %v3962 = vand.u32 2147483647, %v3743
      %vm3963 = vcmp.eq.f32.partialorder %v3962, 8.507059e+37
      %v3964 = vand.u32 %v3743, 2147483648
      %v3965 = vor.u32 1.1754944e-38, %v3964
      %v3966 = vsel %vm3963, %v3965, %v3961
      %v3967 = vmul.f32 1.0, %v3966
      %v3968 = vrcp.pop %v3744
      %v3969 = vmul.f32 %v3744, %v3968
      %v3970 = vsub.f32 1.0, %v3969
      %v3971 = vmul.f32 %v3968, %v3970
      %v3972 = vadd.f32 %v3968, %v3971
      %vm3973 = vweird.f32 %v3744
      %vm3974 = vweird.f32 %v3968
      %vm3975 = vmor %vm3973, %vm3974
      %v3976 = vsel %vm3975, %v3968, %v3972
      %v3977 = vand.u32 2147483647, %v3744
      %vm3978 = vcmp.eq.f32.partialorder %v3977, 8.507059e+37
      %v3979 = vand.u32 %v3744, 2147483648
      %v3980 = vor.u32 1.1754944e-38, %v3979
      %v3981 = vsel %vm3978, %v3980, %v3976
      %v3982 = vmul.f32 1.0, %v3981
      %v3983 = vrcp.pop %v3745
      %v3984 = vmul.f32 %v3745, %v3983
      %v3985 = vsub.f32 1.0, %v3984
      %v3986 = vmul.f32 %v3983, %v3985
      %v3987 = vadd.f32 %v3983, %v3986
      %vm3988 = vweird.f32 %v3745
      %vm3989 = vweird.f32 %v3983
      %vm3990 = vmor %vm3988, %vm3989
      %v3991 = vsel %vm3990, %v3983, %v3987
      %v3992 = vand.u32 2147483647, %v3745
      %vm3993 = vcmp.eq.f32.partialorder %v3992, 8.507059e+37
      %v3994 = vand.u32 %v3745, 2147483648
      %v3995 = vor.u32 1.1754944e-38, %v3994
      %v3996 = vsel %vm3993, %v3995, %v3991
      %v3997 = vmul.f32 1.0, %v3996
      %v3998 = vrcp.pop %v3746
      %v3999 = vmul.f32 %v3746, %v3998
      %v4000 = vsub.f32 1.0, %v3999
      %v4001 = vmul.f32 %v3998, %v4000
      %v4002 = vadd.f32 %v3998, %v4001
      %vm4003 = vweird.f32 %v3746
      %vm4004 = vweird.f32 %v3998
      %vm4005 = vmor %vm4003, %vm4004
      %v4006 = vsel %vm4005, %v3998, %v4002
      %v4007 = vand.u32 2147483647, %v3746
      %vm4008 = vcmp.eq.f32.partialorder %v4007, 8.507059e+37
      %v4009 = vand.u32 %v3746, 2147483648
      %v4010 = vor.u32 1.1754944e-38, %v4009
      %v4011 = vsel %vm4008, %v4010, %v4006
      %v4012 = vmul.f32 1.0, %v4011
      %v4013 = vrcp.pop %v3747
      %v4014 = vmul.f32 %v3747, %v4013
      %v4015 = vsub.f32 1.0, %v4014
      %v4016 = vmul.f32 %v4013, %v4015
      %v4017 = vadd.f32 %v4013, %v4016
      %vm4018 = vweird.f32 %v3747
      %vm4019 = vweird.f32 %v4013
      %vm4020 = vmor %vm4018, %vm4019
      %v4021 = vsel %vm4020, %v4013, %v4017
      %v4022 = vand.u32 2147483647, %v3747
      %vm4023 = vcmp.eq.f32.partialorder %v4022, 8.507059e+37
      %v4024 = vand.u32 %v3747, 2147483648
      %v4025 = vor.u32 1.1754944e-38, %v4024
      %v4026 = vsel %vm4023, %v4025, %v4021
      %v4027 = vmul.f32 1.0, %v4026
      %v4028 = vrcp.pop %v3748
      %v4029 = vmul.f32 %v3748, %v4028
      %v4030 = vsub.f32 1.0, %v4029
      %v4031 = vmul.f32 %v4028, %v4030
      %v4032 = vadd.f32 %v4028, %v4031
      %vm4033 = vweird.f32 %v3748
      %vm4034 = vweird.f32 %v4028
      %vm4035 = vmor %vm4033, %vm4034
      %v4036 = vsel %vm4035, %v4028, %v4032
      %v4037 = vand.u32 2147483647, %v3748
      %vm4038 = vcmp.eq.f32.partialorder %v4037, 8.507059e+37
      %v4039 = vand.u32 %v3748, 2147483648
      %v4040 = vor.u32 1.1754944e-38, %v4039
      %v4041 = vsel %vm4038, %v4040, %v4036
      %v4042 = vmul.f32 1.0, %v4041
      %v4043 = vrcp.pop %v3749
      %v4044 = vmul.f32 %v3749, %v4043
      %v4045 = vsub.f32 1.0, %v4044
      %v4046 = vmul.f32 %v4043, %v4045
      %v4047 = vadd.f32 %v4043, %v4046
      %vm4048 = vweird.f32 %v3749
      %vm4049 = vweird.f32 %v4043
      %vm4050 = vmor %vm4048, %vm4049
      %v4051 = vsel %vm4050, %v4043, %v4047
      %v4052 = vand.u32 2147483647, %v3749
      %vm4053 = vcmp.eq.f32.partialorder %v4052, 8.507059e+37
      %v4054 = vand.u32 %v3749, 2147483648
      %v4055 = vor.u32 1.1754944e-38, %v4054
      %v4056 = vsel %vm4053, %v4055, %v4051
      %v4057 = vmul.f32 1.0, %v4056
      %v4058 = vrcp.pop %v3750
      %v4059 = vmul.f32 %v3750, %v4058
      %v4060 = vsub.f32 1.0, %v4059
      %v4061 = vmul.f32 %v4058, %v4060
      %v4062 = vadd.f32 %v4058, %v4061
      %vm4063 = vweird.f32 %v3750
      %vm4064 = vweird.f32 %v4058
      %vm4065 = vmor %vm4063, %vm4064
      %v4066 = vsel %vm4065, %v4058, %v4062
      %v4067 = vand.u32 2147483647, %v3750
      %vm4068 = vcmp.eq.f32.partialorder %v4067, 8.507059e+37
      %v4069 = vand.u32 %v3750, 2147483648
      %v4070 = vor.u32 1.1754944e-38, %v4069
      %v4071 = vsel %vm4068, %v4070, %v4066
      %v4072 = vmul.f32 1.0, %v4071
      %v4073 = vrcp.pop %v3751
      %v4074 = vmul.f32 %v3751, %v4073
      %v4075 = vsub.f32 1.0, %v4074
      %v4076 = vmul.f32 %v4073, %v4075
      %v4077 = vadd.f32 %v4073, %v4076
      %vm4078 = vweird.f32 %v3751
      %vm4079 = vweird.f32 %v4073
      %vm4080 = vmor %vm4078, %vm4079
      %v4081 = vsel %vm4080, %v4073, %v4077
      %v4082 = vand.u32 2147483647, %v3751
      %vm4083 = vcmp.eq.f32.partialorder %v4082, 8.507059e+37
      %v4084 = vand.u32 %v3751, 2147483648
      %v4085 = vor.u32 1.1754944e-38, %v4084
      %v4086 = vsel %vm4083, %v4085, %v4081
      %v4087 = vmul.f32 1.0, %v4086
      %v4088 = vrcp.pop %v3752
      %v4089 = vmul.f32 %v3752, %v4088
      %v4090 = vsub.f32 1.0, %v4089
      %v4091 = vmul.f32 %v4088, %v4090
      %v4092 = vadd.f32 %v4088, %v4091
      %vm4093 = vweird.f32 %v3752
      %vm4094 = vweird.f32 %v4088
      %vm4095 = vmor %vm4093, %vm4094
      %v4096 = vsel %vm4095, %v4088, %v4092
      %v4097 = vand.u32 2147483647, %v3752
      %vm4098 = vcmp.eq.f32.partialorder %v4097, 8.507059e+37
      %v4099 = vand.u32 %v3752, 2147483648
      %v4100 = vor.u32 1.1754944e-38, %v4099
      %v4101 = vsel %vm4098, %v4100, %v4096
      %v4102 = vmul.f32 1.0, %v4101
      %v4103 = vrcp.pop %v3753
      %v4104 = vmul.f32 %v3753, %v4103
      %v4105 = vsub.f32 1.0, %v4104
      %v4106 = vmul.f32 %v4103, %v4105
      %v4107 = vadd.f32 %v4103, %v4106
      %vm4108 = vweird.f32 %v3753
      %vm4109 = vweird.f32 %v4103
      %vm4110 = vmor %vm4108, %vm4109
      %v4111 = vsel %vm4110, %v4103, %v4107
      %v4112 = vand.u32 2147483647, %v3753
      %vm4113 = vcmp.eq.f32.partialorder %v4112, 8.507059e+37
      %v4114 = vand.u32 %v3753, 2147483648
      %v4115 = vor.u32 1.1754944e-38, %v4114
      %v4116 = vsel %vm4113, %v4115, %v4111
      %v4117 = vmul.f32 1.0, %v4116
      %v4118 = vrcp.pop %v3754
      %v4119 = vmul.f32 %v3754, %v4118
      %v4120 = vsub.f32 1.0, %v4119
      %v4121 = vmul.f32 %v4118, %v4120
      %v4122 = vadd.f32 %v4118, %v4121
      %vm4123 = vweird.f32 %v3754
      %vm4124 = vweird.f32 %v4118
      %vm4125 = vmor %vm4123, %vm4124
      %v4126 = vsel %vm4125, %v4118, %v4122
      %v4127 = vand.u32 2147483647, %v3754
      %vm4128 = vcmp.eq.f32.partialorder %v4127, 8.507059e+37
      %v4129 = vand.u32 %v3754, 2147483648
      %v4130 = vor.u32 1.1754944e-38, %v4129
      %v4131 = vsel %vm4128, %v4130, %v4126
      %v4132 = vmul.f32 1.0, %v4131
      %v4133 = vrcp.pop %v3755
      %v4134 = vmul.f32 %v3755, %v4133
      %v4135 = vsub.f32 1.0, %v4134
      %v4136 = vmul.f32 %v4133, %v4135
      %v4137 = vadd.f32 %v4133, %v4136
      %vm4138 = vweird.f32 %v3755
      %vm4139 = vweird.f32 %v4133
      %vm4140 = vmor %vm4138, %vm4139
      %v4141 = vsel %vm4140, %v4133, %v4137
      %v4142 = vand.u32 2147483647, %v3755
      %vm4143 = vcmp.eq.f32.partialorder %v4142, 8.507059e+37
      %v4144 = vand.u32 %v3755, 2147483648
      %v4145 = vor.u32 1.1754944e-38, %v4144
      %v4146 = vsel %vm4143, %v4145, %v4141
      %v4147 = vmul.f32 1.0, %v4146
      %v4148 = vrcp.pop %v3756
      %v4149 = vmul.f32 %v3756, %v4148
      %v4150 = vsub.f32 1.0, %v4149
      %v4151 = vmul.f32 %v4148, %v4150
      %v4152 = vadd.f32 %v4148, %v4151
      %vm4153 = vweird.f32 %v3756
      %vm4154 = vweird.f32 %v4148
      %vm4155 = vmor %vm4153, %vm4154
      %v4156 = vsel %vm4155, %v4148, %v4152
      %v4157 = vand.u32 2147483647, %v3756
      %vm4158 = vcmp.eq.f32.partialorder %v4157, 8.507059e+37
      %v4159 = vand.u32 %v3756, 2147483648
      %v4160 = vor.u32 1.1754944e-38, %v4159
      %v4161 = vsel %vm4158, %v4160, %v4156
      %v4162 = vmul.f32 1.0, %v4161
      %v4163 = vrcp.pop %v3757
      %v4164 = vmul.f32 %v3757, %v4163
      %v4165 = vsub.f32 1.0, %v4164
      %v4166 = vmul.f32 %v4163, %v4165
      %v4167 = vadd.f32 %v4163, %v4166
      %vm4168 = vweird.f32 %v3757
      %vm4169 = vweird.f32 %v4163
      %vm4170 = vmor %vm4168, %vm4169
      %v4171 = vsel %vm4170, %v4163, %v4167
      %v4172 = vand.u32 2147483647, %v3757
      %vm4173 = vcmp.eq.f32.partialorder %v4172, 8.507059e+37
      %v4174 = vand.u32 %v3757, 2147483648
      %v4175 = vor.u32 1.1754944e-38, %v4174
      %v4176 = vsel %vm4173, %v4175, %v4171
      %v4177 = vmul.f32 1.0, %v4176
      %v4178 = vrcp.pop %v3758
      %v4179 = vmul.f32 %v3758, %v4178
      %v4180 = vsub.f32 1.0, %v4179
      %v4181 = vmul.f32 %v4178, %v4180
      %v4182 = vadd.f32 %v4178, %v4181
      %vm4183 = vweird.f32 %v3758
      %vm4184 = vweird.f32 %v4178
      %vm4185 = vmor %vm4183, %vm4184
      %v4186 = vsel %vm4185, %v4178, %v4182
      %v4187 = vand.u32 2147483647, %v3758
      %vm4188 = vcmp.eq.f32.partialorder %v4187, 8.507059e+37
      %v4189 = vand.u32 %v3758, 2147483648
      %v4190 = vor.u32 1.1754944e-38, %v4189
      %v4191 = vsel %vm4188, %v4190, %v4186
      %v4192 = vmul.f32 1.0, %v4191
      %v4193 = vrcp.pop %v3759
      %v4194 = vmul.f32 %v3759, %v4193
      %v4195 = vsub.f32 1.0, %v4194
      %v4196 = vmul.f32 %v4193, %v4195
      %v4197 = vadd.f32 %v4193, %v4196
      %vm4198 = vweird.f32 %v3759
      %vm4199 = vweird.f32 %v4193
      %vm4200 = vmor %vm4198, %vm4199
      %v4201 = vsel %vm4200, %v4193, %v4197
      %v4202 = vand.u32 2147483647, %v3759
      %vm4203 = vcmp.eq.f32.partialorder %v4202, 8.507059e+37
      %v4204 = vand.u32 %v3759, 2147483648
      %v4205 = vor.u32 1.1754944e-38, %v4204
      %v4206 = vsel %vm4203, %v4205, %v4201
      %v4207 = vmul.f32 1.0, %v4206
      %v4208 = vrcp.pop %v3760
      %v4209 = vmul.f32 %v3760, %v4208
      %v4210 = vsub.f32 1.0, %v4209
      %v4211 = vmul.f32 %v4208, %v4210
      %v4212 = vadd.f32 %v4208, %v4211
      %vm4213 = vweird.f32 %v3760
      %vm4214 = vweird.f32 %v4208
      %vm4215 = vmor %vm4213, %vm4214
      %v4216 = vsel %vm4215, %v4208, %v4212
      %v4217 = vand.u32 2147483647, %v3760
      %vm4218 = vcmp.eq.f32.partialorder %v4217, 8.507059e+37
      %v4219 = vand.u32 %v3760, 2147483648
      %v4220 = vor.u32 1.1754944e-38, %v4219
      %v4221 = vsel %vm4218, %v4220, %v4216
      %v4222 = vmul.f32 1.0, %v4221
      %v4223 = vrcp.pop %v3761
      %v4224 = vmul.f32 %v3761, %v4223
      %v4225 = vsub.f32 1.0, %v4224
      %v4226 = vmul.f32 %v4223, %v4225
      %v4227 = vadd.f32 %v4223, %v4226
      %vm4228 = vweird.f32 %v3761
      %vm4229 = vweird.f32 %v4223
      %vm4230 = vmor %vm4228, %vm4229
      %v4231 = vsel %vm4230, %v4223, %v4227
      %v4232 = vand.u32 2147483647, %v3761
      %vm4233 = vcmp.eq.f32.partialorder %v4232, 8.507059e+37
      %v4234 = vand.u32 %v3761, 2147483648
      %v4235 = vor.u32 1.1754944e-38, %v4234
      %v4236 = vsel %vm4233, %v4235, %v4231
      %v4237 = vmul.f32 1.0, %v4236
      %v4238 = vrcp.pop %v3762
      %v4239 = vmul.f32 %v3762, %v4238
      %v4240 = vsub.f32 1.0, %v4239
      %v4241 = vmul.f32 %v4238, %v4240
      %v4242 = vadd.f32 %v4238, %v4241
      %vm4243 = vweird.f32 %v3762
      %vm4244 = vweird.f32 %v4238
      %vm4245 = vmor %vm4243, %vm4244
      %v4246 = vsel %vm4245, %v4238, %v4242
      %v4247 = vand.u32 2147483647, %v3762
      %vm4248 = vcmp.eq.f32.partialorder %v4247, 8.507059e+37
      %v4249 = vand.u32 %v3762, 2147483648
      %v4250 = vor.u32 1.1754944e-38, %v4249
      %v4251 = vsel %vm4248, %v4250, %v4246
      %v4252 = vmul.f32 1.0, %v4251
      %v4253 = vrcp.pop %v3763
      %v4254 = vmul.f32 %v3763, %v4253
      %v4255 = vsub.f32 1.0, %v4254
      %v4256 = vmul.f32 %v4253, %v4255
      %v4257 = vadd.f32 %v4253, %v4256
      %vm4258 = vweird.f32 %v3763
      %vm4259 = vweird.f32 %v4253
      %vm4260 = vmor %vm4258, %vm4259
      %v4261 = vsel %vm4260, %v4253, %v4257
      %v4262 = vand.u32 2147483647, %v3763
      %vm4263 = vcmp.eq.f32.partialorder %v4262, 8.507059e+37
      %v4264 = vand.u32 %v3763, 2147483648
      %v4265 = vor.u32 1.1754944e-38, %v4264
      %v4266 = vsel %vm4263, %v4265, %v4261
      %v4267 = vmul.f32 1.0, %v4266
      %v4268 = vrcp.pop %v3764
      %v4269 = vmul.f32 %v3764, %v4268
      %v4270 = vsub.f32 1.0, %v4269
      %v4271 = vmul.f32 %v4268, %v4270
      %v4272 = vadd.f32 %v4268, %v4271
      %vm4273 = vweird.f32 %v3764
      %vm4274 = vweird.f32 %v4268
      %vm4275 = vmor %vm4273, %vm4274
      %v4276 = vsel %vm4275, %v4268, %v4272
      %v4277 = vand.u32 2147483647, %v3764
      %vm4278 = vcmp.eq.f32.partialorder %v4277, 8.507059e+37
      %v4279 = vand.u32 %v3764, 2147483648
      %v4280 = vor.u32 1.1754944e-38, %v4279
      %v4281 = vsel %vm4278, %v4280, %v4276
      %v4282 = vmul.f32 1.0, %v4281
      %v4283 = vrcp.pop %v3765
      %v4284 = vmul.f32 %v3765, %v4283
      %v4285 = vsub.f32 1.0, %v4284
      %v4286 = vmul.f32 %v4283, %v4285
      %v4287 = vadd.f32 %v4283, %v4286
      %vm4288 = vweird.f32 %v3765
      %vm4289 = vweird.f32 %v4283
      %vm4290 = vmor %vm4288, %vm4289
      %v4291 = vsel %vm4290, %v4283, %v4287
      %v4292 = vand.u32 2147483647, %v3765
      %vm4293 = vcmp.eq.f32.partialorder %v4292, 8.507059e+37
      %v4294 = vand.u32 %v3765, 2147483648
      %v4295 = vor.u32 1.1754944e-38, %v4294
      %v4296 = vsel %vm4293, %v4295, %v4291
      %v4297 = vmul.f32 1.0, %v4296
      %v4298 = vrcp.pop %v3766
      %v4299 = vmul.f32 %v3766, %v4298
      %v4300 = vsub.f32 1.0, %v4299
      %v4301 = vmul.f32 %v4298, %v4300
      %v4302 = vadd.f32 %v4298, %v4301
      %vm4303 = vweird.f32 %v3766
      %vm4304 = vweird.f32 %v4298
      %vm4305 = vmor %vm4303, %vm4304
      %v4306 = vsel %vm4305, %v4298, %v4302
      %v4307 = vand.u32 2147483647, %v3766
      %vm4308 = vcmp.eq.f32.partialorder %v4307, 8.507059e+37
      %v4309 = vand.u32 %v3766, 2147483648
      %v4310 = vor.u32 1.1754944e-38, %v4309
      %v4311 = vsel %vm4308, %v4310, %v4306
      %v4312 = vmul.f32 1.0, %v4311
      %v4313 = vrcp.pop %v3767
      %v4314 = vmul.f32 %v3767, %v4313
      %v4315 = vsub.f32 1.0, %v4314
      %v4316 = vmul.f32 %v4313, %v4315
      %v4317 = vadd.f32 %v4313, %v4316
      %vm4318 = vweird.f32 %v3767
      %vm4319 = vweird.f32 %v4313
      %vm4320 = vmor %vm4318, %vm4319
      %v4321 = vsel %vm4320, %v4313, %v4317
      %v4322 = vand.u32 2147483647, %v3767
      %vm4323 = vcmp.eq.f32.partialorder %v4322, 8.507059e+37
      %v4324 = vand.u32 %v3767, 2147483648
      %v4325 = vor.u32 1.1754944e-38, %v4324
      %v4326 = vsel %vm4323, %v4325, %v4321
      %v4327 = vmul.f32 1.0, %v4326
      %v4328 = vrcp.pop %v3768
      %v4329 = vmul.f32 %v3768, %v4328
      %v4330 = vsub.f32 1.0, %v4329
      %v4331 = vmul.f32 %v4328, %v4330
      %v4332 = vadd.f32 %v4328, %v4331
      %vm4333 = vweird.f32 %v3768
      %vm4334 = vweird.f32 %v4328
      %vm4335 = vmor %vm4333, %vm4334
      %v4336 = vsel %vm4335, %v4328, %v4332
      %v4337 = vand.u32 2147483647, %v3768
      %vm4338 = vcmp.eq.f32.partialorder %v4337, 8.507059e+37
      %v4339 = vand.u32 %v3768, 2147483648
      %v4340 = vor.u32 1.1754944e-38, %v4339
      %v4341 = vsel %vm4338, %v4340, %v4336
      %v4342 = vmul.f32 1.0, %v4341
      %v4343 = vrcp.pop %v3769
      %v4344 = vmul.f32 %v3769, %v4343
      %v4345 = vsub.f32 1.0, %v4344
      %v4346 = vmul.f32 %v4343, %v4345
      %v4347 = vadd.f32 %v4343, %v4346
      %vm4348 = vweird.f32 %v3769
      %vm4349 = vweird.f32 %v4343
      %vm4350 = vmor %vm4348, %vm4349
      %v4351 = vsel %vm4350, %v4343, %v4347
      %v4352 = vand.u32 2147483647, %v3769
      %vm4353 = vcmp.eq.f32.partialorder %v4352, 8.507059e+37
      %v4354 = vand.u32 %v3769, 2147483648
      %v4355 = vor.u32 1.1754944e-38, %v4354
      %v4356 = vsel %vm4353, %v4355, %v4351
      %v4357 = vmul.f32 1.0, %v4356
      %v4358 = vrcp.pop %v3770
      %v4359 = vmul.f32 %v3770, %v4358
      %v4360 = vsub.f32 1.0, %v4359
      %v4361 = vmul.f32 %v4358, %v4360
      %v4362 = vadd.f32 %v4358, %v4361
      %vm4363 = vweird.f32 %v3770
      %vm4364 = vweird.f32 %v4358
      %vm4365 = vmor %vm4363, %vm4364
      %v4366 = vsel %vm4365, %v4358, %v4362
      %v4367 = vand.u32 2147483647, %v3770
      %vm4368 = vcmp.eq.f32.partialorder %v4367, 8.507059e+37
      %v4369 = vand.u32 %v3770, 2147483648
      %v4370 = vor.u32 1.1754944e-38, %v4369
      %v4371 = vsel %vm4368, %v4370, %v4366
      %v4372 = vmul.f32 1.0, %v4371
      %v4373 = vrcp.pop %v3771
      %v4374 = vmul.f32 %v3771, %v4373
      %v4375 = vsub.f32 1.0, %v4374
      %v4376 = vmul.f32 %v4373, %v4375
      %v4377 = vadd.f32 %v4373, %v4376
      %vm4378 = vweird.f32 %v3771
      %vm4379 = vweird.f32 %v4373
      %vm4380 = vmor %vm4378, %vm4379
      %v4381 = vsel %vm4380, %v4373, %v4377
      %v4382 = vand.u32 2147483647, %v3771
      %vm4383 = vcmp.eq.f32.partialorder %v4382, 8.507059e+37
      %v4384 = vand.u32 %v3771, 2147483648
      %v4385 = vor.u32 1.1754944e-38, %v4384
      %v4386 = vsel %vm4383, %v4385, %v4381
      %v4387 = vmul.f32 1.0, %v4386
      %v4388 = vrcp.pop %v3772
      %v4389 = vmul.f32 %v3772, %v4388
      %v4390 = vsub.f32 1.0, %v4389
      %v4391 = vmul.f32 %v4388, %v4390
      %v4392 = vadd.f32 %v4388, %v4391
      %vm4393 = vweird.f32 %v3772
      %vm4394 = vweird.f32 %v4388
      %vm4395 = vmor %vm4393, %vm4394
      %v4396 = vsel %vm4395, %v4388, %v4392
      %v4397 = vand.u32 2147483647, %v3772
      %vm4398 = vcmp.eq.f32.partialorder %v4397, 8.507059e+37
      %v4399 = vand.u32 %v3772, 2147483648
      %v4400 = vor.u32 1.1754944e-38, %v4399
      %v4401 = vsel %vm4398, %v4400, %v4396
      %v4402 = vmul.f32 1.0, %v4401
      %v4403 = vrcp.pop %v3773
      %v4404 = vmul.f32 %v3773, %v4403
      %v4405 = vsub.f32 1.0, %v4404
      %v4406 = vmul.f32 %v4403, %v4405
      %v4407 = vadd.f32 %v4403, %v4406
      %vm4408 = vweird.f32 %v3773
      %vm4409 = vweird.f32 %v4403
      %vm4410 = vmor %vm4408, %vm4409
      %v4411 = vsel %vm4410, %v4403, %v4407
      %v4412 = vand.u32 2147483647, %v3773
      %vm4413 = vcmp.eq.f32.partialorder %v4412, 8.507059e+37
      %v4414 = vand.u32 %v3773, 2147483648
      %v4415 = vor.u32 1.1754944e-38, %v4414
      %v4416 = vsel %vm4413, %v4415, %v4411
      %v4417 = vmul.f32 1.0, %v4416
      %v4418 = vrcp.pop %v3774
      %v4419 = vmul.f32 %v3774, %v4418
      %v4420 = vsub.f32 1.0, %v4419
      %v4421 = vmul.f32 %v4418, %v4420
      %v4422 = vadd.f32 %v4418, %v4421
      %vm4423 = vweird.f32 %v3774
      %vm4424 = vweird.f32 %v4418
      %vm4425 = vmor %vm4423, %vm4424
      %v4426 = vsel %vm4425, %v4418, %v4422
      %v4427 = vand.u32 2147483647, %v3774
      %vm4428 = vcmp.eq.f32.partialorder %v4427, 8.507059e+37
      %v4429 = vand.u32 %v3774, 2147483648
      %v4430 = vor.u32 1.1754944e-38, %v4429
      %v4431 = vsel %vm4428, %v4430, %v4426
      %v4432 = vmul.f32 1.0, %v4431
      %v4433 = vrcp.pop %v3775
      %v4434 = vmul.f32 %v3775, %v4433
      %v4435 = vsub.f32 1.0, %v4434
      %v4436 = vmul.f32 %v4433, %v4435
      %v4437 = vadd.f32 %v4433, %v4436
      %vm4438 = vweird.f32 %v3775
      %vm4439 = vweird.f32 %v4433
      %vm4440 = vmor %vm4438, %vm4439
      %v4441 = vsel %vm4440, %v4433, %v4437
      %v4442 = vand.u32 2147483647, %v3775
      %vm4443 = vcmp.eq.f32.partialorder %v4442, 8.507059e+37
      %v4444 = vand.u32 %v3775, 2147483648
      %v4445 = vor.u32 1.1754944e-38, %v4444
      %v4446 = vsel %vm4443, %v4445, %v4441
      %v4447 = vmul.f32 1.0, %v4446
      %v4448 = vrcp.pop %v3776
      %v4449 = vmul.f32 %v3776, %v4448
      %v4450 = vsub.f32 1.0, %v4449
      %v4451 = vmul.f32 %v4448, %v4450
      %v4452 = vadd.f32 %v4448, %v4451
      %vm4453 = vweird.f32 %v3776
      %vm4454 = vweird.f32 %v4448
      %vm4455 = vmor %vm4453, %vm4454
      %v4456 = vsel %vm4455, %v4448, %v4452
      %v4457 = vand.u32 2147483647, %v3776
      %vm4458 = vcmp.eq.f32.partialorder %v4457, 8.507059e+37
      %v4459 = vand.u32 %v3776, 2147483648
      %v4460 = vor.u32 1.1754944e-38, %v4459
      %v4461 = vsel %vm4458, %v4460, %v4456
      %v4462 = vmul.f32 1.0, %v4461
      %v4463 = vrcp.pop %v3777
      %v4464 = vmul.f32 %v3777, %v4463
      %v4465 = vsub.f32 1.0, %v4464
      %v4466 = vmul.f32 %v4463, %v4465
      %v4467 = vadd.f32 %v4463, %v4466
      %vm4468 = vweird.f32 %v3777
      %vm4469 = vweird.f32 %v4463
      %vm4470 = vmor %vm4468, %vm4469
      %v4471 = vsel %vm4470, %v4463, %v4467
      %v4472 = vand.u32 2147483647, %v3777
      %vm4473 = vcmp.eq.f32.partialorder %v4472, 8.507059e+37
      %v4474 = vand.u32 %v3777, 2147483648
      %v4475 = vor.u32 1.1754944e-38, %v4474
      %v4476 = vsel %vm4473, %v4475, %v4471
      %v4477 = vmul.f32 1.0, %v4476
      %v4478 = vrcp.pop %v3778
      %v4479 = vmul.f32 %v3778, %v4478
      %v4480 = vsub.f32 1.0, %v4479
      %v4481 = vmul.f32 %v4478, %v4480
      %v4482 = vadd.f32 %v4478, %v4481
      %vm4483 = vweird.f32 %v3778
      %vm4484 = vweird.f32 %v4478
      %vm4485 = vmor %vm4483, %vm4484
      %v4486 = vsel %vm4485, %v4478, %v4482
      %v4487 = vand.u32 2147483647, %v3778
      %vm4488 = vcmp.eq.f32.partialorder %v4487, 8.507059e+37
      %v4489 = vand.u32 %v3778, 2147483648
      %v4490 = vor.u32 1.1754944e-38, %v4489
      %v4491 = vsel %vm4488, %v4490, %v4486
      %v4492 = vmul.f32 1.0, %v4491
      %v4493 = vrcp.pop %v3779
      %v4494 = vmul.f32 %v3779, %v4493
      %v4495 = vsub.f32 1.0, %v4494
      %v4496 = vmul.f32 %v4493, %v4495
      %v4497 = vadd.f32 %v4493, %v4496
      %vm4498 = vweird.f32 %v3779
      %vm4499 = vweird.f32 %v4493
      %vm4500 = vmor %vm4498, %vm4499
      %v4501 = vsel %vm4500, %v4493, %v4497
      %v4502 = vand.u32 2147483647, %v3779
      %vm4503 = vcmp.eq.f32.partialorder %v4502, 8.507059e+37
      %v4504 = vand.u32 %v3779, 2147483648
      %v4505 = vor.u32 1.1754944e-38, %v4504
      %v4506 = vsel %vm4503, %v4505, %v4501
      %v4507 = vmul.f32 1.0, %v4506
      %v4508 = vrcp.pop %v3780
      %v4509 = vmul.f32 %v3780, %v4508
      %v4510 = vsub.f32 1.0, %v4509
      %v4511 = vmul.f32 %v4508, %v4510
      %v4512 = vadd.f32 %v4508, %v4511
      %vm4513 = vweird.f32 %v3780
      %vm4514 = vweird.f32 %v4508
      %vm4515 = vmor %vm4513, %vm4514
      %v4516 = vsel %vm4515, %v4508, %v4512
      %v4517 = vand.u32 2147483647, %v3780
      %vm4518 = vcmp.eq.f32.partialorder %v4517, 8.507059e+37
      %v4519 = vand.u32 %v3780, 2147483648
      %v4520 = vor.u32 1.1754944e-38, %v4519
      %v4521 = vsel %vm4518, %v4520, %v4516
      %v4522 = vmul.f32 1.0, %v4521
      %v4523 = vrcp.pop %v3781
      %v4524 = vmul.f32 %v3781, %v4523
      %v4525 = vsub.f32 1.0, %v4524
      %v4526 = vmul.f32 %v4523, %v4525
      %v4527 = vadd.f32 %v4523, %v4526
      %vm4528 = vweird.f32 %v3781
      %vm4529 = vweird.f32 %v4523
      %vm4530 = vmor %vm4528, %vm4529
      %v4531 = vsel %vm4530, %v4523, %v4527
      %v4532 = vand.u32 2147483647, %v3781
      %vm4533 = vcmp.eq.f32.partialorder %v4532, 8.507059e+37
      %v4534 = vand.u32 %v3781, 2147483648
      %v4535 = vor.u32 1.1754944e-38, %v4534
      %v4536 = vsel %vm4533, %v4535, %v4531
      %v4537 = vmul.f32 1.0, %v4536
      %v4538 = vrcp.pop %v3782
      %v4539 = vmul.f32 %v3782, %v4538
      %v4540 = vsub.f32 1.0, %v4539
      %v4541 = vmul.f32 %v4538, %v4540
      %v4542 = vadd.f32 %v4538, %v4541
      %vm4543 = vweird.f32 %v3782
      %vm4544 = vweird.f32 %v4538
      %vm4545 = vmor %vm4543, %vm4544
      %v4546 = vsel %vm4545, %v4538, %v4542
      %v4547 = vand.u32 2147483647, %v3782
      %vm4548 = vcmp.eq.f32.partialorder %v4547, 8.507059e+37
      %v4549 = vand.u32 %v3782, 2147483648
      %v4550 = vor.u32 1.1754944e-38, %v4549
      %v4551 = vsel %vm4548, %v4550, %v4546
      %v4552 = vmul.f32 1.0, %v4551
      %v4553 = vrcp.pop %v3783
      %v4554 = vmul.f32 %v3783, %v4553
      %v4555 = vsub.f32 1.0, %v4554
      %v4556 = vmul.f32 %v4553, %v4555
      %v4557 = vadd.f32 %v4553, %v4556
      %vm4558 = vweird.f32 %v3783
      %vm4559 = vweird.f32 %v4553
      %vm4560 = vmor %vm4558, %vm4559
      %v4561 = vsel %vm4560, %v4553, %v4557
      %v4562 = vand.u32 2147483647, %v3783
      %vm4563 = vcmp.eq.f32.partialorder %v4562, 8.507059e+37
      %v4564 = vand.u32 %v3783, 2147483648
      %v4565 = vor.u32 1.1754944e-38, %v4564
      %v4566 = vsel %vm4563, %v4565, %v4561
      %v4567 = vmul.f32 1.0, %v4566
      %v4568 = vrcp.pop %v3784
      %v4569 = vmul.f32 %v3784, %v4568
      %v4570 = vsub.f32 1.0, %v4569
      %v4571 = vmul.f32 %v4568, %v4570
      %v4572 = vadd.f32 %v4568, %v4571
      %vm4573 = vweird.f32 %v3784
      %vm4574 = vweird.f32 %v4568
      %vm4575 = vmor %vm4573, %vm4574
      %v4576 = vsel %vm4575, %v4568, %v4572
      %v4577 = vand.u32 2147483647, %v3784
      %vm4578 = vcmp.eq.f32.partialorder %v4577, 8.507059e+37
      %v4579 = vand.u32 %v3784, 2147483648
      %v4580 = vor.u32 1.1754944e-38, %v4579
      %v4581 = vsel %vm4578, %v4580, %v4576
      %v4582 = vmul.f32 1.0, %v4581
      %v4583 = vrcp.pop %v3785
      %v4584 = vmul.f32 %v3785, %v4583
      %v4585 = vsub.f32 1.0, %v4584
      %v4586 = vmul.f32 %v4583, %v4585
      %v4587 = vadd.f32 %v4583, %v4586
      %vm4588 = vweird.f32 %v3785
      %vm4589 = vweird.f32 %v4583
      %vm4590 = vmor %vm4588, %vm4589
      %v4591 = vsel %vm4590, %v4583, %v4587
      %v4592 = vand.u32 2147483647, %v3785
      %vm4593 = vcmp.eq.f32.partialorder %v4592, 8.507059e+37
      %v4594 = vand.u32 %v3785, 2147483648
      %v4595 = vor.u32 1.1754944e-38, %v4594
      %v4596 = vsel %vm4593, %v4595, %v4591
      %v4597 = vmul.f32 1.0, %v4596
      %v4598 = vrcp.pop %v3786
      %v4599 = vmul.f32 %v3786, %v4598
      %v4600 = vsub.f32 1.0, %v4599
      %v4601 = vmul.f32 %v4598, %v4600
      %v4602 = vadd.f32 %v4598, %v4601
      %vm4603 = vweird.f32 %v3786
      %vm4604 = vweird.f32 %v4598
      %vm4605 = vmor %vm4603, %vm4604
      %v4606 = vsel %vm4605, %v4598, %v4602
      %v4607 = vand.u32 2147483647, %v3786
      %vm4608 = vcmp.eq.f32.partialorder %v4607, 8.507059e+37
      %v4609 = vand.u32 %v3786, 2147483648
      %v4610 = vor.u32 1.1754944e-38, %v4609
      %v4611 = vsel %vm4608, %v4610, %v4606
      %v4612 = vmul.f32 1.0, %v4611
      %v4613 = vrcp.pop %v3787
      %v4614 = vmul.f32 %v3787, %v4613
      %v4615 = vsub.f32 1.0, %v4614
      %v4616 = vmul.f32 %v4613, %v4615
      %v4617 = vadd.f32 %v4613, %v4616
      %vm4618 = vweird.f32 %v3787
      %vm4619 = vweird.f32 %v4613
      %vm4620 = vmor %vm4618, %vm4619
      %v4621 = vsel %vm4620, %v4613, %v4617
      %v4622 = vand.u32 2147483647, %v3787
      %vm4623 = vcmp.eq.f32.partialorder %v4622, 8.507059e+37
      %v4624 = vand.u32 %v3787, 2147483648
      %v4625 = vor.u32 1.1754944e-38, %v4624
      %v4626 = vsel %vm4623, %v4625, %v4621
      %v4627 = vmul.f32 1.0, %v4626
      %v4628 = vrcp.pop %v3788
      %v4629 = vmul.f32 %v3788, %v4628
      %v4630 = vsub.f32 1.0, %v4629
      %v4631 = vmul.f32 %v4628, %v4630
      %v4632 = vadd.f32 %v4628, %v4631
      %vm4633 = vweird.f32 %v3788
      %vm4634 = vweird.f32 %v4628
      %vm4635 = vmor %vm4633, %vm4634
      %v4636 = vsel %vm4635, %v4628, %v4632
      %v4637 = vand.u32 2147483647, %v3788
      %vm4638 = vcmp.eq.f32.partialorder %v4637, 8.507059e+37
      %v4639 = vand.u32 %v3788, 2147483648
      %v4640 = vor.u32 1.1754944e-38, %v4639
      %v4641 = vsel %vm4638, %v4640, %v4636
      %v4642 = vmul.f32 1.0, %v4641
      %v4643 = vrcp.pop %v3789
      %v4644 = vmul.f32 %v3789, %v4643
      %v4645 = vsub.f32 1.0, %v4644
      %v4646 = vmul.f32 %v4643, %v4645
      %v4647 = vadd.f32 %v4643, %v4646
      %vm4648 = vweird.f32 %v3789
      %vm4649 = vweird.f32 %v4643
      %vm4650 = vmor %vm4648, %vm4649
      %v4651 = vsel %vm4650, %v4643, %v4647
      %v4652 = vand.u32 2147483647, %v3789
      %vm4653 = vcmp.eq.f32.partialorder %v4652, 8.507059e+37
      %v4654 = vand.u32 %v3789, 2147483648
      %v4655 = vor.u32 1.1754944e-38, %v4654
      %v4656 = vsel %vm4653, %v4655, %v4651
      %v4657 = vmul.f32 1.0, %v4656
      %v4658 = vrcp.pop %v3790
      %v4659 = vmul.f32 %v3790, %v4658
      %v4660 = vsub.f32 1.0, %v4659
      %v4661 = vmul.f32 %v4658, %v4660
      %v4662 = vadd.f32 %v4658, %v4661
      %vm4663 = vweird.f32 %v3790
      %vm4664 = vweird.f32 %v4658
      %vm4665 = vmor %vm4663, %vm4664
      %v4666 = vsel %vm4665, %v4658, %v4662
      %v4667 = vand.u32 2147483647, %v3790
      %vm4668 = vcmp.eq.f32.partialorder %v4667, 8.507059e+37
      %v4669 = vand.u32 %v3790, 2147483648
      %v4670 = vor.u32 1.1754944e-38, %v4669
      %v4671 = vsel %vm4668, %v4670, %v4666
      %v4672 = vmul.f32 1.0, %v4671
      %v4673 = vrcp.pop %v3791
      %v4674 = vmul.f32 %v3791, %v4673
      %v4675 = vsub.f32 1.0, %v4674
      %v4676 = vmul.f32 %v4673, %v4675
      %v4677 = vadd.f32 %v4673, %v4676
      %vm4678 = vweird.f32 %v3791
      %vm4679 = vweird.f32 %v4673
      %vm4680 = vmor %vm4678, %vm4679
      %v4681 = vsel %vm4680, %v4673, %v4677
      %v4682 = vand.u32 2147483647, %v3791
      %vm4683 = vcmp.eq.f32.partialorder %v4682, 8.507059e+37
      %v4684 = vand.u32 %v3791, 2147483648
      %v4685 = vor.u32 1.1754944e-38, %v4684
      %v4686 = vsel %vm4683, %v4685, %v4681
      %v4687 = vmul.f32 1.0, %v4686
      %v4688 = vrcp.pop %v3792
      %v4689 = vmul.f32 %v3792, %v4688
      %v4690 = vsub.f32 1.0, %v4689
      %v4691 = vmul.f32 %v4688, %v4690
      %v4692 = vadd.f32 %v4688, %v4691
      %vm4693 = vweird.f32 %v3792
      %vm4694 = vweird.f32 %v4688
      %vm4695 = vmor %vm4693, %vm4694
      %v4696 = vsel %vm4695, %v4688, %v4692
      %v4697 = vand.u32 2147483647, %v3792
      %vm4698 = vcmp.eq.f32.partialorder %v4697, 8.507059e+37
      %v4699 = vand.u32 %v3792, 2147483648
      %v4700 = vor.u32 1.1754944e-38, %v4699
      %v4701 = vsel %vm4698, %v4700, %v4696
      %v4702 = vmul.f32 1.0, %v4701
      %v4703 = vrcp.pop %v3793
      %v4704 = vmul.f32 %v3793, %v4703
      %v4705 = vsub.f32 1.0, %v4704
      %v4706 = vmul.f32 %v4703, %v4705
      %v4707 = vadd.f32 %v4703, %v4706
      %vm4708 = vweird.f32 %v3793
      %vm4709 = vweird.f32 %v4703
      %vm4710 = vmor %vm4708, %vm4709
      %v4711 = vsel %vm4710, %v4703, %v4707
      %v4712 = vand.u32 2147483647, %v3793
      %vm4713 = vcmp.eq.f32.partialorder %v4712, 8.507059e+37
      %v4714 = vand.u32 %v3793, 2147483648
      %v4715 = vor.u32 1.1754944e-38, %v4714
      %v4716 = vsel %vm4713, %v4715, %v4711
      %v4717 = vmul.f32 1.0, %v4716
      %v4718 = vrcp.pop %v3794
      %v4719 = vmul.f32 %v3794, %v4718
      %v4720 = vsub.f32 1.0, %v4719
      %v4721 = vmul.f32 %v4718, %v4720
      %v4722 = vadd.f32 %v4718, %v4721
      %vm4723 = vweird.f32 %v3794
      %vm4724 = vweird.f32 %v4718
      %vm4725 = vmor %vm4723, %vm4724
      %v4726 = vsel %vm4725, %v4718, %v4722
      %v4727 = vand.u32 2147483647, %v3794
      %vm4728 = vcmp.eq.f32.partialorder %v4727, 8.507059e+37
      %v4729 = vand.u32 %v3794, 2147483648
      %v4730 = vor.u32 1.1754944e-38, %v4729
      %v4731 = vsel %vm4728, %v4730, %v4726
      %v4732 = vmul.f32 1.0, %v4731
      %v4733 = vrcp.pop %v3795
      %v4734 = vmul.f32 %v3795, %v4733
      %v4735 = vsub.f32 1.0, %v4734
      %v4736 = vmul.f32 %v4733, %v4735
      %v4737 = vadd.f32 %v4733, %v4736
      %vm4738 = vweird.f32 %v3795
      %vm4739 = vweird.f32 %v4733
      %vm4740 = vmor %vm4738, %vm4739
      %v4741 = vsel %vm4740, %v4733, %v4737
      %v4742 = vand.u32 2147483647, %v3795
      %vm4743 = vcmp.eq.f32.partialorder %v4742, 8.507059e+37
      %v4744 = vand.u32 %v3795, 2147483648
      %v4745 = vor.u32 1.1754944e-38, %v4744
      %v4746 = vsel %vm4743, %v4745, %v4741
      %v4747 = vmul.f32 1.0, %v4746
      %v4748 = vrcp.pop %v3796
      %v4749 = vmul.f32 %v3796, %v4748
      %v4750 = vsub.f32 1.0, %v4749
      %v4751 = vmul.f32 %v4748, %v4750
      %v4752 = vadd.f32 %v4748, %v4751
      %vm4753 = vweird.f32 %v3796
      %vm4754 = vweird.f32 %v4748
      %vm4755 = vmor %vm4753, %vm4754
      %v4756 = vsel %vm4755, %v4748, %v4752
      %v4757 = vand.u32 2147483647, %v3796
      %vm4758 = vcmp.eq.f32.partialorder %v4757, 8.507059e+37
      %v4759 = vand.u32 %v3796, 2147483648
      %v4760 = vor.u32 1.1754944e-38, %v4759
      %v4761 = vsel %vm4758, %v4760, %v4756
      %v4762 = vmul.f32 1.0, %v4761
      %v4763 = vrcp.pop %v3797
      %v4764 = vmul.f32 %v3797, %v4763
      %v4765 = vsub.f32 1.0, %v4764
      %v4766 = vmul.f32 %v4763, %v4765
      %v4767 = vadd.f32 %v4763, %v4766
      %vm4768 = vweird.f32 %v3797
      %vm4769 = vweird.f32 %v4763
      %vm4770 = vmor %vm4768, %vm4769
      %v4771 = vsel %vm4770, %v4763, %v4767
      %v4772 = vand.u32 2147483647, %v3797
      %vm4773 = vcmp.eq.f32.partialorder %v4772, 8.507059e+37
      %v4774 = vand.u32 %v3797, 2147483648
      %v4775 = vor.u32 1.1754944e-38, %v4774
      %v4776 = vsel %vm4773, %v4775, %v4771
      %v4777 = vmul.f32 1.0, %v4776
      %v4778 = vrcp.pop %v3798
      %v4779 = vmul.f32 %v3798, %v4778
      %v4780 = vsub.f32 1.0, %v4779
      %v4781 = vmul.f32 %v4778, %v4780
      %v4782 = vadd.f32 %v4778, %v4781
      %vm4783 = vweird.f32 %v3798
      %vm4784 = vweird.f32 %v4778
      %vm4785 = vmor %vm4783, %vm4784
      %v4786 = vsel %vm4785, %v4778, %v4782
      %v4787 = vand.u32 2147483647, %v3798
      %vm4788 = vcmp.eq.f32.partialorder %v4787, 8.507059e+37
      %v4789 = vand.u32 %v3798, 2147483648
      %v4790 = vor.u32 1.1754944e-38, %v4789
      %v4791 = vsel %vm4788, %v4790, %v4786
      %v4792 = vmul.f32 1.0, %v4791
      %v4793 = vrcp.pop %v3799
      %v4794 = vmul.f32 %v3799, %v4793
      %v4795 = vsub.f32 1.0, %v4794
      %v4796 = vmul.f32 %v4793, %v4795
      %v4797 = vadd.f32 %v4793, %v4796
      %vm4798 = vweird.f32 %v3799
      %vm4799 = vweird.f32 %v4793
      %vm4800 = vmor %vm4798, %vm4799
      %v4801 = vsel %vm4800, %v4793, %v4797
      %v4802 = vand.u32 2147483647, %v3799
      %vm4803 = vcmp.eq.f32.partialorder %v4802, 8.507059e+37
      %v4804 = vand.u32 %v3799, 2147483648
      %v4805 = vor.u32 1.1754944e-38, %v4804
      %v4806 = vsel %vm4803, %v4805, %v4801
      %v4807 = vmul.f32 1.0, %v4806
      %v4808 = vrcp.pop %v3800
      %v4809 = vmul.f32 %v3800, %v4808
      %v4810 = vsub.f32 1.0, %v4809
      %v4811 = vmul.f32 %v4808, %v4810
      %v4812 = vadd.f32 %v4808, %v4811
      %vm4813 = vweird.f32 %v3800
      %vm4814 = vweird.f32 %v4808
      %vm4815 = vmor %vm4813, %vm4814
      %v4816 = vsel %vm4815, %v4808, %v4812
      %v4817 = vand.u32 2147483647, %v3800
      %vm4818 = vcmp.eq.f32.partialorder %v4817, 8.507059e+37
      %v4819 = vand.u32 %v3800, 2147483648
      %v4820 = vor.u32 1.1754944e-38, %v4819
      %v4821 = vsel %vm4818, %v4820, %v4816
      %v4822 = vmul.f32 1.0, %v4821
      %v4823 = vrcp.pop %v3801
      %v4824 = vmul.f32 %v3801, %v4823
      %v4825 = vsub.f32 1.0, %v4824
      %v4826 = vmul.f32 %v4823, %v4825
      %v4827 = vadd.f32 %v4823, %v4826
      %vm4828 = vweird.f32 %v3801
      %vm4829 = vweird.f32 %v4823
      %vm4830 = vmor %vm4828, %vm4829
      %v4831 = vsel %vm4830, %v4823, %v4827
      %v4832 = vand.u32 2147483647, %v3801
      %vm4833 = vcmp.eq.f32.partialorder %v4832, 8.507059e+37
      %v4834 = vand.u32 %v3801, 2147483648
      %v4835 = vor.u32 1.1754944e-38, %v4834
      %v4836 = vsel %vm4833, %v4835, %v4831
      %v4837 = vmul.f32 1.0, %v4836
      %v4838 = vrcp.pop %v3802
      %v4839 = vmul.f32 %v3802, %v4838
      %v4840 = vsub.f32 1.0, %v4839
      %v4841 = vmul.f32 %v4838, %v4840
      %v4842 = vadd.f32 %v4838, %v4841
      %vm4843 = vweird.f32 %v3802
      %vm4844 = vweird.f32 %v4838
      %vm4845 = vmor %vm4843, %vm4844
      %v4846 = vsel %vm4845, %v4838, %v4842
      %v4847 = vand.u32 2147483647, %v3802
      %vm4848 = vcmp.eq.f32.partialorder %v4847, 8.507059e+37
      %v4849 = vand.u32 %v3802, 2147483648
      %v4850 = vor.u32 1.1754944e-38, %v4849
      %v4851 = vsel %vm4848, %v4850, %v4846
      %v4852 = vmul.f32 1.0, %v4851
      %v4853 = vrcp.pop %v3803
      %v4854 = vmul.f32 %v3803, %v4853
      %v4855 = vsub.f32 1.0, %v4854
      %v4856 = vmul.f32 %v4853, %v4855
      %v4857 = vadd.f32 %v4853, %v4856
      %vm4858 = vweird.f32 %v3803
      %vm4859 = vweird.f32 %v4853
      %vm4860 = vmor %vm4858, %vm4859
      %v4861 = vsel %vm4860, %v4853, %v4857
      %v4862 = vand.u32 2147483647, %v3803
      %vm4863 = vcmp.eq.f32.partialorder %v4862, 8.507059e+37
      %v4864 = vand.u32 %v3803, 2147483648
      %v4865 = vor.u32 1.1754944e-38, %v4864
      %v4866 = vsel %vm4863, %v4865, %v4861
      %v4867 = vmul.f32 1.0, %v4866
      %v4868 = vrcp.pop %v3804
      %v4869 = vmul.f32 %v3804, %v4868
      %v4870 = vsub.f32 1.0, %v4869
      %v4871 = vmul.f32 %v4868, %v4870
      %v4872 = vadd.f32 %v4868, %v4871
      %vm4873 = vweird.f32 %v3804
      %vm4874 = vweird.f32 %v4868
      %vm4875 = vmor %vm4873, %vm4874
      %v4876 = vsel %vm4875, %v4868, %v4872
      %v4877 = vand.u32 2147483647, %v3804
      %vm4878 = vcmp.eq.f32.partialorder %v4877, 8.507059e+37
      %v4879 = vand.u32 %v3804, 2147483648
      %v4880 = vor.u32 1.1754944e-38, %v4879
      %v4881 = vsel %vm4878, %v4880, %v4876
      %v4882 = vmul.f32 1.0, %v4881
      %v4883 = vrcp.pop %v3805
      %v4884 = vmul.f32 %v3805, %v4883
      %v4885 = vsub.f32 1.0, %v4884
      %v4886 = vmul.f32 %v4883, %v4885
      %v4887 = vadd.f32 %v4883, %v4886
      %vm4888 = vweird.f32 %v3805
      %vm4889 = vweird.f32 %v4883
      %vm4890 = vmor %vm4888, %vm4889
      %v4891 = vsel %vm4890, %v4883, %v4887
      %v4892 = vand.u32 2147483647, %v3805
      %vm4893 = vcmp.eq.f32.partialorder %v4892, 8.507059e+37
      %v4894 = vand.u32 %v3805, 2147483648
      %v4895 = vor.u32 1.1754944e-38, %v4894
      %v4896 = vsel %vm4893, %v4895, %v4891
      %v4897 = vmul.f32 1.0, %v4896
      %v4898 = vrcp.pop %v3806
      %v4899 = vmul.f32 %v3806, %v4898
      %v4900 = vsub.f32 1.0, %v4899
      %v4901 = vmul.f32 %v4898, %v4900
      %v4902 = vadd.f32 %v4898, %v4901
      %vm4903 = vweird.f32 %v3806
      %vm4904 = vweird.f32 %v4898
      %vm4905 = vmor %vm4903, %vm4904
      %v4906 = vsel %vm4905, %v4898, %v4902
      %v4907 = vand.u32 2147483647, %v3806
      %vm4908 = vcmp.eq.f32.partialorder %v4907, 8.507059e+37
      %v4909 = vand.u32 %v3806, 2147483648
      %v4910 = vor.u32 1.1754944e-38, %v4909
      %v4911 = vsel %vm4908, %v4910, %v4906
      %v4912 = vmul.f32 1.0, %v4911
      %v4913 = vrcp.pop %v3807
      %v4914 = vmul.f32 %v3807, %v4913
      %v4915 = vsub.f32 1.0, %v4914
      %v4916 = vmul.f32 %v4913, %v4915
      %v4917 = vadd.f32 %v4913, %v4916
      %vm4918 = vweird.f32 %v3807
      %vm4919 = vweird.f32 %v4913
      %vm4920 = vmor %vm4918, %vm4919
      %v4921 = vsel %vm4920, %v4913, %v4917
      %v4922 = vand.u32 2147483647, %v3807
      %vm4923 = vcmp.eq.f32.partialorder %v4922, 8.507059e+37
      %v4924 = vand.u32 %v3807, 2147483648
      %v4925 = vor.u32 1.1754944e-38, %v4924
      %v4926 = vsel %vm4923, %v4925, %v4921
      %v4927 = vmul.f32 1.0, %v4926
      %v4928 = vrcp.pop %v3808
      %v4929 = vmul.f32 %v3808, %v4928
      %v4930 = vsub.f32 1.0, %v4929
      %v4931 = vmul.f32 %v4928, %v4930
      %v4932 = vadd.f32 %v4928, %v4931
      %vm4933 = vweird.f32 %v3808
      %vm4934 = vweird.f32 %v4928
      %vm4935 = vmor %vm4933, %vm4934
      %v4936 = vsel %vm4935, %v4928, %v4932
      %v4937 = vand.u32 2147483647, %v3808
      %vm4938 = vcmp.eq.f32.partialorder %v4937, 8.507059e+37
      %v4939 = vand.u32 %v3808, 2147483648
      %v4940 = vor.u32 1.1754944e-38, %v4939
      %v4941 = vsel %vm4938, %v4940, %v4936
      %v4942 = vmul.f32 1.0, %v4941
      %v4943 = vrcp.pop %v3809
      %v4944 = vmul.f32 %v3809, %v4943
      %v4945 = vsub.f32 1.0, %v4944
      %v4946 = vmul.f32 %v4943, %v4945
      %v4947 = vadd.f32 %v4943, %v4946
      %vm4948 = vweird.f32 %v3809
      %vm4949 = vweird.f32 %v4943
      %vm4950 = vmor %vm4948, %vm4949
      %v4951 = vsel %vm4950, %v4943, %v4947
      %v4952 = vand.u32 2147483647, %v3809
      %vm4953 = vcmp.eq.f32.partialorder %v4952, 8.507059e+37
      %v4954 = vand.u32 %v3809, 2147483648
      %v4955 = vor.u32 1.1754944e-38, %v4954
      %v4956 = vsel %vm4953, %v4955, %v4951
      %v4957 = vmul.f32 1.0, %v4956
      %v4958 = vrcp.pop %v3810
      %v4959 = vmul.f32 %v3810, %v4958
      %v4960 = vsub.f32 1.0, %v4959
      %v4961 = vmul.f32 %v4958, %v4960
      %v4962 = vadd.f32 %v4958, %v4961
      %vm4963 = vweird.f32 %v3810
      %vm4964 = vweird.f32 %v4958
      %vm4965 = vmor %vm4963, %vm4964
      %v4966 = vsel %vm4965, %v4958, %v4962
      %v4967 = vand.u32 2147483647, %v3810
      %vm4968 = vcmp.eq.f32.partialorder %v4967, 8.507059e+37
      %v4969 = vand.u32 %v3810, 2147483648
      %v4970 = vor.u32 1.1754944e-38, %v4969
      %v4971 = vsel %vm4968, %v4970, %v4966
      %v4972 = vmul.f32 1.0, %v4971
      %v4973 = vrcp.pop %v3811
      %v4974 = vmul.f32 %v3811, %v4973
      %v4975 = vsub.f32 1.0, %v4974
      %v4976 = vmul.f32 %v4973, %v4975
      %v4977 = vadd.f32 %v4973, %v4976
      %vm4978 = vweird.f32 %v3811
      %vm4979 = vweird.f32 %v4973
      %vm4980 = vmor %vm4978, %vm4979
      %v4981 = vsel %vm4980, %v4973, %v4977
      %v4982 = vand.u32 2147483647, %v3811
      %vm4983 = vcmp.eq.f32.partialorder %v4982, 8.507059e+37
      %v4984 = vand.u32 %v3811, 2147483648
      %v4985 = vor.u32 1.1754944e-38, %v4984
      %v4986 = vsel %vm4983, %v4985, %v4981
      %v4987 = vmul.f32 1.0, %v4986
      %v4988 = vrcp.pop %v3812
      %v4989 = vmul.f32 %v3812, %v4988
      %v4990 = vsub.f32 1.0, %v4989
      %v4991 = vmul.f32 %v4988, %v4990
      %v4992 = vadd.f32 %v4988, %v4991
      %vm4993 = vweird.f32 %v3812
      %vm4994 = vweird.f32 %v4988
      %vm4995 = vmor %vm4993, %vm4994
      %v4996 = vsel %vm4995, %v4988, %v4992
      %v4997 = vand.u32 2147483647, %v3812
      %vm4998 = vcmp.eq.f32.partialorder %v4997, 8.507059e+37
      %v4999 = vand.u32 %v3812, 2147483648
      %v5000 = vor.u32 1.1754944e-38, %v4999
      %v5001 = vsel %vm4998, %v5000, %v4996
      %v5002 = vmul.f32 1.0, %v5001
      %v5003 = vrcp.pop %v3813
      %v5004 = vmul.f32 %v3813, %v5003
      %v5005 = vsub.f32 1.0, %v5004
      %v5006 = vmul.f32 %v5003, %v5005
      %v5007 = vadd.f32 %v5003, %v5006
      %vm5008 = vweird.f32 %v3813
      %vm5009 = vweird.f32 %v5003
      %vm5010 = vmor %vm5008, %vm5009
      %v5011 = vsel %vm5010, %v5003, %v5007
      %v5012 = vand.u32 2147483647, %v3813
      %vm5013 = vcmp.eq.f32.partialorder %v5012, 8.507059e+37
      %v5014 = vand.u32 %v3813, 2147483648
      %v5015 = vor.u32 1.1754944e-38, %v5014
      %v5016 = vsel %vm5013, %v5015, %v5011
      %v5017 = vmul.f32 1.0, %v5016
      %v5018 = vrcp.pop %v3814
      %v5019 = vmul.f32 %v3814, %v5018
      %v5020 = vsub.f32 1.0, %v5019
      %v5021 = vmul.f32 %v5018, %v5020
      %v5022 = vadd.f32 %v5018, %v5021
      %vm5023 = vweird.f32 %v3814
      %vm5024 = vweird.f32 %v5018
      %vm5025 = vmor %vm5023, %vm5024
      %v5026 = vsel %vm5025, %v5018, %v5022
      %v5027 = vand.u32 2147483647, %v3814
      %vm5028 = vcmp.eq.f32.partialorder %v5027, 8.507059e+37
      %v5029 = vand.u32 %v3814, 2147483648
      %v5030 = vor.u32 1.1754944e-38, %v5029
      %v5031 = vsel %vm5028, %v5030, %v5026
      %v5032 = vmul.f32 1.0, %v5031
      %v5033 = vrcp.pop %v3815
      %v5034 = vmul.f32 %v3815, %v5033
      %v5035 = vsub.f32 1.0, %v5034
      %v5036 = vmul.f32 %v5033, %v5035
      %v5037 = vadd.f32 %v5033, %v5036
      %vm5038 = vweird.f32 %v3815
      %vm5039 = vweird.f32 %v5033
      %vm5040 = vmor %vm5038, %vm5039
      %v5041 = vsel %vm5040, %v5033, %v5037
      %v5042 = vand.u32 2147483647, %v3815
      %vm5043 = vcmp.eq.f32.partialorder %v5042, 8.507059e+37
      %v5044 = vand.u32 %v3815, 2147483648
      %v5045 = vor.u32 1.1754944e-38, %v5044
      %v5046 = vsel %vm5043, %v5045, %v5041
      %v5047 = vmul.f32 1.0, %v5046
      %v5048 = vrcp.pop %v3816
      %v5049 = vmul.f32 %v3816, %v5048
      %v5050 = vsub.f32 1.0, %v5049
      %v5051 = vmul.f32 %v5048, %v5050
      %v5052 = vadd.f32 %v5048, %v5051
      %vm5053 = vweird.f32 %v3816
      %vm5054 = vweird.f32 %v5048
      %vm5055 = vmor %vm5053, %vm5054
      %v5056 = vsel %vm5055, %v5048, %v5052
      %v5057 = vand.u32 2147483647, %v3816
      %vm5058 = vcmp.eq.f32.partialorder %v5057, 8.507059e+37
      %v5059 = vand.u32 %v3816, 2147483648
      %v5060 = vor.u32 1.1754944e-38, %v5059
      %v5061 = vsel %vm5058, %v5060, %v5056
      %v5062 = vmul.f32 1.0, %v5061
      %v5063 = vrcp.pop %v3817
      %v5064 = vmul.f32 %v3817, %v5063
      %v5065 = vsub.f32 1.0, %v5064
      %v5066 = vmul.f32 %v5063, %v5065
      %v5067 = vadd.f32 %v5063, %v5066
      %vm5068 = vweird.f32 %v3817
      %vm5069 = vweird.f32 %v5063
      %vm5070 = vmor %vm5068, %vm5069
      %v5071 = vsel %vm5070, %v5063, %v5067
      %v5072 = vand.u32 2147483647, %v3817
      %vm5073 = vcmp.eq.f32.partialorder %v5072, 8.507059e+37
      %v5074 = vand.u32 %v3817, 2147483648
      %v5075 = vor.u32 1.1754944e-38, %v5074
      %v5076 = vsel %vm5073, %v5075, %v5071
      %v5077 = vmul.f32 1.0, %v5076
      %v5078 = vrcp.pop %v3818
      %v5079 = vmul.f32 %v3818, %v5078
      %v5080 = vsub.f32 1.0, %v5079
      %v5081 = vmul.f32 %v5078, %v5080
      %v5082 = vadd.f32 %v5078, %v5081
      %vm5083 = vweird.f32 %v3818
      %vm5084 = vweird.f32 %v5078
      %vm5085 = vmor %vm5083, %vm5084
      %v5086 = vsel %vm5085, %v5078, %v5082
      %v5087 = vand.u32 2147483647, %v3818
      %vm5088 = vcmp.eq.f32.partialorder %v5087, 8.507059e+37
      %v5089 = vand.u32 %v3818, 2147483648
      %v5090 = vor.u32 1.1754944e-38, %v5089
      %v5091 = vsel %vm5088, %v5090, %v5086
      %v5092 = vmul.f32 1.0, %v5091
      %v5093 = vrcp.pop %v3819
      %v5094 = vmul.f32 %v3819, %v5093
      %v5095 = vsub.f32 1.0, %v5094
      %v5096 = vmul.f32 %v5093, %v5095
      %v5097 = vadd.f32 %v5093, %v5096
      %vm5098 = vweird.f32 %v3819
      %vm5099 = vweird.f32 %v5093
      %vm5100 = vmor %vm5098, %vm5099
      %v5101 = vsel %vm5100, %v5093, %v5097
      %v5102 = vand.u32 2147483647, %v3819
      %vm5103 = vcmp.eq.f32.partialorder %v5102, 8.507059e+37
      %v5104 = vand.u32 %v3819, 2147483648
      %v5105 = vor.u32 1.1754944e-38, %v5104
      %v5106 = vsel %vm5103, %v5105, %v5101
      %v5107 = vmul.f32 1.0, %v5106
      %v5108 = vrcp.pop %v3820
      %v5109 = vmul.f32 %v3820, %v5108
      %v5110 = vsub.f32 1.0, %v5109
      %v5111 = vmul.f32 %v5108, %v5110
      %v5112 = vadd.f32 %v5108, %v5111
      %vm5113 = vweird.f32 %v3820
      %vm5114 = vweird.f32 %v5108
      %vm5115 = vmor %vm5113, %vm5114
      %v5116 = vsel %vm5115, %v5108, %v5112
      %v5117 = vand.u32 2147483647, %v3820
      %vm5118 = vcmp.eq.f32.partialorder %v5117, 8.507059e+37
      %v5119 = vand.u32 %v3820, 2147483648
      %v5120 = vor.u32 1.1754944e-38, %v5119
      %v5121 = vsel %vm5118, %v5120, %v5116
      %v5122 = vmul.f32 1.0, %v5121
      %v5123 = vrcp.pop %v3821
      %v5124 = vmul.f32 %v3821, %v5123
      %v5125 = vsub.f32 1.0, %v5124
      %v5126 = vmul.f32 %v5123, %v5125
      %v5127 = vadd.f32 %v5123, %v5126
      %vm5128 = vweird.f32 %v3821
      %vm5129 = vweird.f32 %v5123
      %vm5130 = vmor %vm5128, %vm5129
      %v5131 = vsel %vm5130, %v5123, %v5127
      %v5132 = vand.u32 2147483647, %v3821
      %vm5133 = vcmp.eq.f32.partialorder %v5132, 8.507059e+37
      %v5134 = vand.u32 %v3821, 2147483648
      %v5135 = vor.u32 1.1754944e-38, %v5134
      %v5136 = vsel %vm5133, %v5135, %v5131
      %v5137 = vmul.f32 1.0, %v5136
      %v5138 = vrcp.pop %v3822
      %v5139 = vmul.f32 %v3822, %v5138
      %v5140 = vsub.f32 1.0, %v5139
      %v5141 = vmul.f32 %v5138, %v5140
      %v5142 = vadd.f32 %v5138, %v5141
      %vm5143 = vweird.f32 %v3822
      %vm5144 = vweird.f32 %v5138
      %vm5145 = vmor %vm5143, %vm5144
      %v5146 = vsel %vm5145, %v5138, %v5142
      %v5147 = vand.u32 2147483647, %v3822
      %vm5148 = vcmp.eq.f32.partialorder %v5147, 8.507059e+37
      %v5149 = vand.u32 %v3822, 2147483648
      %v5150 = vor.u32 1.1754944e-38, %v5149
      %v5151 = vsel %vm5148, %v5150, %v5146
      %v5152 = vmul.f32 1.0, %v5151
      %v5153 = vrcp.pop %v3823
      %v5154 = vmul.f32 %v3823, %v5153
      %v5155 = vsub.f32 1.0, %v5154
      %v5156 = vmul.f32 %v5153, %v5155
      %v5157 = vadd.f32 %v5153, %v5156
      %vm5158 = vweird.f32 %v3823
      %vm5159 = vweird.f32 %v5153
      %vm5160 = vmor %vm5158, %vm5159
      %v5161 = vsel %vm5160, %v5153, %v5157
      %v5162 = vand.u32 2147483647, %v3823
      %vm5163 = vcmp.eq.f32.partialorder %v5162, 8.507059e+37
      %v5164 = vand.u32 %v3823, 2147483648
      %v5165 = vor.u32 1.1754944e-38, %v5164
      %v5166 = vsel %vm5163, %v5165, %v5161
      %v5167 = vmul.f32 1.0, %v5166
      %v5168 = vrcp.pop %v3824
      %v5169 = vmul.f32 %v3824, %v5168
      %v5170 = vsub.f32 1.0, %v5169
      %v5171 = vmul.f32 %v5168, %v5170
      %v5172 = vadd.f32 %v5168, %v5171
      %vm5173 = vweird.f32 %v3824
      %vm5174 = vweird.f32 %v5168
      %vm5175 = vmor %vm5173, %vm5174
      %v5176 = vsel %vm5175, %v5168, %v5172
      %v5177 = vand.u32 2147483647, %v3824
      %vm5178 = vcmp.eq.f32.partialorder %v5177, 8.507059e+37
      %v5179 = vand.u32 %v3824, 2147483648
      %v5180 = vor.u32 1.1754944e-38, %v5179
      %v5181 = vsel %vm5178, %v5180, %v5176
      %v5182 = vmul.f32 1.0, %v5181
      %v5183 = vrcp.pop %v3825
      %v5184 = vmul.f32 %v3825, %v5183
      %v5185 = vsub.f32 1.0, %v5184
      %v5186 = vmul.f32 %v5183, %v5185
      %v5187 = vadd.f32 %v5183, %v5186
      %vm5188 = vweird.f32 %v3825
      %vm5189 = vweird.f32 %v5183
      %vm5190 = vmor %vm5188, %vm5189
      %v5191 = vsel %vm5190, %v5183, %v5187
      %v5192 = vand.u32 2147483647, %v3825
      %vm5193 = vcmp.eq.f32.partialorder %v5192, 8.507059e+37
      %v5194 = vand.u32 %v3825, 2147483648
      %v5195 = vor.u32 1.1754944e-38, %v5194
      %v5196 = vsel %vm5193, %v5195, %v5191
      %v5197 = vmul.f32 1.0, %v5196
      %v5198 = vrcp.pop %v3826
      %v5199 = vmul.f32 %v3826, %v5198
      %v5200 = vsub.f32 1.0, %v5199
      %v5201 = vmul.f32 %v5198, %v5200
      %v5202 = vadd.f32 %v5198, %v5201
      %vm5203 = vweird.f32 %v3826
      %vm5204 = vweird.f32 %v5198
      %vm5205 = vmor %vm5203, %vm5204
      %v5206 = vsel %vm5205, %v5198, %v5202
      %v5207 = vand.u32 2147483647, %v3826
      %vm5208 = vcmp.eq.f32.partialorder %v5207, 8.507059e+37
      %v5209 = vand.u32 %v3826, 2147483648
      %v5210 = vor.u32 1.1754944e-38, %v5209
      %v5211 = vsel %vm5208, %v5210, %v5206
      %v5212 = vmul.f32 1.0, %v5211
      %v5213 = vrcp.pop %v3827
      %v5214 = vmul.f32 %v3827, %v5213
      %v5215 = vsub.f32 1.0, %v5214
      %v5216 = vmul.f32 %v5213, %v5215
      %v5217 = vadd.f32 %v5213, %v5216
      %vm5218 = vweird.f32 %v3827
      %vm5219 = vweird.f32 %v5213
      %vm5220 = vmor %vm5218, %vm5219
      %v5221 = vsel %vm5220, %v5213, %v5217
      %v5222 = vand.u32 2147483647, %v3827
      %vm5223 = vcmp.eq.f32.partialorder %v5222, 8.507059e+37
      %v5224 = vand.u32 %v3827, 2147483648
      %v5225 = vor.u32 1.1754944e-38, %v5224
      %v5226 = vsel %vm5223, %v5225, %v5221
      %v5227 = vmul.f32 1.0, %v5226
      %v5228 = vrcp.pop %v3828
      %v5229 = vmul.f32 %v3828, %v5228
      %v5230 = vsub.f32 1.0, %v5229
      %v5231 = vmul.f32 %v5228, %v5230
      %v5232 = vadd.f32 %v5228, %v5231
      %vm5233 = vweird.f32 %v3828
      %vm5234 = vweird.f32 %v5228
      %vm5235 = vmor %vm5233, %vm5234
      %v5236 = vsel %vm5235, %v5228, %v5232
      %v5237 = vand.u32 2147483647, %v3828
      %vm5238 = vcmp.eq.f32.partialorder %v5237, 8.507059e+37
      %v5239 = vand.u32 %v3828, 2147483648
      %v5240 = vor.u32 1.1754944e-38, %v5239
      %v5241 = vsel %vm5238, %v5240, %v5236
      %v5242 = vmul.f32 1.0, %v5241
      %v5243 = vrcp.pop %v3829
      %v5244 = vmul.f32 %v3829, %v5243
      %v5245 = vsub.f32 1.0, %v5244
      %v5246 = vmul.f32 %v5243, %v5245
      %v5247 = vadd.f32 %v5243, %v5246
      %vm5248 = vweird.f32 %v3829
      %vm5249 = vweird.f32 %v5243
      %vm5250 = vmor %vm5248, %vm5249
      %v5251 = vsel %vm5250, %v5243, %v5247
      %v5252 = vand.u32 2147483647, %v3829
      %vm5253 = vcmp.eq.f32.partialorder %v5252, 8.507059e+37
      %v5254 = vand.u32 %v3829, 2147483648
      %v5255 = vor.u32 1.1754944e-38, %v5254
      %v5256 = vsel %vm5253, %v5255, %v5251
      %v5257 = vmul.f32 1.0, %v5256
      %v5258 = vrcp.pop %v3830
      %v5259 = vmul.f32 %v3830, %v5258
      %v5260 = vsub.f32 1.0, %v5259
      %v5261 = vmul.f32 %v5258, %v5260
      %v5262 = vadd.f32 %v5258, %v5261
      %vm5263 = vweird.f32 %v3830
      %vm5264 = vweird.f32 %v5258
      %vm5265 = vmor %vm5263, %vm5264
      %v5266 = vsel %vm5265, %v5258, %v5262
      %v5267 = vand.u32 2147483647, %v3830
      %vm5268 = vcmp.eq.f32.partialorder %v5267, 8.507059e+37
      %v5269 = vand.u32 %v3830, 2147483648
      %v5270 = vor.u32 1.1754944e-38, %v5269
      %v5271 = vsel %vm5268, %v5270, %v5266
      %v5272 = vmul.f32 1.0, %v5271
      %v5273 = vrcp.pop %v3831
      %v5274 = vmul.f32 %v3831, %v5273
      %v5275 = vsub.f32 1.0, %v5274
      %v5276 = vmul.f32 %v5273, %v5275
      %v5277 = vadd.f32 %v5273, %v5276
      %vm5278 = vweird.f32 %v3831
      %vm5279 = vweird.f32 %v5273
      %vm5280 = vmor %vm5278, %vm5279
      %v5281 = vsel %vm5280, %v5273, %v5277
      %v5282 = vand.u32 2147483647, %v3831
      %vm5283 = vcmp.eq.f32.partialorder %v5282, 8.507059e+37
      %v5284 = vand.u32 %v3831, 2147483648
      %v5285 = vor.u32 1.1754944e-38, %v5284
      %v5286 = vsel %vm5283, %v5285, %v5281
      %v5287 = vmul.f32 1.0, %v5286
      %v5288 = vrcp.pop %v3832
      %v5289 = vmul.f32 %v3832, %v5288
      %v5290 = vsub.f32 1.0, %v5289
      %v5291 = vmul.f32 %v5288, %v5290
      %v5292 = vadd.f32 %v5288, %v5291
      %vm5293 = vweird.f32 %v3832
      %vm5294 = vweird.f32 %v5288
      %vm5295 = vmor %vm5293, %vm5294
      %v5296 = vsel %vm5295, %v5288, %v5292
      %v5297 = vand.u32 2147483647, %v3832
      %vm5298 = vcmp.eq.f32.partialorder %v5297, 8.507059e+37
      %v5299 = vand.u32 %v3832, 2147483648
      %v5300 = vor.u32 1.1754944e-38, %v5299
      %v5301 = vsel %vm5298, %v5300, %v5296
      %v5302 = vmul.f32 1.0, %v5301
      %v5303 = vrcp.pop %v3833
      %v5304 = vmul.f32 %v3833, %v5303
      %v5305 = vsub.f32 1.0, %v5304
      %v5306 = vmul.f32 %v5303, %v5305
      %v5307 = vadd.f32 %v5303, %v5306
      %vm5308 = vweird.f32 %v3833
      %vm5309 = vweird.f32 %v5303
      %vm5310 = vmor %vm5308, %vm5309
      %v5311 = vsel %vm5310, %v5303, %v5307
      %v5312 = vand.u32 2147483647, %v3833
      %vm5313 = vcmp.eq.f32.partialorder %v5312, 8.507059e+37
      %v5314 = vand.u32 %v3833, 2147483648
      %v5315 = vor.u32 1.1754944e-38, %v5314
      %v5316 = vsel %vm5313, %v5315, %v5311
      %v5317 = vmul.f32 1.0, %v5316
      %v5318 = vrcp.pop %v3834
      %v5319 = vmul.f32 %v3834, %v5318
      %v5320 = vsub.f32 1.0, %v5319
      %v5321 = vmul.f32 %v5318, %v5320
      %v5322 = vadd.f32 %v5318, %v5321
      %vm5323 = vweird.f32 %v3834
      %vm5324 = vweird.f32 %v5318
      %vm5325 = vmor %vm5323, %vm5324
      %v5326 = vsel %vm5325, %v5318, %v5322
      %v5327 = vand.u32 2147483647, %v3834
      %vm5328 = vcmp.eq.f32.partialorder %v5327, 8.507059e+37
      %v5329 = vand.u32 %v3834, 2147483648
      %v5330 = vor.u32 1.1754944e-38, %v5329
      %v5331 = vsel %vm5328, %v5330, %v5326
      %v5332 = vmul.f32 1.0, %v5331
      %v5333 = vrcp.pop %v3835
      %v5334 = vmul.f32 %v3835, %v5333
      %v5335 = vsub.f32 1.0, %v5334
      %v5336 = vmul.f32 %v5333, %v5335
      %v5337 = vadd.f32 %v5333, %v5336
      %vm5338 = vweird.f32 %v3835
      %vm5339 = vweird.f32 %v5333
      %vm5340 = vmor %vm5338, %vm5339
      %v5341 = vsel %vm5340, %v5333, %v5337
      %v5342 = vand.u32 2147483647, %v3835
      %vm5343 = vcmp.eq.f32.partialorder %v5342, 8.507059e+37
      %v5344 = vand.u32 %v3835, 2147483648
      %v5345 = vor.u32 1.1754944e-38, %v5344
      %v5346 = vsel %vm5343, %v5345, %v5341
      %v5347 = vmul.f32 1.0, %v5346
      %v5348 = vrcp.pop %v3836
      %v5349 = vmul.f32 %v3836, %v5348
      %v5350 = vsub.f32 1.0, %v5349
      %v5351 = vmul.f32 %v5348, %v5350
      %v5352 = vadd.f32 %v5348, %v5351
      %vm5353 = vweird.f32 %v3836
      %vm5354 = vweird.f32 %v5348
      %vm5355 = vmor %vm5353, %vm5354
      %v5356 = vsel %vm5355, %v5348, %v5352
      %v5357 = vand.u32 2147483647, %v3836
      %vm5358 = vcmp.eq.f32.partialorder %v5357, 8.507059e+37
      %v5359 = vand.u32 %v3836, 2147483648
      %v5360 = vor.u32 1.1754944e-38, %v5359
      %v5361 = vsel %vm5358, %v5360, %v5356
      %v5362 = vmul.f32 1.0, %v5361
      %v5363 = vrcp.pop %v3837
      %v5364 = vmul.f32 %v3837, %v5363
      %v5365 = vsub.f32 1.0, %v5364
      %v5366 = vmul.f32 %v5363, %v5365
      %v5367 = vadd.f32 %v5363, %v5366
      %vm5368 = vweird.f32 %v3837
      %vm5369 = vweird.f32 %v5363
      %vm5370 = vmor %vm5368, %vm5369
      %v5371 = vsel %vm5370, %v5363, %v5367
      %v5372 = vand.u32 2147483647, %v3837
      %vm5373 = vcmp.eq.f32.partialorder %v5372, 8.507059e+37
      %v5374 = vand.u32 %v3837, 2147483648
      %v5375 = vor.u32 1.1754944e-38, %v5374
      %v5376 = vsel %vm5373, %v5375, %v5371
      %v5377 = vmul.f32 1.0, %v5376
      %v5378 = vrcp.pop %v3838
      %v5379 = vmul.f32 %v3838, %v5378
      %v5380 = vsub.f32 1.0, %v5379
      %v5381 = vmul.f32 %v5378, %v5380
      %v5382 = vadd.f32 %v5378, %v5381
      %vm5383 = vweird.f32 %v3838
      %vm5384 = vweird.f32 %v5378
      %vm5385 = vmor %vm5383, %vm5384
      %v5386 = vsel %vm5385, %v5378, %v5382
      %v5387 = vand.u32 2147483647, %v3838
      %vm5388 = vcmp.eq.f32.partialorder %v5387, 8.507059e+37
      %v5389 = vand.u32 %v3838, 2147483648
      %v5390 = vor.u32 1.1754944e-38, %v5389
      %v5391 = vsel %vm5388, %v5390, %v5386
      %v5392 = vmul.f32 1.0, %v5391
      %v5393 = vrcp.pop %v3839
      %v5394 = vmul.f32 %v3839, %v5393
      %v5395 = vsub.f32 1.0, %v5394
      %v5396 = vmul.f32 %v5393, %v5395
      %v5397 = vadd.f32 %v5393, %v5396
      %vm5398 = vweird.f32 %v3839
      %vm5399 = vweird.f32 %v5393
      %vm5400 = vmor %vm5398, %vm5399
      %v5401 = vsel %vm5400, %v5393, %v5397
      %v5402 = vand.u32 2147483647, %v3839
      %vm5403 = vcmp.eq.f32.partialorder %v5402, 8.507059e+37
      %v5404 = vand.u32 %v3839, 2147483648
      %v5405 = vor.u32 1.1754944e-38, %v5404
      %v5406 = vsel %vm5403, %v5405, %v5401
      %v5407 = vmul.f32 1.0, %v5406
      %v5408 = vrcp.pop %v3840
      %v5409 = vmul.f32 %v3840, %v5408
      %v5410 = vsub.f32 1.0, %v5409
      %v5411 = vmul.f32 %v5408, %v5410
      %v5412 = vadd.f32 %v5408, %v5411
      %vm5413 = vweird.f32 %v3840
      %vm5414 = vweird.f32 %v5408
      %vm5415 = vmor %vm5413, %vm5414
      %v5416 = vsel %vm5415, %v5408, %v5412
      %v5417 = vand.u32 2147483647, %v3840
      %vm5418 = vcmp.eq.f32.partialorder %v5417, 8.507059e+37
      %v5419 = vand.u32 %v3840, 2147483648
      %v5420 = vor.u32 1.1754944e-38, %v5419
      %v5421 = vsel %vm5418, %v5420, %v5416
      %v5422 = vmul.f32 1.0, %v5421
      %v5423 = vrcp.pop %v3841
      %v5424 = vmul.f32 %v3841, %v5423
      %v5425 = vsub.f32 1.0, %v5424
      %v5426 = vmul.f32 %v5423, %v5425
      %v5427 = vadd.f32 %v5423, %v5426
      %vm5428 = vweird.f32 %v3841
      %vm5429 = vweird.f32 %v5423
      %vm5430 = vmor %vm5428, %vm5429
      %v5431 = vsel %vm5430, %v5423, %v5427
      %v5432 = vand.u32 2147483647, %v3841
      %vm5433 = vcmp.eq.f32.partialorder %v5432, 8.507059e+37
      %v5434 = vand.u32 %v3841, 2147483648
      %v5435 = vor.u32 1.1754944e-38, %v5434
      %v5436 = vsel %vm5433, %v5435, %v5431
      %v5437 = vmul.f32 1.0, %v5436
      %v5438 = vrcp.pop %v3842
      %v5439 = vmul.f32 %v3842, %v5438
      %v5440 = vsub.f32 1.0, %v5439
      %v5441 = vmul.f32 %v5438, %v5440
      %v5442 = vadd.f32 %v5438, %v5441
      %vm5443 = vweird.f32 %v3842
      %vm5444 = vweird.f32 %v5438
      %vm5445 = vmor %vm5443, %vm5444
      %v5446 = vsel %vm5445, %v5438, %v5442
      %v5447 = vand.u32 2147483647, %v3842
      %vm5448 = vcmp.eq.f32.partialorder %v5447, 8.507059e+37
      %v5449 = vand.u32 %v3842, 2147483648
      %v5450 = vor.u32 1.1754944e-38, %v5449
      %v5451 = vsel %vm5448, %v5450, %v5446
      %v5452 = vmul.f32 1.0, %v5451
      %v5453 = vrcp.pop %v3843
      %v5454 = vmul.f32 %v3843, %v5453
      %v5455 = vsub.f32 1.0, %v5454
      %v5456 = vmul.f32 %v5453, %v5455
      %v5457 = vadd.f32 %v5453, %v5456
      %vm5458 = vweird.f32 %v3843
      %vm5459 = vweird.f32 %v5453
      %vm5460 = vmor %vm5458, %vm5459
      %v5461 = vsel %vm5460, %v5453, %v5457
      %v5462 = vand.u32 2147483647, %v3843
      %vm5463 = vcmp.eq.f32.partialorder %v5462, 8.507059e+37
      %v5464 = vand.u32 %v3843, 2147483648
      %v5465 = vor.u32 1.1754944e-38, %v5464
      %v5466 = vsel %vm5463, %v5465, %v5461
      %v5467 = vmul.f32 1.0, %v5466
      %v5468 = vrcp.pop %v3844
      %v5469 = vmul.f32 %v3844, %v5468
      %v5470 = vsub.f32 1.0, %v5469
      %v5471 = vmul.f32 %v5468, %v5470
      %v5472 = vadd.f32 %v5468, %v5471
      %vm5473 = vweird.f32 %v3844
      %vm5474 = vweird.f32 %v5468
      %vm5475 = vmor %vm5473, %vm5474
      %v5476 = vsel %vm5475, %v5468, %v5472
      %v5477 = vand.u32 2147483647, %v3844
      %vm5478 = vcmp.eq.f32.partialorder %v5477, 8.507059e+37
      %v5479 = vand.u32 %v3844, 2147483648
      %v5480 = vor.u32 1.1754944e-38, %v5479
      %v5481 = vsel %vm5478, %v5480, %v5476
      %v5482 = vmul.f32 1.0, %v5481
      %v5483 = vrcp.pop %v3845
      %v5484 = vmul.f32 %v3845, %v5483
      %v5485 = vsub.f32 1.0, %v5484
      %v5486 = vmul.f32 %v5483, %v5485
      %v5487 = vadd.f32 %v5483, %v5486
      %vm5488 = vweird.f32 %v3845
      %vm5489 = vweird.f32 %v5483
      %vm5490 = vmor %vm5488, %vm5489
      %v5491 = vsel %vm5490, %v5483, %v5487
      %v5492 = vand.u32 2147483647, %v3845
      %vm5493 = vcmp.eq.f32.partialorder %v5492, 8.507059e+37
      %v5494 = vand.u32 %v3845, 2147483648
      %v5495 = vor.u32 1.1754944e-38, %v5494
      %v5496 = vsel %vm5493, %v5495, %v5491
      %v5497 = vmul.f32 1.0, %v5496
      %v5498 = vrcp.pop %v3846
      %v5499 = vmul.f32 %v3846, %v5498
      %v5500 = vsub.f32 1.0, %v5499
      %v5501 = vmul.f32 %v5498, %v5500
      %v5502 = vadd.f32 %v5498, %v5501
      %vm5503 = vweird.f32 %v3846
      %vm5504 = vweird.f32 %v5498
      %vm5505 = vmor %vm5503, %vm5504
      %v5506 = vsel %vm5505, %v5498, %v5502
      %v5507 = vand.u32 2147483647, %v3846
      %vm5508 = vcmp.eq.f32.partialorder %v5507, 8.507059e+37
      %v5509 = vand.u32 %v3846, 2147483648
      %v5510 = vor.u32 1.1754944e-38, %v5509
      %v5511 = vsel %vm5508, %v5510, %v5506
      %v5512 = vmul.f32 1.0, %v5511
      %v5513 = vrcp.pop %v3847
      %v5514 = vmul.f32 %v3847, %v5513
      %v5515 = vsub.f32 1.0, %v5514
      %v5516 = vmul.f32 %v5513, %v5515
      %v5517 = vadd.f32 %v5513, %v5516
      %vm5518 = vweird.f32 %v3847
      %vm5519 = vweird.f32 %v5513
      %vm5520 = vmor %vm5518, %vm5519
      %v5521 = vsel %vm5520, %v5513, %v5517
      %v5522 = vand.u32 2147483647, %v3847
      %vm5523 = vcmp.eq.f32.partialorder %v5522, 8.507059e+37
      %v5524 = vand.u32 %v3847, 2147483648
      %v5525 = vor.u32 1.1754944e-38, %v5524
      %v5526 = vsel %vm5523, %v5525, %v5521
      %v5527 = vmul.f32 1.0, %v5526
      %5528 = vst [vmem:[%s596] sm:$0xff] %v3862
      %5529 = vst [vmem:[%s596 + $0x8] sm:$0xff] %v3877
      %5530 = vst [vmem:[%s596 + $0x10] sm:$0xff] %v3892
      %5531 = vst [vmem:[%s596 + $0x18] sm:$0xff] %v3907
      %5532 = vst [vmem:[%s596 + $0x20] sm:$0xff] %v3922
      %5533 = vst [vmem:[%s596 + $0x28] sm:$0xff] %v3937
      %5534 = vst.msk [vmem:[%s596 + $0x30] sm:$0xff] %vm1339, %v3952
      %5535 = vst [vmem:[%s596 + $0x38] sm:$0xff] %v3967
      %5536 = vst [vmem:[%s596 + $0x40] sm:$0xff] %v3982
      %5537 = vst [vmem:[%s596 + $0x48] sm:$0xff] %v3997
      %5538 = vst [vmem:[%s596 + $0x50] sm:$0xff] %v4012
      %5539 = vst [vmem:[%s596 + $0x58] sm:$0xff] %v4027
      %5540 = vst [vmem:[%s596 + $0x60] sm:$0xff] %v4042
      %5541 = vst.msk [vmem:[%s596 + $0x68] sm:$0xff] %vm1339, %v4057
      %5542 = vst [vmem:[%s596 + $0x70] sm:$0xff] %v4072
      %5543 = vst [vmem:[%s596 + $0x78] sm:$0xff] %v4087
      %5544 = vst [vmem:[%s596 + $0x80] sm:$0xff] %v4102
      %5545 = vst [vmem:[%s596 + $0x88] sm:$0xff] %v4117
      %5546 = vst [vmem:[%s596 + $0x90] sm:$0xff] %v4132
      %5547 = vst [vmem:[%s596 + $0x98] sm:$0xff] %v4147
      %5548 = vst.msk [vmem:[%s596 + $0xa0] sm:$0xff] %vm1339, %v4162
      %5549 = vst [vmem:[%s596 + $0xa8] sm:$0xff] %v4177
      %5550 = vst [vmem:[%s596 + $0xb0] sm:$0xff] %v4192
      %5551 = vst [vmem:[%s596 + $0xb8] sm:$0xff] %v4207
      %5552 = vst [vmem:[%s596 + $0xc0] sm:$0xff] %v4222
      %5553 = vst [vmem:[%s596 + $0xc8] sm:$0xff] %v4237
      %5554 = vst [vmem:[%s596 + $0xd0] sm:$0xff] %v4252
      %5555 = vst.msk [vmem:[%s596 + $0xd8] sm:$0xff] %vm1339, %v4267
      %5556 = vst [vmem:[%s596 + $0xe0] sm:$0xff] %v4282
      %5557 = vst [vmem:[%s596 + $0xe8] sm:$0xff] %v4297
      %5558 = vst [vmem:[%s596 + $0xf0] sm:$0xff] %v4312
      %5559 = vst [vmem:[%s596 + $0xf8] sm:$0xff] %v4327
      %5560 = vst [vmem:[%s596 + $0x100] sm:$0xff] %v4342
      %5561 = vst [vmem:[%s596 + $0x108] sm:$0xff] %v4357
      %5562 = vst.msk [vmem:[%s596 + $0x110] sm:$0xff] %vm1339, %v4372
      %5563 = vst [vmem:[%s596 + $0x118] sm:$0xff] %v4387
      %5564 = vst [vmem:[%s596 + $0x120] sm:$0xff] %v4402
      %5565 = vst [vmem:[%s596 + $0x128] sm:$0xff] %v4417
      %5566 = vst [vmem:[%s596 + $0x130] sm:$0xff] %v4432
      %5567 = vst [vmem:[%s596 + $0x138] sm:$0xff] %v4447
      %5568 = vst [vmem:[%s596 + $0x140] sm:$0xff] %v4462
      %5569 = vst.msk [vmem:[%s596 + $0x148] sm:$0xff] %vm1339, %v4477
      %5570 = vst [vmem:[%s596 + $0x150] sm:$0xff] %v4492
      %5571 = vst [vmem:[%s596 + $0x158] sm:$0xff] %v4507
      %5572 = vst [vmem:[%s596 + $0x160] sm:$0xff] %v4522
      %5573 = vst [vmem:[%s596 + $0x168] sm:$0xff] %v4537
      %5574 = vst [vmem:[%s596 + $0x170] sm:$0xff] %v4552
      %5575 = vst [vmem:[%s596 + $0x178] sm:$0xff] %v4567
      %5576 = vst.msk [vmem:[%s596 + $0x180] sm:$0xff] %vm1339, %v4582
      %5577 = vst [vmem:[%s596 + $0x188] sm:$0xff] %v4597
      %5578 = vst [vmem:[%s596 + $0x190] sm:$0xff] %v4612
      %5579 = vst [vmem:[%s596 + $0x198] sm:$0xff] %v4627
      %5580 = vst [vmem:[%s596 + $0x1a0] sm:$0xff] %v4642
      %5581 = vst [vmem:[%s596 + $0x1a8] sm:$0xff] %v4657
      %5582 = vst [vmem:[%s596 + $0x1b0] sm:$0xff] %v4672
      %5583 = vst.msk [vmem:[%s596 + $0x1b8] sm:$0xff] %vm1339, %v4687
      %5584 = vst [vmem:[%s596 + $0x1c0] sm:$0xff] %v4702
      %5585 = vst [vmem:[%s596 + $0x1c8] sm:$0xff] %v4717
      %5586 = vst [vmem:[%s596 + $0x1d0] sm:$0xff] %v4732
      %5587 = vst [vmem:[%s596 + $0x1d8] sm:$0xff] %v4747
      %5588 = vst [vmem:[%s596 + $0x1e0] sm:$0xff] %v4762
      %5589 = vst [vmem:[%s596 + $0x1e8] sm:$0xff] %v4777
      %5590 = vst.msk [vmem:[%s596 + $0x1f0] sm:$0xff] %vm1339, %v4792
      %5591 = vst [vmem:[%s596 + $0x1f8] sm:$0xff] %v4807
      %5592 = vst [vmem:[%s596 + $0x200] sm:$0xff] %v4822
      %5593 = vst [vmem:[%s596 + $0x208] sm:$0xff] %v4837
      %5594 = vst [vmem:[%s596 + $0x210] sm:$0xff] %v4852
      %5595 = vst [vmem:[%s596 + $0x218] sm:$0xff] %v4867
      %5596 = vst [vmem:[%s596 + $0x220] sm:$0xff] %v4882
      %5597 = vst.msk [vmem:[%s596 + $0x228] sm:$0xff] %vm1339, %v4897
      %5598 = vst [vmem:[%s596 + $0x230] sm:$0xff] %v4912
      %5599 = vst [vmem:[%s596 + $0x238] sm:$0xff] %v4927
      %5600 = vst [vmem:[%s596 + $0x240] sm:$0xff] %v4942
      %5601 = vst [vmem:[%s596 + $0x248] sm:$0xff] %v4957
      %5602 = vst [vmem:[%s596 + $0x250] sm:$0xff] %v4972
      %5603 = vst [vmem:[%s596 + $0x258] sm:$0xff] %v4987
      %5604 = vst.msk [vmem:[%s596 + $0x260] sm:$0xff] %vm1339, %v5002
      %5605 = vst [vmem:[%s596 + $0x268] sm:$0xff] %v5017
      %5606 = vst [vmem:[%s596 + $0x270] sm:$0xff] %v5032
      %5607 = vst [vmem:[%s596 + $0x278] sm:$0xff] %v5047
      %5608 = vst [vmem:[%s596 + $0x280] sm:$0xff] %v5062
      %5609 = vst [vmem:[%s596 + $0x288] sm:$0xff] %v5077
      %5610 = vst [vmem:[%s596 + $0x290] sm:$0xff] %v5092
      %5611 = vst.msk [vmem:[%s596 + $0x298] sm:$0xff] %vm1339, %v5107
      %5612 = vst [vmem:[%s596 + $0x2a0] sm:$0xff] %v5122
      %5613 = vst [vmem:[%s596 + $0x2a8] sm:$0xff] %v5137
      %5614 = vst [vmem:[%s596 + $0x2b0] sm:$0xff] %v5152
      %5615 = vst [vmem:[%s596 + $0x2b8] sm:$0xff] %v5167
      %5616 = vst [vmem:[%s596 + $0x2c0] sm:$0xff] %v5182
      %5617 = vst [vmem:[%s596 + $0x2c8] sm:$0xff] %v5197
      %5618 = vst.msk [vmem:[%s596 + $0x2d0] sm:$0xff] %vm1339, %v5212
      %5619 = vst [vmem:[%s596 + $0x2d8] sm:$0xff] %v5227
      %5620 = vst [vmem:[%s596 + $0x2e0] sm:$0xff] %v5242
      %5621 = vst [vmem:[%s596 + $0x2e8] sm:$0xff] %v5257
      %5622 = vst [vmem:[%s596 + $0x2f0] sm:$0xff] %v5272
      %5623 = vst [vmem:[%s596 + $0x2f8] sm:$0xff] %v5287
      %5624 = vst [vmem:[%s596 + $0x300] sm:$0xff] %v5302
      %5625 = vst.msk [vmem:[%s596 + $0x308] sm:$0xff] %vm1339, %v5317
      %5626 = vst [vmem:[%s596 + $0x310] sm:$0xff] %v5332
      %5627 = vst [vmem:[%s596 + $0x318] sm:$0xff] %v5347
      %5628 = vst [vmem:[%s596 + $0x320] sm:$0xff] %v5362
      %5629 = vst [vmem:[%s596 + $0x328] sm:$0xff] %v5377
      %5630 = vst [vmem:[%s596 + $0x330] sm:$0xff] %v5392
      %5631 = vst [vmem:[%s596 + $0x338] sm:$0xff] %v5407
      %5632 = vst.msk [vmem:[%s596 + $0x340] sm:$0xff] %vm1339, %v5422
      %5633 = vst [vmem:[%s596 + $0x348] sm:$0xff] %v5437
      %5634 = vst [vmem:[%s596 + $0x350] sm:$0xff] %v5452
      %5635 = vst [vmem:[%s596 + $0x358] sm:$0xff] %v5467
      %5636 = vst [vmem:[%s596 + $0x360] sm:$0xff] %v5482
      %5637 = vst [vmem:[%s596 + $0x368] sm:$0xff] %v5497
      %5638 = vst [vmem:[%s596 + $0x370] sm:$0xff] %v5512
      %5639 = vst.msk [vmem:[%s596 + $0x378] sm:$0xff] %vm1339, %v5527
      %s5640 = smul.u32 16, %s30
      %p5641 = scmp.lt.s32.totalorder %s5640, 63
      %s5642 = scalar_select %p5641, %s5640, 63
      %s5643 = smul.addr %s5642, 8
      %s5644 = scalar_lea.vmem %s17, %s5643
      %s5645 = smul.u32 16, %s30
      %p5646 = scmp.lt.s32.totalorder %s5645, 63
      %s5647 = scalar_select %p5646, %s5645, 63
      %s5648 = smul.addr %s5647, 7
      %s5649 = smul.addr %s5648, 8
      %s5650 = scalar_lea.vmem %s18, %s5649
      // Predicated region
      $region89: #{autoencoder_forward.1} parent=87 // pred_check
        %p5651 = pneg %p410
      $region90: #{autoencoder_forward.1} parent=87 // pred_check_branch
        %5653 = sbr.rel (%p5651) target = $region92
      $region91: #{autoencoder_forward.1} parent=87 // pred_region
        %s5654 = smul.u32 16, %s30
      $region92: #{autoencoder_forward.1} parent=87 // pred_fallthru
        _
      // Predicated region
      $region93: #{autoencoder_forward.1} parent=87 // pred_check
        %p5655 = pneg %p436
      $region94: #{autoencoder_forward.1} parent=87 // pred_check_branch
        %5657 = sbr.rel (%p5655) target = $region96
      $region95: #{autoencoder_forward.1} parent=87 // pred_region
        %s5658 = smul.u32 16, %s30
      $region96: #{autoencoder_forward.1} parent=87 // pred_fallthru
        _
    $region88: #{autoencoder_forward.1} parent=5 // pred_fallthru
      _
    %p5659 = scmp.le.s32.totalorder 2, %s25
    // Predicated region
    $region97: #{autoencoder_forward.1} parent=5 // pred_check
      %p5660 = pneg %p5659
    $region98: #{autoencoder_forward.1} parent=5 // pred_check_branch
      %5662 = sbr.rel (%p5660) target = $region100
    $region99: #{autoencoder_forward.1} parent=5 // pred_region
      %s5663 = ssub.s32 %s25, 2
      // Predicated region
      $region101: #{autoencoder_forward.1} parent=99 // pred_check
        %p5664 = pneg %p416
      $region102: #{autoencoder_forward.1} parent=99 // pred_check_branch
        %5666 = sbr.rel (%p5664) target = $region104
      $region103: #{autoencoder_forward.1} parent=99 // pred_region
        %s5667 = smul.u32 16, %s31
        %p5668 = scmp.lt.s32.totalorder %s5667, 63
        %s5669 = scalar_select %p5668, %s5667, 63
        %s5670 = smul.addr %s5669, 8
        %s5671 = scalar_lea.vmem %s17, %s5670
      $region104: #{autoencoder_forward.1} parent=99 // pred_fallthru
        _
      // Predicated region
      $region105: #{autoencoder_forward.1} parent=99 // pred_check
        %p5672 = pneg %p442
      $region106: #{autoencoder_forward.1} parent=99 // pred_check_branch
        %5674 = sbr.rel (%p5672) target = $region108
      $region107: #{autoencoder_forward.1} parent=99 // pred_region
        %s5675 = smul.u32 16, %s31
        %p5676 = scmp.lt.s32.totalorder %s5675, 63
        %s5677 = scalar_select %p5676, %s5675, 63
        %s5678 = smul.addr %s5677, 7
        %s5679 = smul.addr %s5678, 8
        %s5680 = scalar_lea.vmem %s18, %s5679
      $region108: #{autoencoder_forward.1} parent=99 // pred_fallthru
        _
    $region100: #{autoencoder_forward.1} parent=5 // pred_fallthru
      _
  $region6: #{autoencoder_forward.1} parent=0 // loop_footer
    %s29 = sadd.s32 1, %s25
  $region7: #{autoencoder_forward.1} parent=0 // loop_footer_branch
    %24 = sbr.rel target = $region3
  $region8: #{autoencoder_forward.1} parent=0 // loop_exit
    _

</llo_original>
